<compile_context>
chip_gen: v7x
topology: tpu7x:2x2x1
jax: 0.10.0
libtpu: 0.0.40
codegen_flags: <defaults>
</compile_context>

<pallas_src>
import functools

import jax
import jax.numpy as jnp
from jax.experimental import pallas as pl
from jax.experimental.pallas import tpu as pltpu


def _layernorm(x, gamma, beta, eps=1e-5):
    mu = jnp.mean(x, axis=-1, keepdims=True)
    var = jnp.mean((x - mu) ** 2, axis=-1, keepdims=True)
    return (x - mu) * jax.lax.rsqrt(var + eps) * gamma + beta


def _drqn_kernel(T, B, N, H, A,
                 obs_ref, h0_ref, c0_ref,
                 w0_ref, b0_ref, w1_ref, b1_ref, w2_ref, b2_ref,
                 wx_ref, wh_ref, bl_ref, gxg_ref, gxb_ref, ghg_ref, ghb_ref,
                 wh1_ref, bh1_ref, wh2_ref, bh2_ref,
                 q_ref, hid_ref, hout_ref, cout_ref,
                 gx_sc):
    f32 = jnp.float32

    # ---- FCEncoder: Linear->ReLU x3 over ALL T*B rows at once (hoisted out
    # of the recurrence; parallel_wrapper semantics). ----
    x = obs_ref[...]                                                    # (T*B, N)
    x = jnp.maximum(jnp.dot(x, w0_ref[...], preferred_element_type=f32)
                    + b0_ref[...], 0.0)
    x = jnp.maximum(jnp.dot(x, w1_ref[...], preferred_element_type=f32)
                    + b1_ref[...], 0.0)
    x = jnp.maximum(jnp.dot(x, w2_ref[...], preferred_element_type=f32)
                    + b2_ref[...], 0.0)                                 # (T*B, H)

    # ---- Hoisted input projection: gx = LayerNorm(x @ Wx) + lstm_bias for all
    # timesteps in one batched matmul; stash in VMEM scratch for the loop. ----
    gx_sc[...] = (_layernorm(jnp.dot(x, wx_ref[...], preferred_element_type=f32),
                             gxg_ref[...], gxb_ref[...])
                  + bl_ref[...])                                        # (T*B, 4H)

    # ---- Serial LSTM recurrence: only h @ Wh + LN + gates + state update on
    # the critical path.  T is small and static -> fully unrolled. ----
    w_h = wh_ref[...]
    g_h = ghg_ref[...]
    b_h = ghb_ref[...]
    h = h0_ref[...]                                                     # (B, H)
    c = c0_ref[...]                                                     # (B, H)
    for t in range(T):
        gate = gx_sc[t * B:(t + 1) * B, :] + _layernorm(
            jnp.dot(h, w_h, preferred_element_type=f32), g_h, b_h)      # (B, 4H)
        # NOTE: 32-lane gate slices are cross-lane extracts (XLU); kept simple
        # because XLU/VPU have ample slack at these shapes.
        i_g = jax.nn.sigmoid(gate[:, 0 * H:1 * H])
        f_g = jax.nn.sigmoid(gate[:, 1 * H:2 * H])
        o_g = jax.nn.sigmoid(gate[:, 2 * H:3 * H])
        u_g = jnp.tanh(gate[:, 3 * H:4 * H])
        c = f_g * c + i_g * u_g
        h = o_g * jnp.tanh(c)
        hid_ref[t * B:(t + 1) * B, :] = h   # VMEM store; written back to HBM once

    # ---- next_state written exactly once (final timestep only). ----
    hout_ref[...] = h
    cout_ref[...] = c

    # ---- DuelingHead out of the loop, batched over T*B, fused weights:
    # y = relu(hid @ [wa1 || wv1]); av = y @ blockdiag(wa2, wv2);
    # q = a - mean(a) + v. ----
    hid = hid_ref[...]                                                  # (T*B, H)
    y = jnp.maximum(jnp.dot(hid, wh1_ref[...], preferred_element_type=f32)
                    + bh1_ref[...], 0.0)                                # (T*B, 2H)
    av = jnp.dot(y, wh2_ref[...], preferred_element_type=f32) + bh2_ref[...]  # (T*B, A+1)
    a = av[:, :A]
    v = av[:, A:A + 1]
    q_ref[...] = a - jnp.mean(a, axis=-1, keepdims=True) + v            # (T*B, A)


_WEIGHT_NAMES = ["w0", "b0", "w1", "b1", "w2", "b2",
                 "wx", "wh", "bl", "gx", "bx", "gh", "bh"]


def drqn_forward(obs, h0, c0, params):
    """obs: (T, B, N) f32; h0/c0: (1, B, H) f32. Returns dict like DRQN.forward."""
    T, B, N = obs.shape
    H = h0.shape[-1]
    A = params["wa2"].shape[-1]

    # Fused dueling-head weights (tiny XLA ops outside the kernel).
    wh1 = jnp.concatenate([params["wa1"], params["wv1"]], axis=1)       # (H, 2H)
    bh1 = jnp.concatenate([params["ba1"], params["bv1"]], axis=1)       # (1, 2H)
    wh2 = jnp.zeros((2 * H, A + 1), jnp.float32)
    wh2 = wh2.at[:H, :A].set(params["wa2"]).at[H:, A:].set(params["wv2"])  # block-diag
    bh2 = jnp.concatenate([params["ba2"], params["bv2"]], axis=1)       # (1, A+1)

    weights = [params[n] for n in _WEIGHT_NAMES] + [wh1, bh1, wh2, bh2]

    # Flatten time into batch outside the kernel (free reshapes).
    inputs = [obs.reshape(T * B, N), h0.reshape(B, H), c0.reshape(B, H)] + weights

    def spec(shape):
        nd = len(shape)
        return pl.BlockSpec(shape, lambda i, _nd=nd: (0,) * _nd)

    in_specs = [spec(x.shape) for x in inputs]
    out_specs = [spec((T * B, A)), spec((T * B, H)), spec((B, H)), spec((B, H))]
    out_shape = (
        jax.ShapeDtypeStruct((T * B, A), jnp.float32),   # logit (flat)
        jax.ShapeDtypeStruct((T * B, H), jnp.float32),   # hidden_state (flat)
        jax.ShapeDtypeStruct((B, H), jnp.float32),       # next h
        jax.ShapeDtypeStruct((B, H), jnp.float32),       # next c
    )

    kernel = functools.partial(_drqn_kernel, T, B, N, H, A)
    q, hid, h_out, c_out = pl.pallas_call(
        kernel,
        out_shape=out_shape,
        grid_spec=pltpu.PrefetchScalarGridSpec(
            num_scalar_prefetch=0,
            grid=(1,),                        # single invocation; recurrence unrolled inside
            in_specs=in_specs,
            out_specs=out_specs,
            scratch_shapes=[pltpu.VMEM((T * B, 4 * H), jnp.float32)],   # hoisted gx
        ),
        compiler_params=pltpu.CompilerParams(
            dimension_semantics=("arbitrary",)),
    )(*inputs)

    return {
        "logit": q.reshape(T, B, A),
        "next_state": (h_out.reshape(1, B, H), c_out.reshape(1, B, H)),
        "hidden_state": hid.reshape(T, B, H),
    }


def drqn_reference(obs, h0, c0, p):
    """Pure-JAX reference mirroring the PyTorch forward (inference=False)."""
    T, B, N = obs.shape
    H = h0.shape[-1]

    def enc(x):
        x = jax.nn.relu(x @ p["w0"] + p["b0"])
        x = jax.nn.relu(x @ p["w1"] + p["b1"])
        x = jax.nn.relu(x @ p["w2"] + p["b2"])
        return x

    def ln(x, g, b, eps=1e-5):
        mu = x.mean(-1, keepdims=True)
        var = ((x - mu) ** 2).mean(-1, keepdims=True)
        return (x - mu) / jnp.sqrt(var + eps) * g + b

    h, c = h0[0], c0[0]
    qs, hids = [], []
    for t in range(T):
        x = enc(obs[t])
        gate = ln(x @ p["wx"], p["gx"], p["bx"]) + ln(h @ p["wh"], p["gh"], p["bh"]) + p["bl"]
        i_g = jax.nn.sigmoid(gate[:, 0 * H:1 * H])
        f_g = jax.nn.sigmoid(gate[:, 1 * H:2 * H])
        o_g = jax.nn.sigmoid(gate[:, 2 * H:3 * H])
        u_g = jnp.tanh(gate[:, 3 * H:4 * H])
        c = f_g * c + i_g * u_g
        h = o_g * jnp.tanh(c)
        a = jax.nn.relu(h @ p["wa1"] + p["ba1"]) @ p["wa2"] + p["ba2"]
        v = jax.nn.relu(h @ p["wv1"] + p["bv1"]) @ p["wv2"] + p["bv2"]
        qs.append(a - a.mean(-1, keepdims=True) + v)
        hids.append(h)
    return {
        "logit": jnp.stack(qs, 0),
        "next_state": (h[None], c[None]),
        "hidden_state": jnp.stack(hids, 0),
    }


if __name__ == "__main__":
    T, B, N, H, A = 8, 4, 16, 32, 6

    key = jax.random.PRNGKey(0)
    ks = jax.random.split(key, 32)

    def init_w(k, shape, fan_in):
        return (jax.random.normal(k, shape, jnp.float32) / jnp.sqrt(fan_in)).astype(jnp.float32)

    params = {
        # FCEncoder
        "w0": init_w(ks[0], (N, H), N),  "b0": 0.01 * jax.random.normal(ks[1], (1, H), jnp.float32),
        "w1": init_w(ks[2], (H, H), H),  "b1": 0.01 * jax.random.normal(ks[3], (1, H), jnp.float32),
        "w2": init_w(ks[4], (H, H), H),  "b2": 0.01 * jax.random.normal(ks[5], (1, H), jnp.float32),
        # LSTM ('normal') : wx (H,4H), wh (H,4H), bias (1,4H), LN affine params
        "wx": init_w(ks[6], (H, 4 * H), H),
        "wh": init_w(ks[7], (H, 4 * H), H),
        "bl": 0.01 * jax.random.normal(ks[8], (1, 4 * H), jnp.float32),
        "gx": 1.0 + 0.05 * jax.random.normal(ks[9], (1, 4 * H), jnp.float32),
        "bx": 0.01 * jax.random.normal(ks[10], (1, 4 * H), jnp.float32),
        "gh": 1.0 + 0.05 * jax.random.normal(ks[11], (1, 4 * H), jnp.float32),
        "bh": 0.01 * jax.random.normal(ks[12], (1, 4 * H), jnp.float32),
        # DuelingHead
        "wa1": init_w(ks[13], (H, H), H), "ba1": 0.01 * jax.random.normal(ks[14], (1, H), jnp.float32),
        "wa2": init_w(ks[15], (H, A), H), "ba2": 0.01 * jax.random.normal(ks[16], (1, A), jnp.float32),
        "wv1": init_w(ks[17], (H, H), H), "bv1": 0.01 * jax.random.normal(ks[18], (1, H), jnp.float32),
        "wv2": init_w(ks[19], (H, 1), H), "bv2": 0.01 * jax.random.normal(ks[20], (1, 1), jnp.float32),
    }

    obs = jax.random.normal(ks[21], (T, B, N), jnp.float32)
    h0 = jax.random.normal(ks[22], (1, B, H), jnp.float32) * 0.1
    c0 = jax.random.normal(ks[23], (1, B, H), jnp.float32) * 0.1

    out = drqn_forward(obs, h0, c0, params)
    jax.block_until_ready(out)

    ref = drqn_reference(obs, h0, c0, params)
    assert out["logit"].shape == (T, B, A)
    assert out["hidden_state"].shape == (T, B, H)
    assert out["next_state"][0].shape == (1, B, H)
    assert jnp.max(jnp.abs(out["logit"] - ref["logit"])) < 1e-2
    assert jnp.max(jnp.abs(out["hidden_state"] - ref["hidden_state"])) < 1e-2
    assert jnp.max(jnp.abs(out["next_state"][0] - ref["next_state"][0])) < 1e-2
    assert jnp.max(jnp.abs(out["next_state"][1] - ref["next_state"][1])) < 1e-2

    print("KERNEL_OK")
</pallas_src>

<mosaic_0001>
module attributes {stable_mosaic.version = 11 : i64} {
  func.func @_drqn_kernel(%arg0: i32, %arg1: memref<32x16xf32, #tpu.memory_space<vmem>>, %arg2: memref<4x32xf32, #tpu.memory_space<vmem>>, %arg3: memref<4x32xf32, #tpu.memory_space<vmem>>, %arg4: memref<16x32xf32, #tpu.memory_space<vmem>>, %arg5: memref<1x32xf32, #tpu.memory_space<vmem>>, %arg6: memref<32x32xf32, #tpu.memory_space<vmem>>, %arg7: memref<1x32xf32, #tpu.memory_space<vmem>>, %arg8: memref<32x32xf32, #tpu.memory_space<vmem>>, %arg9: memref<1x32xf32, #tpu.memory_space<vmem>>, %arg10: memref<32x128xf32, #tpu.memory_space<vmem>>, %arg11: memref<32x128xf32, #tpu.memory_space<vmem>>, %arg12: memref<1x128xf32, #tpu.memory_space<vmem>>, %arg13: memref<1x128xf32, #tpu.memory_space<vmem>>, %arg14: memref<1x128xf32, #tpu.memory_space<vmem>>, %arg15: memref<1x128xf32, #tpu.memory_space<vmem>>, %arg16: memref<1x128xf32, #tpu.memory_space<vmem>>, %arg17: memref<32x64xf32, #tpu.memory_space<vmem>>, %arg18: memref<1x64xf32, #tpu.memory_space<vmem>>, %arg19: memref<64x7xf32, #tpu.memory_space<vmem>>, %arg20: memref<1x7xf32, #tpu.memory_space<vmem>>, %arg21: memref<32x6xf32, #tpu.memory_space<vmem>>, %arg22: memref<32x32xf32, #tpu.memory_space<vmem>>, %arg23: memref<4x32xf32, #tpu.memory_space<vmem>>, %arg24: memref<4x32xf32, #tpu.memory_space<vmem>>, %arg25: memref<32x128xf32, #tpu.memory_space<vmem>>) attributes {dimension_semantics = [#tpu.dimension_semantics<arbitrary>], iteration_bounds = array<i64: 1>, scalar_prefetch = 0 : i64, scratch_operands = 1 : i64, tpu.core_type = #tpu.core_type<tc>, window_params = [{pipeline_mode = #tpu.pipeline_mode<synchronous>, transform_indices = @transform_0, window_bounds = array<i64: 32, 16>}, {pipeline_mode = #tpu.pipeline_mode<synchronous>, transform_indices = @transform_1, window_bounds = array<i64: 4, 32>}, {pipeline_mode = #tpu.pipeline_mode<synchronous>, transform_indices = @transform_2, window_bounds = array<i64: 4, 32>}, {pipeline_mode = #tpu.pipeline_mode<synchronous>, transform_indices = @transform_3, window_bounds = array<i64: 16, 32>}, {pipeline_mode = #tpu.pipeline_mode<synchronous>, transform_indices = @transform_4, window_bounds = array<i64: 1, 32>}, {pipeline_mode = #tpu.pipeline_mode<synchronous>, transform_indices = @transform_5, window_bounds = array<i64: 32, 32>}, {pipeline_mode = #tpu.pipeline_mode<synchronous>, transform_indices = @transform_6, window_bounds = array<i64: 1, 32>}, {pipeline_mode = #tpu.pipeline_mode<synchronous>, transform_indices = @transform_7, window_bounds = array<i64: 32, 32>}, {pipeline_mode = #tpu.pipeline_mode<synchronous>, transform_indices = @transform_8, window_bounds = array<i64: 1, 32>}, {pipeline_mode = #tpu.pipeline_mode<synchronous>, transform_indices = @transform_9, window_bounds = array<i64: 32, 128>}, {pipeline_mode = #tpu.pipeline_mode<synchronous>, transform_indices = @transform_10, window_bounds = array<i64: 32, 128>}, {pipeline_mode = #tpu.pipeline_mode<synchronous>, transform_indices = @transform_11, window_bounds = array<i64: 1, 128>}, {pipeline_mode = #tpu.pipeline_mode<synchronous>, transform_indices = @transform_12, window_bounds = array<i64: 1, 128>}, {pipeline_mode = #tpu.pipeline_mode<synchronous>, transform_indices = @transform_13, window_bounds = array<i64: 1, 128>}, {pipeline_mode = #tpu.pipeline_mode<synchronous>, transform_indices = @transform_14, window_bounds = array<i64: 1, 128>}, {pipeline_mode = #tpu.pipeline_mode<synchronous>, transform_indices = @transform_15, window_bounds = array<i64: 1, 128>}, {pipeline_mode = #tpu.pipeline_mode<synchronous>, transform_indices = @transform_16, window_bounds = array<i64: 32, 64>}, {pipeline_mode = #tpu.pipeline_mode<synchronous>, transform_indices = @transform_17, window_bounds = array<i64: 1, 64>}, {pipeline_mode = #tpu.pipeline_mode<synchronous>, transform_indices = @transform_18, window_bounds = array<i64: 64, 7>}, {pipeline_mode = #tpu.pipeline_mode<synchronous>, transform_indices = @transform_19, window_bounds = array<i64: 1, 7>}, {pipeline_mode = #tpu.pipeline_mode<synchronous>, transform_indices = @transform_20, window_bounds = array<i64: 32, 6>}, {pipeline_mode = #tpu.pipeline_mode<synchronous>, transform_indices = @transform_21, window_bounds = array<i64: 32, 32>}, {pipeline_mode = #tpu.pipeline_mode<synchronous>, transform_indices = @transform_22, window_bounds = array<i64: 4, 32>}, {pipeline_mode = #tpu.pipeline_mode<synchronous>, transform_indices = @transform_23, window_bounds = array<i64: 4, 32>}]} {
    %c0 = arith.constant 0 : index
    %c0_0 = arith.constant 0 : index
    %0 = vector.load %arg1[%c0, %c0_0] : memref<32x16xf32, #tpu.memory_space<vmem>>, vector<32x16xf32>
    %c0_1 = arith.constant 0 : index
    %c0_2 = arith.constant 0 : index
    %1 = vector.load %arg4[%c0_1, %c0_2] : memref<16x32xf32, #tpu.memory_space<vmem>>, vector<16x32xf32>
    %cst = arith.constant dense<0.000000e+00> : vector<32x32xf32>
    %2 = tpu.matmul %0, %1, %cst {dimension_numbers = #tpu.dot_dimension_numbers<[1], [0], [0], [1], [0, 0, 1, 1], [], []>} : vector<32x16xf32>, vector<16x32xf32>, vector<32x32xf32> -> vector<32x32xf32>
    %c0_3 = arith.constant 0 : index
    %c0_4 = arith.constant 0 : index
    %3 = vector.load %arg5[%c0_3, %c0_4] : memref<1x32xf32, #tpu.memory_space<vmem>>, vector<1x32xf32>
    %4 = vector.broadcast %3 : vector<1x32xf32> to vector<32x32xf32>
    %5 = arith.addf %2, %4 : vector<32x32xf32>
    %cst_5 = arith.constant 0.000000e+00 : f32
    %6 = vector.broadcast %cst_5 : f32 to vector<32x32xf32>
    %7 = arith.maximumf %5, %6 : vector<32x32xf32>
    %c0_6 = arith.constant 0 : index
    %c0_7 = arith.constant 0 : index
    %8 = vector.load %arg6[%c0_6, %c0_7] : memref<32x32xf32, #tpu.memory_space<vmem>>, vector<32x32xf32>
    %cst_8 = arith.constant dense<0.000000e+00> : vector<32x32xf32>
    %9 = tpu.matmul %7, %8, %cst_8 {dimension_numbers = #tpu.dot_dimension_numbers<[1], [0], [0], [1], [0, 0, 1, 1], [], []>} : vector<32x32xf32>, vector<32x32xf32>, vector<32x32xf32> -> vector<32x32xf32>
    %c0_9 = arith.constant 0 : index
    %c0_10 = arith.constant 0 : index
    %10 = vector.load %arg7[%c0_9, %c0_10] : memref<1x32xf32, #tpu.memory_space<vmem>>, vector<1x32xf32>
    %11 = vector.broadcast %10 : vector<1x32xf32> to vector<32x32xf32>
    %12 = arith.addf %9, %11 : vector<32x32xf32>
    %cst_11 = arith.constant 0.000000e+00 : f32
    %13 = vector.broadcast %cst_11 : f32 to vector<32x32xf32>
    %14 = arith.maximumf %12, %13 : vector<32x32xf32>
    %c0_12 = arith.constant 0 : index
    %c0_13 = arith.constant 0 : index
    %15 = vector.load %arg8[%c0_12, %c0_13] : memref<32x32xf32, #tpu.memory_space<vmem>>, vector<32x32xf32>
    %cst_14 = arith.constant dense<0.000000e+00> : vector<32x32xf32>
    %16 = tpu.matmul %14, %15, %cst_14 {dimension_numbers = #tpu.dot_dimension_numbers<[1], [0], [0], [1], [0, 0, 1, 1], [], []>} : vector<32x32xf32>, vector<32x32xf32>, vector<32x32xf32> -> vector<32x32xf32>
    %c0_15 = arith.constant 0 : index
    %c0_16 = arith.constant 0 : index
    %17 = vector.load %arg9[%c0_15, %c0_16] : memref<1x32xf32, #tpu.memory_space<vmem>>, vector<1x32xf32>
    %18 = vector.broadcast %17 : vector<1x32xf32> to vector<32x32xf32>
    %19 = arith.addf %16, %18 : vector<32x32xf32>
    %cst_17 = arith.constant 0.000000e+00 : f32
    %20 = vector.broadcast %cst_17 : f32 to vector<32x32xf32>
    %21 = arith.maximumf %19, %20 : vector<32x32xf32>
    %c0_18 = arith.constant 0 : index
    %c0_19 = arith.constant 0 : index
    %22 = vector.load %arg10[%c0_18, %c0_19] : memref<32x128xf32, #tpu.memory_space<vmem>>, vector<32x128xf32>
    %cst_20 = arith.constant dense<0.000000e+00> : vector<32x128xf32>
    %23 = tpu.matmul %21, %22, %cst_20 {dimension_numbers = #tpu.dot_dimension_numbers<[1], [0], [0], [1], [0, 0, 1, 1], [], []>} : vector<32x32xf32>, vector<32x128xf32>, vector<32x128xf32> -> vector<32x128xf32>
    %c0_21 = arith.constant 0 : index
    %c0_22 = arith.constant 0 : index
    %24 = vector.load %arg13[%c0_21, %c0_22] : memref<1x128xf32, #tpu.memory_space<vmem>>, vector<1x128xf32>
    %c0_23 = arith.constant 0 : index
    %c0_24 = arith.constant 0 : index
    %25 = vector.load %arg14[%c0_23, %c0_24] : memref<1x128xf32, #tpu.memory_space<vmem>>, vector<1x128xf32>
    %cst_25 = arith.constant dense<0.000000e+00> : vector<32xf32>
    %26 = vector.multi_reduction <add>, %23, %cst_25 [1] : vector<32x128xf32> to vector<32xf32>
    %27 = vector.shape_cast %26 : vector<32xf32> to vector<32x1xf32>
    %cst_26 = arith.constant 1.280000e+02 : f32
    %28 = vector.broadcast %cst_26 : f32 to vector<32x1xf32>
    %29 = arith.divf %27, %28 : vector<32x1xf32>
    %30 = vector.broadcast %29 : vector<32x1xf32> to vector<32x128xf32>
    %31 = arith.subf %23, %30 : vector<32x128xf32>
    %32 = arith.mulf %31, %31 : vector<32x128xf32>
    %cst_27 = arith.constant dense<0.000000e+00> : vector<32xf32>
    %33 = vector.multi_reduction <add>, %32, %cst_27 [1] : vector<32x128xf32> to vector<32xf32>
    %34 = vector.shape_cast %33 : vector<32xf32> to vector<32x1xf32>
    %cst_28 = arith.constant 1.280000e+02 : f32
    %35 = vector.broadcast %cst_28 : f32 to vector<32x1xf32>
    %36 = arith.divf %34, %35 : vector<32x1xf32>
    %37 = vector.broadcast %29 : vector<32x1xf32> to vector<32x128xf32>
    %38 = arith.subf %23, %37 : vector<32x128xf32>
    %cst_29 = arith.constant 9.99999974E-6 : f32
    %39 = vector.broadcast %cst_29 : f32 to vector<32x1xf32>
    %40 = arith.addf %36, %39 : vector<32x1xf32>
    %41 = math.rsqrt %40 : vector<32x1xf32>
    %42 = vector.broadcast %41 : vector<32x1xf32> to vector<32x128xf32>
    %43 = arith.mulf %38, %42 : vector<32x128xf32>
    %44 = vector.broadcast %24 : vector<1x128xf32> to vector<32x128xf32>
    %45 = arith.mulf %43, %44 : vector<32x128xf32>
    %46 = vector.broadcast %25 : vector<1x128xf32> to vector<32x128xf32>
    %47 = arith.addf %45, %46 : vector<32x128xf32>
    %c0_30 = arith.constant 0 : index
    %c0_31 = arith.constant 0 : index
    %48 = vector.load %arg12[%c0_30, %c0_31] : memref<1x128xf32, #tpu.memory_space<vmem>>, vector<1x128xf32>
    %49 = vector.broadcast %48 : vector<1x128xf32> to vector<32x128xf32>
    %50 = arith.addf %47, %49 : vector<32x128xf32>
    %c0_32 = arith.constant 0 : index
    %c0_33 = arith.constant 0 : index
    %51 = vector.load %arg25[%c0_32, %c0_33] : memref<32x128xf32, #tpu.memory_space<vmem>>, vector<32x128xf32>
    tpu.vector_store %arg25[%c0_32, %c0_33], %50 {strides = array<i32>} : memref<32x128xf32, #tpu.memory_space<vmem>>, vector<32x128xf32>,
    %c0_34 = arith.constant 0 : index
    %c0_35 = arith.constant 0 : index
    %52 = vector.load %arg11[%c0_34, %c0_35] : memref<32x128xf32, #tpu.memory_space<vmem>>, vector<32x128xf32>
    %c0_36 = arith.constant 0 : index
    %c0_37 = arith.constant 0 : index
    %53 = vector.load %arg15[%c0_36, %c0_37] : memref<1x128xf32, #tpu.memory_space<vmem>>, vector<1x128xf32>
    %c0_38 = arith.constant 0 : index
    %c0_39 = arith.constant 0 : index
    %54 = vector.load %arg16[%c0_38, %c0_39] : memref<1x128xf32, #tpu.memory_space<vmem>>, vector<1x128xf32>
    %c0_40 = arith.constant 0 : index
    %c0_41 = arith.constant 0 : index
    %55 = vector.load %arg2[%c0_40, %c0_41] : memref<4x32xf32, #tpu.memory_space<vmem>>, vector<4x32xf32>
    %c0_42 = arith.constant 0 : index
    %c0_43 = arith.constant 0 : index
    %56 = vector.load %arg3[%c0_42, %c0_43] : memref<4x32xf32, #tpu.memory_space<vmem>>, vector<4x32xf32>
    %c0_44 = arith.constant 0 : index
    %c0_45 = arith.constant 0 : index
    %57 = vector.load %arg25[%c0_44, %c0_45] : memref<32x128xf32, #tpu.memory_space<vmem>>, vector<4x128xf32>
    %cst_46 = arith.constant dense<0.000000e+00> : vector<4x128xf32>
    %58 = tpu.matmul %55, %52, %cst_46 {dimension_numbers = #tpu.dot_dimension_numbers<[1], [0], [0], [1], [0, 0, 1, 1], [], []>} : vector<4x32xf32>, vector<32x128xf32>, vector<4x128xf32> -> vector<4x128xf32>
    %cst_47 = arith.constant dense<0.000000e+00> : vector<4xf32>
    %59 = vector.multi_reduction <add>, %58, %cst_47 [1] : vector<4x128xf32> to vector<4xf32>
    %60 = vector.shape_cast %59 : vector<4xf32> to vector<4x1xf32>
    %cst_48 = arith.constant 1.280000e+02 : f32
    %61 = vector.broadcast %cst_48 : f32 to vector<4x1xf32>
    %62 = arith.divf %60, %61 : vector<4x1xf32>
    %63 = vector.broadcast %62 : vector<4x1xf32> to vector<4x128xf32>
    %64 = arith.subf %58, %63 : vector<4x128xf32>
    %65 = arith.mulf %64, %64 : vector<4x128xf32>
    %cst_49 = arith.constant dense<0.000000e+00> : vector<4xf32>
    %66 = vector.multi_reduction <add>, %65, %cst_49 [1] : vector<4x128xf32> to vector<4xf32>
    %67 = vector.shape_cast %66 : vector<4xf32> to vector<4x1xf32>
    %cst_50 = arith.constant 1.280000e+02 : f32
    %68 = vector.broadcast %cst_50 : f32 to vector<4x1xf32>
    %69 = arith.divf %67, %68 : vector<4x1xf32>
    %70 = vector.broadcast %62 : vector<4x1xf32> to vector<4x128xf32>
    %71 = arith.subf %58, %70 : vector<4x128xf32>
    %cst_51 = arith.constant 9.99999974E-6 : f32
    %72 = vector.broadcast %cst_51 : f32 to vector<4x1xf32>
    %73 = arith.addf %69, %72 : vector<4x1xf32>
    %74 = math.rsqrt %73 : vector<4x1xf32>
    %75 = vector.broadcast %74 : vector<4x1xf32> to vector<4x128xf32>
    %76 = arith.mulf %71, %75 : vector<4x128xf32>
    %77 = vector.broadcast %53 : vector<1x128xf32> to vector<4x128xf32>
    %78 = arith.mulf %76, %77 : vector<4x128xf32>
    %79 = vector.broadcast %54 : vector<1x128xf32> to vector<4x128xf32>
    %80 = arith.addf %78, %79 : vector<4x128xf32>
    %81 = arith.addf %57, %80 : vector<4x128xf32>
    %82 = vector.extract_strided_slice %81 {offsets = [0, 0], sizes = [4, 32], strides = [1, 1]} : vector<4x128xf32> to vector<4x32xf32>
    %83 = arith.negf %82 : vector<4x32xf32>
    %84 = math.exp %83 : vector<4x32xf32>
    %cst_52 = arith.constant 1.000000e+00 : f32
    %85 = vector.broadcast %cst_52 : f32 to vector<4x32xf32>
    %86 = arith.addf %85, %84 : vector<4x32xf32>
    %87 = arith.divf %85, %86 : vector<4x32xf32>
    %88 = vector.extract_strided_slice %81 {offsets = [0, 32], sizes = [4, 32], strides = [1, 1]} : vector<4x128xf32> to vector<4x32xf32>
    %89 = arith.negf %88 : vector<4x32xf32>
    %90 = math.exp %89 : vector<4x32xf32>
    %cst_53 = arith.constant 1.000000e+00 : f32
    %91 = vector.broadcast %cst_53 : f32 to vector<4x32xf32>
    %92 = arith.addf %91, %90 : vector<4x32xf32>
    %93 = arith.divf %91, %92 : vector<4x32xf32>
    %94 = vector.extract_strided_slice %81 {offsets = [0, 64], sizes = [4, 32], strides = [1, 1]} : vector<4x128xf32> to vector<4x32xf32>
    %95 = arith.negf %94 : vector<4x32xf32>
    %96 = math.exp %95 : vector<4x32xf32>
    %cst_54 = arith.constant 1.000000e+00 : f32
    %97 = vector.broadcast %cst_54 : f32 to vector<4x32xf32>
    %98 = arith.addf %97, %96 : vector<4x32xf32>
    %99 = arith.divf %97, %98 : vector<4x32xf32>
    %100 = vector.extract_strided_slice %81 {offsets = [0, 96], sizes = [4, 32], strides = [1, 1]} : vector<4x128xf32> to vector<4x32xf32>
    %101 = math.tanh %100 : vector<4x32xf32>
    %102 = arith.mulf %93, %56 : vector<4x32xf32>
    %103 = arith.mulf %87, %101 : vector<4x32xf32>
    %104 = arith.addf %102, %103 : vector<4x32xf32>
    %105 = math.tanh %104 : vector<4x32xf32>
    %106 = arith.mulf %99, %105 : vector<4x32xf32>
    %c0_55 = arith.constant 0 : index
    %c0_56 = arith.constant 0 : index
    %107 = vector.load %arg22[%c0_55, %c0_56] : memref<32x32xf32, #tpu.memory_space<vmem>>, vector<4x32xf32>
    tpu.vector_store %arg22[%c0_55, %c0_56], %106 {strides = array<i32>} : memref<32x32xf32, #tpu.memory_space<vmem>>, vector<4x32xf32>,
    %c4 = arith.constant 4 : index
    %c0_57 = arith.constant 0 : index
    %108 = vector.load %arg25[%c4, %c0_57] : memref<32x128xf32, #tpu.memory_space<vmem>>, vector<4x128xf32>
    %cst_58 = arith.constant dense<0.000000e+00> : vector<4x128xf32>
    %109 = tpu.matmul %106, %52, %cst_58 {dimension_numbers = #tpu.dot_dimension_numbers<[1], [0], [0], [1], [0, 0, 1, 1], [], []>} : vector<4x32xf32>, vector<32x128xf32>, vector<4x128xf32> -> vector<4x128xf32>
    %cst_59 = arith.constant dense<0.000000e+00> : vector<4xf32>
    %110 = vector.multi_reduction <add>, %109, %cst_59 [1] : vector<4x128xf32> to vector<4xf32>
    %111 = vector.shape_cast %110 : vector<4xf32> to vector<4x1xf32>
    %cst_60 = arith.constant 1.280000e+02 : f32
    %112 = vector.broadcast %cst_60 : f32 to vector<4x1xf32>
    %113 = arith.divf %111, %112 : vector<4x1xf32>
    %114 = vector.broadcast %113 : vector<4x1xf32> to vector<4x128xf32>
    %115 = arith.subf %109, %114 : vector<4x128xf32>
    %116 = arith.mulf %115, %115 : vector<4x128xf32>
    %cst_61 = arith.constant dense<0.000000e+00> : vector<4xf32>
    %117 = vector.multi_reduction <add>, %116, %cst_61 [1] : vector<4x128xf32> to vector<4xf32>
    %118 = vector.shape_cast %117 : vector<4xf32> to vector<4x1xf32>
    %cst_62 = arith.constant 1.280000e+02 : f32
    %119 = vector.broadcast %cst_62 : f32 to vector<4x1xf32>
    %120 = arith.divf %118, %119 : vector<4x1xf32>
    %121 = vector.broadcast %113 : vector<4x1xf32> to vector<4x128xf32>
    %122 = arith.subf %109, %121 : vector<4x128xf32>
    %cst_63 = arith.constant 9.99999974E-6 : f32
    %123 = vector.broadcast %cst_63 : f32 to vector<4x1xf32>
    %124 = arith.addf %120, %123 : vector<4x1xf32>
    %125 = math.rsqrt %124 : vector<4x1xf32>
    %126 = vector.broadcast %125 : vector<4x1xf32> to vector<4x128xf32>
    %127 = arith.mulf %122, %126 : vector<4x128xf32>
    %128 = vector.broadcast %53 : vector<1x128xf32> to vector<4x128xf32>
    %129 = arith.mulf %127, %128 : vector<4x128xf32>
    %130 = vector.broadcast %54 : vector<1x128xf32> to vector<4x128xf32>
    %131 = arith.addf %129, %130 : vector<4x128xf32>
    %132 = arith.addf %108, %131 : vector<4x128xf32>
    %133 = vector.extract_strided_slice %132 {offsets = [0, 0], sizes = [4, 32], strides = [1, 1]} : vector<4x128xf32> to vector<4x32xf32>
    %134 = arith.negf %133 : vector<4x32xf32>
    %135 = math.exp %134 : vector<4x32xf32>
    %cst_64 = arith.constant 1.000000e+00 : f32
    %136 = vector.broadcast %cst_64 : f32 to vector<4x32xf32>
    %137 = arith.addf %136, %135 : vector<4x32xf32>
    %138 = arith.divf %136, %137 : vector<4x32xf32>
    %139 = vector.extract_strided_slice %132 {offsets = [0, 32], sizes = [4, 32], strides = [1, 1]} : vector<4x128xf32> to vector<4x32xf32>
    %140 = arith.negf %139 : vector<4x32xf32>
    %141 = math.exp %140 : vector<4x32xf32>
    %cst_65 = arith.constant 1.000000e+00 : f32
    %142 = vector.broadcast %cst_65 : f32 to vector<4x32xf32>
    %143 = arith.addf %142, %141 : vector<4x32xf32>
    %144 = arith.divf %142, %143 : vector<4x32xf32>
    %145 = vector.extract_strided_slice %132 {offsets = [0, 64], sizes = [4, 32], strides = [1, 1]} : vector<4x128xf32> to vector<4x32xf32>
    %146 = arith.negf %145 : vector<4x32xf32>
    %147 = math.exp %146 : vector<4x32xf32>
    %cst_66 = arith.constant 1.000000e+00 : f32
    %148 = vector.broadcast %cst_66 : f32 to vector<4x32xf32>
    %149 = arith.addf %148, %147 : vector<4x32xf32>
    %150 = arith.divf %148, %149 : vector<4x32xf32>
    %151 = vector.extract_strided_slice %132 {offsets = [0, 96], sizes = [4, 32], strides = [1, 1]} : vector<4x128xf32> to vector<4x32xf32>
    %152 = math.tanh %151 : vector<4x32xf32>
    %153 = arith.mulf %144, %104 : vector<4x32xf32>
    %154 = arith.mulf %138, %152 : vector<4x32xf32>
    %155 = arith.addf %153, %154 : vector<4x32xf32>
    %156 = math.tanh %155 : vector<4x32xf32>
    %157 = arith.mulf %150, %156 : vector<4x32xf32>
    %c4_67 = arith.constant 4 : index
    %c0_68 = arith.constant 0 : index
    %158 = vector.load %arg22[%c4_67, %c0_68] : memref<32x32xf32, #tpu.memory_space<vmem>>, vector<4x32xf32>
    tpu.vector_store %arg22[%c4_67, %c0_68], %157 {strides = array<i32>} : memref<32x32xf32, #tpu.memory_space<vmem>>, vector<4x32xf32>,
    %c8 = arith.constant 8 : index
    %c0_69 = arith.constant 0 : index
    %159 = vector.load %arg25[%c8, %c0_69] : memref<32x128xf32, #tpu.memory_space<vmem>>, vector<4x128xf32>
    %cst_70 = arith.constant dense<0.000000e+00> : vector<4x128xf32>
    %160 = tpu.matmul %157, %52, %cst_70 {dimension_numbers = #tpu.dot_dimension_numbers<[1], [0], [0], [1], [0, 0, 1, 1], [], []>} : vector<4x32xf32>, vector<32x128xf32>, vector<4x128xf32> -> vector<4x128xf32>
    %cst_71 = arith.constant dense<0.000000e+00> : vector<4xf32>
    %161 = vector.multi_reduction <add>, %160, %cst_71 [1] : vector<4x128xf32> to vector<4xf32>
    %162 = vector.shape_cast %161 : vector<4xf32> to vector<4x1xf32>
    %cst_72 = arith.constant 1.280000e+02 : f32
    %163 = vector.broadcast %cst_72 : f32 to vector<4x1xf32>
    %164 = arith.divf %162, %163 : vector<4x1xf32>
    %165 = vector.broadcast %164 : vector<4x1xf32> to vector<4x128xf32>
    %166 = arith.subf %160, %165 : vector<4x128xf32>
    %167 = arith.mulf %166, %166 : vector<4x128xf32>
    %cst_73 = arith.constant dense<0.000000e+00> : vector<4xf32>
    %168 = vector.multi_reduction <add>, %167, %cst_73 [1] : vector<4x128xf32> to vector<4xf32>
    %169 = vector.shape_cast %168 : vector<4xf32> to vector<4x1xf32>
    %cst_74 = arith.constant 1.280000e+02 : f32
    %170 = vector.broadcast %cst_74 : f32 to vector<4x1xf32>
    %171 = arith.divf %169, %170 : vector<4x1xf32>
    %172 = vector.broadcast %164 : vector<4x1xf32> to vector<4x128xf32>
    %173 = arith.subf %160, %172 : vector<4x128xf32>
    %cst_75 = arith.constant 9.99999974E-6 : f32
    %174 = vector.broadcast %cst_75 : f32 to vector<4x1xf32>
    %175 = arith.addf %171, %174 : vector<4x1xf32>
    %176 = math.rsqrt %175 : vector<4x1xf32>
    %177 = vector.broadcast %176 : vector<4x1xf32> to vector<4x128xf32>
    %178 = arith.mulf %173, %177 : vector<4x128xf32>
    %179 = vector.broadcast %53 : vector<1x128xf32> to vector<4x128xf32>
    %180 = arith.mulf %178, %179 : vector<4x128xf32>
    %181 = vector.broadcast %54 : vector<1x128xf32> to vector<4x128xf32>
    %182 = arith.addf %180, %181 : vector<4x128xf32>
    %183 = arith.addf %159, %182 : vector<4x128xf32>
    %184 = vector.extract_strided_slice %183 {offsets = [0, 0], sizes = [4, 32], strides = [1, 1]} : vector<4x128xf32> to vector<4x32xf32>
    %185 = arith.negf %184 : vector<4x32xf32>
    %186 = math.exp %185 : vector<4x32xf32>
    %cst_76 = arith.constant 1.000000e+00 : f32
    %187 = vector.broadcast %cst_76 : f32 to vector<4x32xf32>
    %188 = arith.addf %187, %186 : vector<4x32xf32>
    %189 = arith.divf %187, %188 : vector<4x32xf32>
    %190 = vector.extract_strided_slice %183 {offsets = [0, 32], sizes = [4, 32], strides = [1, 1]} : vector<4x128xf32> to vector<4x32xf32>
    %191 = arith.negf %190 : vector<4x32xf32>
    %192 = math.exp %191 : vector<4x32xf32>
    %cst_77 = arith.constant 1.000000e+00 : f32
    %193 = vector.broadcast %cst_77 : f32 to vector<4x32xf32>
    %194 = arith.addf %193, %192 : vector<4x32xf32>
    %195 = arith.divf %193, %194 : vector<4x32xf32>
    %196 = vector.extract_strided_slice %183 {offsets = [0, 64], sizes = [4, 32], strides = [1, 1]} : vector<4x128xf32> to vector<4x32xf32>
    %197 = arith.negf %196 : vector<4x32xf32>
    %198 = math.exp %197 : vector<4x32xf32>
    %cst_78 = arith.constant 1.000000e+00 : f32
    %199 = vector.broadcast %cst_78 : f32 to vector<4x32xf32>
    %200 = arith.addf %199, %198 : vector<4x32xf32>
    %201 = arith.divf %199, %200 : vector<4x32xf32>
    %202 = vector.extract_strided_slice %183 {offsets = [0, 96], sizes = [4, 32], strides = [1, 1]} : vector<4x128xf32> to vector<4x32xf32>
    %203 = math.tanh %202 : vector<4x32xf32>
    %204 = arith.mulf %195, %155 : vector<4x32xf32>
    %205 = arith.mulf %189, %203 : vector<4x32xf32>
    %206 = arith.addf %204, %205 : vector<4x32xf32>
    %207 = math.tanh %206 : vector<4x32xf32>
    %208 = arith.mulf %201, %207 : vector<4x32xf32>
    %c8_79 = arith.constant 8 : index
    %c0_80 = arith.constant 0 : index
    %209 = vector.load %arg22[%c8_79, %c0_80] : memref<32x32xf32, #tpu.memory_space<vmem>>, vector<4x32xf32>
    tpu.vector_store %arg22[%c8_79, %c0_80], %208 {strides = array<i32>} : memref<32x32xf32, #tpu.memory_space<vmem>>, vector<4x32xf32>,
    %c12 = arith.constant 12 : index
    %c0_81 = arith.constant 0 : index
    %210 = vector.load %arg25[%c12, %c0_81] : memref<32x128xf32, #tpu.memory_space<vmem>>, vector<4x128xf32>
    %cst_82 = arith.constant dense<0.000000e+00> : vector<4x128xf32>
    %211 = tpu.matmul %208, %52, %cst_82 {dimension_numbers = #tpu.dot_dimension_numbers<[1], [0], [0], [1], [0, 0, 1, 1], [], []>} : vector<4x32xf32>, vector<32x128xf32>, vector<4x128xf32> -> vector<4x128xf32>
    %cst_83 = arith.constant dense<0.000000e+00> : vector<4xf32>
    %212 = vector.multi_reduction <add>, %211, %cst_83 [1] : vector<4x128xf32> to vector<4xf32>
    %213 = vector.shape_cast %212 : vector<4xf32> to vector<4x1xf32>
    %cst_84 = arith.constant 1.280000e+02 : f32
    %214 = vector.broadcast %cst_84 : f32 to vector<4x1xf32>
    %215 = arith.divf %213, %214 : vector<4x1xf32>
    %216 = vector.broadcast %215 : vector<4x1xf32> to vector<4x128xf32>
    %217 = arith.subf %211, %216 : vector<4x128xf32>
    %218 = arith.mulf %217, %217 : vector<4x128xf32>
    %cst_85 = arith.constant dense<0.000000e+00> : vector<4xf32>
    %219 = vector.multi_reduction <add>, %218, %cst_85 [1] : vector<4x128xf32> to vector<4xf32>
    %220 = vector.shape_cast %219 : vector<4xf32> to vector<4x1xf32>
    %cst_86 = arith.constant 1.280000e+02 : f32
    %221 = vector.broadcast %cst_86 : f32 to vector<4x1xf32>
    %222 = arith.divf %220, %221 : vector<4x1xf32>
    %223 = vector.broadcast %215 : vector<4x1xf32> to vector<4x128xf32>
    %224 = arith.subf %211, %223 : vector<4x128xf32>
    %cst_87 = arith.constant 9.99999974E-6 : f32
    %225 = vector.broadcast %cst_87 : f32 to vector<4x1xf32>
    %226 = arith.addf %222, %225 : vector<4x1xf32>
    %227 = math.rsqrt %226 : vector<4x1xf32>
    %228 = vector.broadcast %227 : vector<4x1xf32> to vector<4x128xf32>
    %229 = arith.mulf %224, %228 : vector<4x128xf32>
    %230 = vector.broadcast %53 : vector<1x128xf32> to vector<4x128xf32>
    %231 = arith.mulf %229, %230 : vector<4x128xf32>
    %232 = vector.broadcast %54 : vector<1x128xf32> to vector<4x128xf32>
    %233 = arith.addf %231, %232 : vector<4x128xf32>
    %234 = arith.addf %210, %233 : vector<4x128xf32>
    %235 = vector.extract_strided_slice %234 {offsets = [0, 0], sizes = [4, 32], strides = [1, 1]} : vector<4x128xf32> to vector<4x32xf32>
    %236 = arith.negf %235 : vector<4x32xf32>
    %237 = math.exp %236 : vector<4x32xf32>
    %cst_88 = arith.constant 1.000000e+00 : f32
    %238 = vector.broadcast %cst_88 : f32 to vector<4x32xf32>
    %239 = arith.addf %238, %237 : vector<4x32xf32>
    %240 = arith.divf %238, %239 : vector<4x32xf32>
    %241 = vector.extract_strided_slice %234 {offsets = [0, 32], sizes = [4, 32], strides = [1, 1]} : vector<4x128xf32> to vector<4x32xf32>
    %242 = arith.negf %241 : vector<4x32xf32>
    %243 = math.exp %242 : vector<4x32xf32>
    %cst_89 = arith.constant 1.000000e+00 : f32
    %244 = vector.broadcast %cst_89 : f32 to vector<4x32xf32>
    %245 = arith.addf %244, %243 : vector<4x32xf32>
    %246 = arith.divf %244, %245 : vector<4x32xf32>
    %247 = vector.extract_strided_slice %234 {offsets = [0, 64], sizes = [4, 32], strides = [1, 1]} : vector<4x128xf32> to vector<4x32xf32>
    %248 = arith.negf %247 : vector<4x32xf32>
    %249 = math.exp %248 : vector<4x32xf32>
    %cst_90 = arith.constant 1.000000e+00 : f32
    %250 = vector.broadcast %cst_90 : f32 to vector<4x32xf32>
    %251 = arith.addf %250, %249 : vector<4x32xf32>
    %252 = arith.divf %250, %251 : vector<4x32xf32>
    %253 = vector.extract_strided_slice %234 {offsets = [0, 96], sizes = [4, 32], strides = [1, 1]} : vector<4x128xf32> to vector<4x32xf32>
    %254 = math.tanh %253 : vector<4x32xf32>
    %255 = arith.mulf %246, %206 : vector<4x32xf32>
    %256 = arith.mulf %240, %254 : vector<4x32xf32>
    %257 = arith.addf %255, %256 : vector<4x32xf32>
    %258 = math.tanh %257 : vector<4x32xf32>
    %259 = arith.mulf %252, %258 : vector<4x32xf32>
    %c12_91 = arith.constant 12 : index
    %c0_92 = arith.constant 0 : index
    %260 = vector.load %arg22[%c12_91, %c0_92] : memref<32x32xf32, #tpu.memory_space<vmem>>, vector<4x32xf32>
    tpu.vector_store %arg22[%c12_91, %c0_92], %259 {strides = array<i32>} : memref<32x32xf32, #tpu.memory_space<vmem>>, vector<4x32xf32>,
    %c16 = arith.constant 16 : index
    %c0_93 = arith.constant 0 : index
    %261 = vector.load %arg25[%c16, %c0_93] : memref<32x128xf32, #tpu.memory_space<vmem>>, vector<4x128xf32>
    %cst_94 = arith.constant dense<0.000000e+00> : vector<4x128xf32>
    %262 = tpu.matmul %259, %52, %cst_94 {dimension_numbers = #tpu.dot_dimension_numbers<[1], [0], [0], [1], [0, 0, 1, 1], [], []>} : vector<4x32xf32>, vector<32x128xf32>, vector<4x128xf32> -> vector<4x128xf32>
    %cst_95 = arith.constant dense<0.000000e+00> : vector<4xf32>
    %263 = vector.multi_reduction <add>, %262, %cst_95 [1] : vector<4x128xf32> to vector<4xf32>
    %264 = vector.shape_cast %263 : vector<4xf32> to vector<4x1xf32>
    %cst_96 = arith.constant 1.280000e+02 : f32
    %265 = vector.broadcast %cst_96 : f32 to vector<4x1xf32>
    %266 = arith.divf %264, %265 : vector<4x1xf32>
    %267 = vector.broadcast %266 : vector<4x1xf32> to vector<4x128xf32>
    %268 = arith.subf %262, %267 : vector<4x128xf32>
    %269 = arith.mulf %268, %268 : vector<4x128xf32>
    %cst_97 = arith.constant dense<0.000000e+00> : vector<4xf32>
    %270 = vector.multi_reduction <add>, %269, %cst_97 [1] : vector<4x128xf32> to vector<4xf32>
    %271 = vector.shape_cast %270 : vector<4xf32> to vector<4x1xf32>
    %cst_98 = arith.constant 1.280000e+02 : f32
    %272 = vector.broadcast %cst_98 : f32 to vector<4x1xf32>
    %273 = arith.divf %271, %272 : vector<4x1xf32>
    %274 = vector.broadcast %266 : vector<4x1xf32> to vector<4x128xf32>
    %275 = arith.subf %262, %274 : vector<4x128xf32>
    %cst_99 = arith.constant 9.99999974E-6 : f32
    %276 = vector.broadcast %cst_99 : f32 to vector<4x1xf32>
    %277 = arith.addf %273, %276 : vector<4x1xf32>
    %278 = math.rsqrt %277 : vector<4x1xf32>
    %279 = vector.broadcast %278 : vector<4x1xf32> to vector<4x128xf32>
    %280 = arith.mulf %275, %279 : vector<4x128xf32>
    %281 = vector.broadcast %53 : vector<1x128xf32> to vector<4x128xf32>
    %282 = arith.mulf %280, %281 : vector<4x128xf32>
    %283 = vector.broadcast %54 : vector<1x128xf32> to vector<4x128xf32>
    %284 = arith.addf %282, %283 : vector<4x128xf32>
    %285 = arith.addf %261, %284 : vector<4x128xf32>
    %286 = vector.extract_strided_slice %285 {offsets = [0, 0], sizes = [4, 32], strides = [1, 1]} : vector<4x128xf32> to vector<4x32xf32>
    %287 = arith.negf %286 : vector<4x32xf32>
    %288 = math.exp %287 : vector<4x32xf32>
    %cst_100 = arith.constant 1.000000e+00 : f32
    %289 = vector.broadcast %cst_100 : f32 to vector<4x32xf32>
    %290 = arith.addf %289, %288 : vector<4x32xf32>
    %291 = arith.divf %289, %290 : vector<4x32xf32>
    %292 = vector.extract_strided_slice %285 {offsets = [0, 32], sizes = [4, 32], strides = [1, 1]} : vector<4x128xf32> to vector<4x32xf32>
    %293 = arith.negf %292 : vector<4x32xf32>
    %294 = math.exp %293 : vector<4x32xf32>
    %cst_101 = arith.constant 1.000000e+00 : f32
    %295 = vector.broadcast %cst_101 : f32 to vector<4x32xf32>
    %296 = arith.addf %295, %294 : vector<4x32xf32>
    %297 = arith.divf %295, %296 : vector<4x32xf32>
    %298 = vector.extract_strided_slice %285 {offsets = [0, 64], sizes = [4, 32], strides = [1, 1]} : vector<4x128xf32> to vector<4x32xf32>
    %299 = arith.negf %298 : vector<4x32xf32>
    %300 = math.exp %299 : vector<4x32xf32>
    %cst_102 = arith.constant 1.000000e+00 : f32
    %301 = vector.broadcast %cst_102 : f32 to vector<4x32xf32>
    %302 = arith.addf %301, %300 : vector<4x32xf32>
    %303 = arith.divf %301, %302 : vector<4x32xf32>
    %304 = vector.extract_strided_slice %285 {offsets = [0, 96], sizes = [4, 32], strides = [1, 1]} : vector<4x128xf32> to vector<4x32xf32>
    %305 = math.tanh %304 : vector<4x32xf32>
    %306 = arith.mulf %297, %257 : vector<4x32xf32>
    %307 = arith.mulf %291, %305 : vector<4x32xf32>
    %308 = arith.addf %306, %307 : vector<4x32xf32>
    %309 = math.tanh %308 : vector<4x32xf32>
    %310 = arith.mulf %303, %309 : vector<4x32xf32>
    %c16_103 = arith.constant 16 : index
    %c0_104 = arith.constant 0 : index
    %311 = vector.load %arg22[%c16_103, %c0_104] : memref<32x32xf32, #tpu.memory_space<vmem>>, vector<4x32xf32>
    tpu.vector_store %arg22[%c16_103, %c0_104], %310 {strides = array<i32>} : memref<32x32xf32, #tpu.memory_space<vmem>>, vector<4x32xf32>,
    %c20 = arith.constant 20 : index
    %c0_105 = arith.constant 0 : index
    %312 = vector.load %arg25[%c20, %c0_105] : memref<32x128xf32, #tpu.memory_space<vmem>>, vector<4x128xf32>
    %cst_106 = arith.constant dense<0.000000e+00> : vector<4x128xf32>
    %313 = tpu.matmul %310, %52, %cst_106 {dimension_numbers = #tpu.dot_dimension_numbers<[1], [0], [0], [1], [0, 0, 1, 1], [], []>} : vector<4x32xf32>, vector<32x128xf32>, vector<4x128xf32> -> vector<4x128xf32>
    %cst_107 = arith.constant dense<0.000000e+00> : vector<4xf32>
    %314 = vector.multi_reduction <add>, %313, %cst_107 [1] : vector<4x128xf32> to vector<4xf32>
    %315 = vector.shape_cast %314 : vector<4xf32> to vector<4x1xf32>
    %cst_108 = arith.constant 1.280000e+02 : f32
    %316 = vector.broadcast %cst_108 : f32 to vector<4x1xf32>
    %317 = arith.divf %315, %316 : vector<4x1xf32>
    %318 = vector.broadcast %317 : vector<4x1xf32> to vector<4x128xf32>
    %319 = arith.subf %313, %318 : vector<4x128xf32>
    %320 = arith.mulf %319, %319 : vector<4x128xf32>
    %cst_109 = arith.constant dense<0.000000e+00> : vector<4xf32>
    %321 = vector.multi_reduction <add>, %320, %cst_109 [1] : vector<4x128xf32> to vector<4xf32>
    %322 = vector.shape_cast %321 : vector<4xf32> to vector<4x1xf32>
    %cst_110 = arith.constant 1.280000e+02 : f32
    %323 = vector.broadcast %cst_110 : f32 to vector<4x1xf32>
    %324 = arith.divf %322, %323 : vector<4x1xf32>
    %325 = vector.broadcast %317 : vector<4x1xf32> to vector<4x128xf32>
    %326 = arith.subf %313, %325 : vector<4x128xf32>
    %cst_111 = arith.constant 9.99999974E-6 : f32
    %327 = vector.broadcast %cst_111 : f32 to vector<4x1xf32>
    %328 = arith.addf %324, %327 : vector<4x1xf32>
    %329 = math.rsqrt %328 : vector<4x1xf32>
    %330 = vector.broadcast %329 : vector<4x1xf32> to vector<4x128xf32>
    %331 = arith.mulf %326, %330 : vector<4x128xf32>
    %332 = vector.broadcast %53 : vector<1x128xf32> to vector<4x128xf32>
    %333 = arith.mulf %331, %332 : vector<4x128xf32>
    %334 = vector.broadcast %54 : vector<1x128xf32> to vector<4x128xf32>
    %335 = arith.addf %333, %334 : vector<4x128xf32>
    %336 = arith.addf %312, %335 : vector<4x128xf32>
    %337 = vector.extract_strided_slice %336 {offsets = [0, 0], sizes = [4, 32], strides = [1, 1]} : vector<4x128xf32> to vector<4x32xf32>
    %338 = arith.negf %337 : vector<4x32xf32>
    %339 = math.exp %338 : vector<4x32xf32>
    %cst_112 = arith.constant 1.000000e+00 : f32
    %340 = vector.broadcast %cst_112 : f32 to vector<4x32xf32>
    %341 = arith.addf %340, %339 : vector<4x32xf32>
    %342 = arith.divf %340, %341 : vector<4x32xf32>
    %343 = vector.extract_strided_slice %336 {offsets = [0, 32], sizes = [4, 32], strides = [1, 1]} : vector<4x128xf32> to vector<4x32xf32>
    %344 = arith.negf %343 : vector<4x32xf32>
    %345 = math.exp %344 : vector<4x32xf32>
    %cst_113 = arith.constant 1.000000e+00 : f32
    %346 = vector.broadcast %cst_113 : f32 to vector<4x32xf32>
    %347 = arith.addf %346, %345 : vector<4x32xf32>
    %348 = arith.divf %346, %347 : vector<4x32xf32>
    %349 = vector.extract_strided_slice %336 {offsets = [0, 64], sizes = [4, 32], strides = [1, 1]} : vector<4x128xf32> to vector<4x32xf32>
    %350 = arith.negf %349 : vector<4x32xf32>
    %351 = math.exp %350 : vector<4x32xf32>
    %cst_114 = arith.constant 1.000000e+00 : f32
    %352 = vector.broadcast %cst_114 : f32 to vector<4x32xf32>
    %353 = arith.addf %352, %351 : vector<4x32xf32>
    %354 = arith.divf %352, %353 : vector<4x32xf32>
    %355 = vector.extract_strided_slice %336 {offsets = [0, 96], sizes = [4, 32], strides = [1, 1]} : vector<4x128xf32> to vector<4x32xf32>
    %356 = math.tanh %355 : vector<4x32xf32>
    %357 = arith.mulf %348, %308 : vector<4x32xf32>
    %358 = arith.mulf %342, %356 : vector<4x32xf32>
    %359 = arith.addf %357, %358 : vector<4x32xf32>
    %360 = math.tanh %359 : vector<4x32xf32>
    %361 = arith.mulf %354, %360 : vector<4x32xf32>
    %c20_115 = arith.constant 20 : index
    %c0_116 = arith.constant 0 : index
    %362 = vector.load %arg22[%c20_115, %c0_116] : memref<32x32xf32, #tpu.memory_space<vmem>>, vector<4x32xf32>
    tpu.vector_store %arg22[%c20_115, %c0_116], %361 {strides = array<i32>} : memref<32x32xf32, #tpu.memory_space<vmem>>, vector<4x32xf32>,
    %c24 = arith.constant 24 : index
    %c0_117 = arith.constant 0 : index
    %363 = vector.load %arg25[%c24, %c0_117] : memref<32x128xf32, #tpu.memory_space<vmem>>, vector<4x128xf32>
    %cst_118 = arith.constant dense<0.000000e+00> : vector<4x128xf32>
    %364 = tpu.matmul %361, %52, %cst_118 {dimension_numbers = #tpu.dot_dimension_numbers<[1], [0], [0], [1], [0, 0, 1, 1], [], []>} : vector<4x32xf32>, vector<32x128xf32>, vector<4x128xf32> -> vector<4x128xf32>
    %cst_119 = arith.constant dense<0.000000e+00> : vector<4xf32>
    %365 = vector.multi_reduction <add>, %364, %cst_119 [1] : vector<4x128xf32> to vector<4xf32>
    %366 = vector.shape_cast %365 : vector<4xf32> to vector<4x1xf32>
    %cst_120 = arith.constant 1.280000e+02 : f32
    %367 = vector.broadcast %cst_120 : f32 to vector<4x1xf32>
    %368 = arith.divf %366, %367 : vector<4x1xf32>
    %369 = vector.broadcast %368 : vector<4x1xf32> to vector<4x128xf32>
    %370 = arith.subf %364, %369 : vector<4x128xf32>
    %371 = arith.mulf %370, %370 : vector<4x128xf32>
    %cst_121 = arith.constant dense<0.000000e+00> : vector<4xf32>
    %372 = vector.multi_reduction <add>, %371, %cst_121 [1] : vector<4x128xf32> to vector<4xf32>
    %373 = vector.shape_cast %372 : vector<4xf32> to vector<4x1xf32>
    %cst_122 = arith.constant 1.280000e+02 : f32
    %374 = vector.broadcast %cst_122 : f32 to vector<4x1xf32>
    %375 = arith.divf %373, %374 : vector<4x1xf32>
    %376 = vector.broadcast %368 : vector<4x1xf32> to vector<4x128xf32>
    %377 = arith.subf %364, %376 : vector<4x128xf32>
    %cst_123 = arith.constant 9.99999974E-6 : f32
    %378 = vector.broadcast %cst_123 : f32 to vector<4x1xf32>
    %379 = arith.addf %375, %378 : vector<4x1xf32>
    %380 = math.rsqrt %379 : vector<4x1xf32>
    %381 = vector.broadcast %380 : vector<4x1xf32> to vector<4x128xf32>
    %382 = arith.mulf %377, %381 : vector<4x128xf32>
    %383 = vector.broadcast %53 : vector<1x128xf32> to vector<4x128xf32>
    %384 = arith.mulf %382, %383 : vector<4x128xf32>
    %385 = vector.broadcast %54 : vector<1x128xf32> to vector<4x128xf32>
    %386 = arith.addf %384, %385 : vector<4x128xf32>
    %387 = arith.addf %363, %386 : vector<4x128xf32>
    %388 = vector.extract_strided_slice %387 {offsets = [0, 0], sizes = [4, 32], strides = [1, 1]} : vector<4x128xf32> to vector<4x32xf32>
    %389 = arith.negf %388 : vector<4x32xf32>
    %390 = math.exp %389 : vector<4x32xf32>
    %cst_124 = arith.constant 1.000000e+00 : f32
    %391 = vector.broadcast %cst_124 : f32 to vector<4x32xf32>
    %392 = arith.addf %391, %390 : vector<4x32xf32>
    %393 = arith.divf %391, %392 : vector<4x32xf32>
    %394 = vector.extract_strided_slice %387 {offsets = [0, 32], sizes = [4, 32], strides = [1, 1]} : vector<4x128xf32> to vector<4x32xf32>
    %395 = arith.negf %394 : vector<4x32xf32>
    %396 = math.exp %395 : vector<4x32xf32>
    %cst_125 = arith.constant 1.000000e+00 : f32
    %397 = vector.broadcast %cst_125 : f32 to vector<4x32xf32>
    %398 = arith.addf %397, %396 : vector<4x32xf32>
    %399 = arith.divf %397, %398 : vector<4x32xf32>
    %400 = vector.extract_strided_slice %387 {offsets = [0, 64], sizes = [4, 32], strides = [1, 1]} : vector<4x128xf32> to vector<4x32xf32>
    %401 = arith.negf %400 : vector<4x32xf32>
    %402 = math.exp %401 : vector<4x32xf32>
    %cst_126 = arith.constant 1.000000e+00 : f32
    %403 = vector.broadcast %cst_126 : f32 to vector<4x32xf32>
    %404 = arith.addf %403, %402 : vector<4x32xf32>
    %405 = arith.divf %403, %404 : vector<4x32xf32>
    %406 = vector.extract_strided_slice %387 {offsets = [0, 96], sizes = [4, 32], strides = [1, 1]} : vector<4x128xf32> to vector<4x32xf32>
    %407 = math.tanh %406 : vector<4x32xf32>
    %408 = arith.mulf %399, %359 : vector<4x32xf32>
    %409 = arith.mulf %393, %407 : vector<4x32xf32>
    %410 = arith.addf %408, %409 : vector<4x32xf32>
    %411 = math.tanh %410 : vector<4x32xf32>
    %412 = arith.mulf %405, %411 : vector<4x32xf32>
    %c24_127 = arith.constant 24 : index
    %c0_128 = arith.constant 0 : index
    %413 = vector.load %arg22[%c24_127, %c0_128] : memref<32x32xf32, #tpu.memory_space<vmem>>, vector<4x32xf32>
    tpu.vector_store %arg22[%c24_127, %c0_128], %412 {strides = array<i32>} : memref<32x32xf32, #tpu.memory_space<vmem>>, vector<4x32xf32>,
    %c28 = arith.constant 28 : index
    %c0_129 = arith.constant 0 : index
    %414 = vector.load %arg25[%c28, %c0_129] : memref<32x128xf32, #tpu.memory_space<vmem>>, vector<4x128xf32>
    %cst_130 = arith.constant dense<0.000000e+00> : vector<4x128xf32>
    %415 = tpu.matmul %412, %52, %cst_130 {dimension_numbers = #tpu.dot_dimension_numbers<[1], [0], [0], [1], [0, 0, 1, 1], [], []>} : vector<4x32xf32>, vector<32x128xf32>, vector<4x128xf32> -> vector<4x128xf32>
    %cst_131 = arith.constant dense<0.000000e+00> : vector<4xf32>
    %416 = vector.multi_reduction <add>, %415, %cst_131 [1] : vector<4x128xf32> to vector<4xf32>
    %417 = vector.shape_cast %416 : vector<4xf32> to vector<4x1xf32>
    %cst_132 = arith.constant 1.280000e+02 : f32
    %418 = vector.broadcast %cst_132 : f32 to vector<4x1xf32>
    %419 = arith.divf %417, %418 : vector<4x1xf32>
    %420 = vector.broadcast %419 : vector<4x1xf32> to vector<4x128xf32>
    %421 = arith.subf %415, %420 : vector<4x128xf32>
    %422 = arith.mulf %421, %421 : vector<4x128xf32>
    %cst_133 = arith.constant dense<0.000000e+00> : vector<4xf32>
    %423 = vector.multi_reduction <add>, %422, %cst_133 [1] : vector<4x128xf32> to vector<4xf32>
    %424 = vector.shape_cast %423 : vector<4xf32> to vector<4x1xf32>
    %cst_134 = arith.constant 1.280000e+02 : f32
    %425 = vector.broadcast %cst_134 : f32 to vector<4x1xf32>
    %426 = arith.divf %424, %425 : vector<4x1xf32>
    %427 = vector.broadcast %419 : vector<4x1xf32> to vector<4x128xf32>
    %428 = arith.subf %415, %427 : vector<4x128xf32>
    %cst_135 = arith.constant 9.99999974E-6 : f32
    %429 = vector.broadcast %cst_135 : f32 to vector<4x1xf32>
    %430 = arith.addf %426, %429 : vector<4x1xf32>
    %431 = math.rsqrt %430 : vector<4x1xf32>
    %432 = vector.broadcast %431 : vector<4x1xf32> to vector<4x128xf32>
    %433 = arith.mulf %428, %432 : vector<4x128xf32>
    %434 = vector.broadcast %53 : vector<1x128xf32> to vector<4x128xf32>
    %435 = arith.mulf %433, %434 : vector<4x128xf32>
    %436 = vector.broadcast %54 : vector<1x128xf32> to vector<4x128xf32>
    %437 = arith.addf %435, %436 : vector<4x128xf32>
    %438 = arith.addf %414, %437 : vector<4x128xf32>
    %439 = vector.extract_strided_slice %438 {offsets = [0, 0], sizes = [4, 32], strides = [1, 1]} : vector<4x128xf32> to vector<4x32xf32>
    %440 = arith.negf %439 : vector<4x32xf32>
    %441 = math.exp %440 : vector<4x32xf32>
    %cst_136 = arith.constant 1.000000e+00 : f32
    %442 = vector.broadcast %cst_136 : f32 to vector<4x32xf32>
    %443 = arith.addf %442, %441 : vector<4x32xf32>
    %444 = arith.divf %442, %443 : vector<4x32xf32>
    %445 = vector.extract_strided_slice %438 {offsets = [0, 32], sizes = [4, 32], strides = [1, 1]} : vector<4x128xf32> to vector<4x32xf32>
    %446 = arith.negf %445 : vector<4x32xf32>
    %447 = math.exp %446 : vector<4x32xf32>
    %cst_137 = arith.constant 1.000000e+00 : f32
    %448 = vector.broadcast %cst_137 : f32 to vector<4x32xf32>
    %449 = arith.addf %448, %447 : vector<4x32xf32>
    %450 = arith.divf %448, %449 : vector<4x32xf32>
    %451 = vector.extract_strided_slice %438 {offsets = [0, 64], sizes = [4, 32], strides = [1, 1]} : vector<4x128xf32> to vector<4x32xf32>
    %452 = arith.negf %451 : vector<4x32xf32>
    %453 = math.exp %452 : vector<4x32xf32>
    %cst_138 = arith.constant 1.000000e+00 : f32
    %454 = vector.broadcast %cst_138 : f32 to vector<4x32xf32>
    %455 = arith.addf %454, %453 : vector<4x32xf32>
    %456 = arith.divf %454, %455 : vector<4x32xf32>
    %457 = vector.extract_strided_slice %438 {offsets = [0, 96], sizes = [4, 32], strides = [1, 1]} : vector<4x128xf32> to vector<4x32xf32>
    %458 = math.tanh %457 : vector<4x32xf32>
    %459 = arith.mulf %450, %410 : vector<4x32xf32>
    %460 = arith.mulf %444, %458 : vector<4x32xf32>
    %461 = arith.addf %459, %460 : vector<4x32xf32>
    %462 = math.tanh %461 : vector<4x32xf32>
    %463 = arith.mulf %456, %462 : vector<4x32xf32>
    %c28_139 = arith.constant 28 : index
    %c0_140 = arith.constant 0 : index
    %464 = vector.load %arg22[%c28_139, %c0_140] : memref<32x32xf32, #tpu.memory_space<vmem>>, vector<4x32xf32>
    tpu.vector_store %arg22[%c28_139, %c0_140], %463 {strides = array<i32>} : memref<32x32xf32, #tpu.memory_space<vmem>>, vector<4x32xf32>,
    %c0_141 = arith.constant 0 : index
    %c0_142 = arith.constant 0 : index
    %465 = vector.load %arg23[%c0_141, %c0_142] : memref<4x32xf32, #tpu.memory_space<vmem>>, vector<4x32xf32>
    tpu.vector_store %arg23[%c0_141, %c0_142], %463 {strides = array<i32>} : memref<4x32xf32, #tpu.memory_space<vmem>>, vector<4x32xf32>,
    %c0_143 = arith.constant 0 : index
    %c0_144 = arith.constant 0 : index
    %466 = vector.load %arg24[%c0_143, %c0_144] : memref<4x32xf32, #tpu.memory_space<vmem>>, vector<4x32xf32>
    tpu.vector_store %arg24[%c0_143, %c0_144], %461 {strides = array<i32>} : memref<4x32xf32, #tpu.memory_space<vmem>>, vector<4x32xf32>,
    %c0_145 = arith.constant 0 : index
    %c0_146 = arith.constant 0 : index
    %467 = vector.load %arg22[%c0_145, %c0_146] : memref<32x32xf32, #tpu.memory_space<vmem>>, vector<32x32xf32>
    %c0_147 = arith.constant 0 : index
    %c0_148 = arith.constant 0 : index
    %468 = vector.load %arg17[%c0_147, %c0_148] : memref<32x64xf32, #tpu.memory_space<vmem>>, vector<32x64xf32>
    %cst_149 = arith.constant dense<0.000000e+00> : vector<32x64xf32>
    %469 = tpu.matmul %467, %468, %cst_149 {dimension_numbers = #tpu.dot_dimension_numbers<[1], [0], [0], [1], [0, 0, 1, 1], [], []>} : vector<32x32xf32>, vector<32x64xf32>, vector<32x64xf32> -> vector<32x64xf32>
    %c0_150 = arith.constant 0 : index
    %c0_151 = arith.constant 0 : index
    %470 = vector.load %arg18[%c0_150, %c0_151] : memref<1x64xf32, #tpu.memory_space<vmem>>, vector<1x64xf32>
    %471 = vector.broadcast %470 : vector<1x64xf32> to vector<32x64xf32>
    %472 = arith.addf %469, %471 : vector<32x64xf32>
    %cst_152 = arith.constant 0.000000e+00 : f32
    %473 = vector.broadcast %cst_152 : f32 to vector<32x64xf32>
    %474 = arith.maximumf %472, %473 : vector<32x64xf32>
    %c0_153 = arith.constant 0 : index
    %c0_154 = arith.constant 0 : index
    %475 = vector.load %arg19[%c0_153, %c0_154] : memref<64x7xf32, #tpu.memory_space<vmem>>, vector<64x7xf32>
    %cst_155 = arith.constant dense<0.000000e+00> : vector<32x7xf32>
    %476 = tpu.matmul %474, %475, %cst_155 {dimension_numbers = #tpu.dot_dimension_numbers<[1], [0], [0], [1], [0, 0, 1, 1], [], []>} : vector<32x64xf32>, vector<64x7xf32>, vector<32x7xf32> -> vector<32x7xf32>
    %c0_156 = arith.constant 0 : index
    %c0_157 = arith.constant 0 : index
    %477 = vector.load %arg20[%c0_156, %c0_157] : memref<1x7xf32, #tpu.memory_space<vmem>>, vector<1x7xf32>
    %478 = vector.broadcast %477 : vector<1x7xf32> to vector<32x7xf32>
    %479 = arith.addf %476, %478 : vector<32x7xf32>
    %480 = vector.extract_strided_slice %479 {offsets = [0, 0], sizes = [32, 6], strides = [1, 1]} : vector<32x7xf32> to vector<32x6xf32>
    %481 = vector.extract_strided_slice %479 {offsets = [0, 6], sizes = [32, 1], strides = [1, 1]} : vector<32x7xf32> to vector<32x1xf32>
    %cst_158 = arith.constant dense<0.000000e+00> : vector<32xf32>
    %482 = vector.multi_reduction <add>, %480, %cst_158 [1] : vector<32x6xf32> to vector<32xf32>
    %483 = vector.shape_cast %482 : vector<32xf32> to vector<32x1xf32>
    %cst_159 = arith.constant 6.000000e+00 : f32
    %484 = vector.broadcast %cst_159 : f32 to vector<32x1xf32>
    %485 = arith.divf %483, %484 : vector<32x1xf32>
    %486 = vector.broadcast %485 : vector<32x1xf32> to vector<32x6xf32>
    %487 = arith.subf %480, %486 : vector<32x6xf32>
    %488 = vector.broadcast %481 : vector<32x1xf32> to vector<32x6xf32>
    %489 = arith.addf %487, %488 : vector<32x6xf32>
    %c0_160 = arith.constant 0 : index
    %c0_161 = arith.constant 0 : index
    %490 = vector.load %arg21[%c0_160, %c0_161] : memref<32x6xf32, #tpu.memory_space<vmem>>, vector<32x6xf32>
    tpu.vector_store %arg21[%c0_160, %c0_161], %489 {strides = array<i32>} : memref<32x6xf32, #tpu.memory_space<vmem>>, vector<32x6xf32>,
    return
  }
  func.func @transform_0(%arg0: i32) -> (i32, i32) {
    %c0_i32 = arith.constant 0 : i32
    %c0_i32_0 = arith.constant 0 : i32
    %c0_i32_1 = arith.constant 0 : i32
    return %c0_i32, %c0_i32_0 : i32, i32
  }
  func.func @transform_1(%arg0: i32) -> (i32, i32) {
    %c0_i32 = arith.constant 0 : i32
    %c0_i32_0 = arith.constant 0 : i32
    %c0_i32_1 = arith.constant 0 : i32
    return %c0_i32, %c0_i32_0 : i32, i32
  }
  func.func @transform_2(%arg0: i32) -> (i32, i32) {
    %c0_i32 = arith.constant 0 : i32
    %c0_i32_0 = arith.constant 0 : i32
    %c0_i32_1 = arith.constant 0 : i32
    return %c0_i32, %c0_i32_0 : i32, i32
  }
  func.func @transform_3(%arg0: i32) -> (i32, i32) {
    %c0_i32 = arith.constant 0 : i32
    %c0_i32_0 = arith.constant 0 : i32
    %c0_i32_1 = arith.constant 0 : i32
    return %c0_i32, %c0_i32_0 : i32, i32
  }
  func.func @transform_4(%arg0: i32) -> (i32, i32) {
    %c0_i32 = arith.constant 0 : i32
    %c0_i32_0 = arith.constant 0 : i32
    %c0_i32_1 = arith.constant 0 : i32
    return %c0_i32, %c0_i32_0 : i32, i32
  }
  func.func @transform_5(%arg0: i32) -> (i32, i32) {
    %c0_i32 = arith.constant 0 : i32
    %c0_i32_0 = arith.constant 0 : i32
    %c0_i32_1 = arith.constant 0 : i32
    return %c0_i32, %c0_i32_0 : i32, i32
  }
  func.func @transform_6(%arg0: i32) -> (i32, i32) {
    %c0_i32 = arith.constant 0 : i32
    %c0_i32_0 = arith.constant 0 : i32
    %c0_i32_1 = arith.constant 0 : i32
    return %c0_i32, %c0_i32_0 : i32, i32
  }
  func.func @transform_7(%arg0: i32) -> (i32, i32) {
    %c0_i32 = arith.constant 0 : i32
    %c0_i32_0 = arith.constant 0 : i32
    %c0_i32_1 = arith.constant 0 : i32
    return %c0_i32, %c0_i32_0 : i32, i32
  }
  func.func @transform_8(%arg0: i32) -> (i32, i32) {
    %c0_i32 = arith.constant 0 : i32
    %c0_i32_0 = arith.constant 0 : i32
    %c0_i32_1 = arith.constant 0 : i32
    return %c0_i32, %c0_i32_0 : i32, i32
  }
  func.func @transform_9(%arg0: i32) -> (i32, i32) {
    %c0_i32 = arith.constant 0 : i32
    %c0_i32_0 = arith.constant 0 : i32
    %c0_i32_1 = arith.constant 0 : i32
    return %c0_i32, %c0_i32_0 : i32, i32
  }
  func.func @transform_10(%arg0: i32) -> (i32, i32) {
    %c0_i32 = arith.constant 0 : i32
    %c0_i32_0 = arith.constant 0 : i32
    %c0_i32_1 = arith.constant 0 : i32
    return %c0_i32, %c0_i32_0 : i32, i32
  }
  func.func @transform_11(%arg0: i32) -> (i32, i32) {
    %c0_i32 = arith.constant 0 : i32
    %c0_i32_0 = arith.constant 0 : i32
    %c0_i32_1 = arith.constant 0 : i32
    return %c0_i32, %c0_i32_0 : i32, i32
  }
  func.func @transform_12(%arg0: i32) -> (i32, i32) {
    %c0_i32 = arith.constant 0 : i32
    %c0_i32_0 = arith.constant 0 : i32
    %c0_i32_1 = arith.constant 0 : i32
    return %c0_i32, %c0_i32_0 : i32, i32
  }
  func.func @transform_13(%arg0: i32) -> (i32, i32) {
    %c0_i32 = arith.constant 0 : i32
    %c0_i32_0 = arith.constant 0 : i32
    %c0_i32_1 = arith.constant 0 : i32
    return %c0_i32, %c0_i32_0 : i32, i32
  }
  func.func @transform_14(%arg0: i32) -> (i32, i32) {
    %c0_i32 = arith.constant 0 : i32
    %c0_i32_0 = arith.constant 0 : i32
    %c0_i32_1 = arith.constant 0 : i32
    return %c0_i32, %c0_i32_0 : i32, i32
  }
  func.func @transform_15(%arg0: i32) -> (i32, i32) {
    %c0_i32 = arith.constant 0 : i32
    %c0_i32_0 = arith.constant 0 : i32
    %c0_i32_1 = arith.constant 0 : i32
    return %c0_i32, %c0_i32_0 : i32, i32
  }
  func.func @transform_16(%arg0: i32) -> (i32, i32) {
    %c0_i32 = arith.constant 0 : i32
    %c0_i32_0 = arith.constant 0 : i32
    %c0_i32_1 = arith.constant 0 : i32
    return %c0_i32, %c0_i32_0 : i32, i32
  }
  func.func @transform_17(%arg0: i32) -> (i32, i32) {
    %c0_i32 = arith.constant 0 : i32
    %c0_i32_0 = arith.constant 0 : i32
    %c0_i32_1 = arith.constant 0 : i32
    return %c0_i32, %c0_i32_0 : i32, i32
  }
  func.func @transform_18(%arg0: i32) -> (i32, i32) {
    %c0_i32 = arith.constant 0 : i32
    %c0_i32_0 = arith.constant 0 : i32
    %c0_i32_1 = arith.constant 0 : i32
    return %c0_i32, %c0_i32_0 : i32, i32
  }
  func.func @transform_19(%arg0: i32) -> (i32, i32) {
    %c0_i32 = arith.constant 0 : i32
    %c0_i32_0 = arith.constant 0 : i32
    %c0_i32_1 = arith.constant 0 : i32
    return %c0_i32, %c0_i32_0 : i32, i32
  }
  func.func @transform_20(%arg0: i32) -> (i32, i32) {
    %c0_i32 = arith.constant 0 : i32
    %c0_i32_0 = arith.constant 0 : i32
    %c0_i32_1 = arith.constant 0 : i32
    return %c0_i32, %c0_i32_0 : i32, i32
  }
  func.func @transform_21(%arg0: i32) -> (i32, i32) {
    %c0_i32 = arith.constant 0 : i32
    %c0_i32_0 = arith.constant 0 : i32
    %c0_i32_1 = arith.constant 0 : i32
    return %c0_i32, %c0_i32_0 : i32, i32
  }
  func.func @transform_22(%arg0: i32) -> (i32, i32) {
    %c0_i32 = arith.constant 0 : i32
    %c0_i32_0 = arith.constant 0 : i32
    %c0_i32_1 = arith.constant 0 : i32
    return %c0_i32, %c0_i32_0 : i32, i32
  }
  func.func @transform_23(%arg0: i32) -> (i32, i32) {
    %c0_i32 = arith.constant 0 : i32
    %c0_i32_0 = arith.constant 0 : i32
    %c0_i32_1 = arith.constant 0 : i32
    return %c0_i32, %c0_i32_0 : i32, i32
  }
}

</mosaic_0001>

<llo_original>
// kernel: tpu_custom_call.1
$region0: #{tpu_custom_call.1}
  #allocation0 [shape = 'u32[]', space=smem, size = 0x4, offset = 0x4, fixed_abs, tag = 'smem constant byte address 0x4 - core index']
  #allocation1 [shape = 'u32[144,128]{1,0:T(1,128)}', space=vmem, size = 0x12000, scoped, tag = 'internal scratch']
  #allocation2 [shape = 'f32[32,128]{1,0:T(8,128)}', space=vmem, size = 0x4000, scoped, tag = 'scratch operand']
  %s0 = inlined_call_operand.vmem [shape: f32[32,16], index: 0, kind: input, shape index: {}]
  %s1 = inlined_call_operand.hbm [shape: f32[4,32], index: 1, kind: input, shape index: {}]
  %s2 = inlined_call_operand.hbm [shape: f32[4,32], index: 2, kind: input, shape index: {}]
  %s3 = inlined_call_operand.hbm [shape: f32[16,32], index: 3, kind: input, shape index: {}]
  %s4 = inlined_call_operand.vmem [shape: f32[1,32], index: 4, kind: input, shape index: {}]
  %s5 = inlined_call_operand.vmem [shape: f32[32,32], index: 5, kind: input, shape index: {}]
  %s6 = inlined_call_operand.hbm [shape: f32[1,32], index: 6, kind: input, shape index: {}]
  %s7 = inlined_call_operand.vmem [shape: f32[32,32], index: 7, kind: input, shape index: {}]
  %s8 = inlined_call_operand.hbm [shape: f32[1,32], index: 8, kind: input, shape index: {}]
  %s9 = inlined_call_operand.vmem [shape: f32[32,128], index: 9, kind: input, shape index: {}]
  %s10 = inlined_call_operand.vmem [shape: f32[32,128], index: 10, kind: input, shape index: {}]
  %s11 = inlined_call_operand.hbm [shape: f32[1,128], index: 11, kind: input, shape index: {}]
  %s12 = inlined_call_operand.hbm [shape: f32[1,128], index: 12, kind: input, shape index: {}]
  %s13 = inlined_call_operand.hbm [shape: f32[1,128], index: 13, kind: input, shape index: {}]
  %s14 = inlined_call_operand.vmem [shape: f32[1,128], index: 14, kind: input, shape index: {}]
  %s15 = inlined_call_operand.vmem [shape: f32[1,128], index: 15, kind: input, shape index: {}]
  %s16 = inlined_call_operand.vmem [shape: f32[32,64], index: 16, kind: input, shape index: {}]
  %s17 = inlined_call_operand.vmem [shape: f32[1,64], index: 17, kind: input, shape index: {}]
  %s18 = inlined_call_operand.vmem [shape: f32[64,7], index: 18, kind: input, shape index: {}]
  %s19 = inlined_call_operand.vmem [shape: f32[1,7], index: 19, kind: input, shape index: {}]
  %s20 = inlined_call_operand.vmem [shape: f32[32,6], index: 20, kind: output, shape index: {0}]
  %s21 = inlined_call_operand.hbm [shape: f32[32,32], index: 21, kind: output, shape index: {1}]
  %s22 = inlined_call_operand.hbm [shape: f32[4,32], index: 22, kind: output, shape index: {2}]
  %s23 = inlined_call_operand.hbm [shape: f32[4,32], index: 23, kind: output, shape index: {3}]
  %24 = xla_tuple %s20, %s21, %s22, %s23
  %s25 = sld [smem:[#allocation0]]
  $region146: #{tpu_custom_call.1} parent=0
    _
  %s27 = ssub.s32 1, %s25
  %s28 = scalar_select 0, %s27, %s25
  $region1: #{tpu_custom_call.1} parent=0
    #allocation3 [shape = 'u8[2048]{0}', space=vmem, size = 0x800, scoped, tag = 'input window, operand 1, single buffered']
    #allocation4 [shape = 's32[1]{0}', space=sflag, size = 0x4, scoped, tag = 'scoped memory for tpu_custom_call.1']
    #allocation5 [shape = 's32[1]{0}', space=sflag, size = 0x4, scoped, tag = 'scoped memory for tpu_custom_call.1']
    #allocation6 [shape = 'u8[2048]{0}', space=vmem, size = 0x800, scoped, tag = 'input window, operand 2, single buffered']
    #allocation7 [shape = 's32[1]{0}', space=sflag, size = 0x4, scoped, tag = 'scoped memory for tpu_custom_call.1']
    #allocation8 [shape = 'u8[8192]{0}', space=vmem, size = 0x2000, scoped, tag = 'input window, operand 3, single buffered']
    #allocation9 [shape = 'u8[512]{0}', space=vmem, size = 0x400, scoped, tag = 'input window, operand 6, single buffered']
    #allocation10 [shape = 's32[1]{0}', space=sflag, size = 0x4, scoped, tag = 'scoped memory for tpu_custom_call.1']
    #allocation11 [shape = 'u8[512]{0}', space=vmem, size = 0x400, scoped, tag = 'input window, operand 8, single buffered']
    #allocation12 [shape = 'u8[512]{0}', space=vmem, size = 0x400, scoped, tag = 'input window, operand 11, single buffered']
    #allocation13 [shape = 's32[1]{0}', space=sflag, size = 0x4, scoped, tag = 'scoped memory for tpu_custom_call.1']
    #allocation14 [shape = 'u8[512]{0}', space=vmem, size = 0x400, scoped, tag = 'input window, operand 12, single buffered']
    #allocation15 [shape = 'u8[512]{0}', space=vmem, size = 0x400, scoped, tag = 'input window, operand 13, single buffered']
    #allocation16 [shape = 's32[1]{0}', space=sflag, size = 0x4, scoped, tag = 'scoped memory for tpu_custom_call.1']
    #allocation17 [shape = 'u8[16384]{0}', space=vmem, size = 0x4000, scoped, tag = 'output window, operand 1, single buffered']
    #allocation18 [shape = 'u8[2048]{0}', space=vmem, size = 0x800, scoped, tag = 'output window, operand 2, single buffered']
    #allocation19 [shape = 's32[1]{0}', space=sflag, size = 0x4, scoped, tag = 'scoped memory for tpu_custom_call.1']
    #allocation20 [shape = 'u8[2048]{0}', space=vmem, size = 0x800, scoped, tag = 'output window, operand 3, single buffered']
    %29 = vsyncpa [#allocation4], 0
    %30 = vsyncpa [#allocation7], 0
    %31 = vsyncpa [#allocation10], 0
    %32 = vsyncpa [#allocation13], 0
    %33 = vsyncpa [#allocation16], 0
    %34 = vsyncpa [#allocation5], 0
    %35 = vsyncpa [#allocation19], 0
    // Predicated region
    $region2: #{tpu_custom_call.1} parent=1 // pred_check
      _
    $region3: #{tpu_custom_call.1} parent=1 // pred_check_branch
      %37 = sbr.rel (0) target = $region5
    $region4: #{tpu_custom_call.1} parent=1 // pred_region
      _
    $region5: #{tpu_custom_call.1} parent=1 // pred_fallthru
      _
    // Predicated region
    $region6: #{tpu_custom_call.1} parent=1 // pred_check
      _
    $region7: #{tpu_custom_call.1} parent=1 // pred_check_branch
      %39 = sbr.rel (0) target = $region9
    $region8: #{tpu_custom_call.1} parent=1 // pred_region
      %s41 = ssub.s32 64, 64
      %42 = vsyncadd [#allocation4], %s41
      %s44 = sshll.u32 [#allocation3], 4
      %s45 = int_to_ptr.vmem [resolvable:$true] %s44
      %47 = dma.hbm_to_vmem [thread:$0]  %s1, 64, %s45, [#allocation4]
    $region9: #{tpu_custom_call.1} parent=1 // pred_fallthru
      _
    // Predicated region
    $region10: #{tpu_custom_call.1} parent=1 // pred_check
      _
    $region11: #{tpu_custom_call.1} parent=1 // pred_check_branch
      %49 = sbr.rel (0) target = $region13
    $region12: #{tpu_custom_call.1} parent=1 // pred_region
      %s51 = ssub.s32 64, 64
      %52 = vsyncadd [#allocation7], %s51
      %s54 = sshll.u32 [#allocation6], 4
      %s55 = int_to_ptr.vmem [resolvable:$true] %s54
      %57 = dma.hbm_to_vmem [thread:$0]  %s2, 64, %s55, [#allocation7]
    $region13: #{tpu_custom_call.1} parent=1 // pred_fallthru
      _
    // Predicated region
    $region14: #{tpu_custom_call.1} parent=1 // pred_check
      _
    $region15: #{tpu_custom_call.1} parent=1 // pred_check_branch
      %59 = sbr.rel (0) target = $region17
    $region16: #{tpu_custom_call.1} parent=1 // pred_region
      %s61 = ssub.s32 256, 256
      %62 = vsyncadd [#allocation7], %s61
      %s63 = sshll.u32 [#allocation8], 4
      %s64 = int_to_ptr.vmem [resolvable:$true] %s63
      %69 = dma.hbm_to_vmem [thread:$0]  %s3, 256, %s64, [#allocation7], 128, 128, 8
    $region17: #{tpu_custom_call.1} parent=1 // pred_fallthru
      _
    // Predicated region
    $region18: #{tpu_custom_call.1} parent=1 // pred_check
      _
    $region19: #{tpu_custom_call.1} parent=1 // pred_check_branch
      %71 = sbr.rel (0) target = $region21
    $region20: #{tpu_custom_call.1} parent=1 // pred_region
      _
    $region21: #{tpu_custom_call.1} parent=1 // pred_fallthru
      _
    // Predicated region
    $region22: #{tpu_custom_call.1} parent=1 // pred_check
      _
    $region23: #{tpu_custom_call.1} parent=1 // pred_check_branch
      %73 = sbr.rel (0) target = $region25
    $region24: #{tpu_custom_call.1} parent=1 // pred_region
      _
    $region25: #{tpu_custom_call.1} parent=1 // pred_fallthru
      _
    // Predicated region
    $region26: #{tpu_custom_call.1} parent=1 // pred_check
      _
    $region27: #{tpu_custom_call.1} parent=1 // pred_check_branch
      %75 = sbr.rel (0) target = $region29
    $region28: #{tpu_custom_call.1} parent=1 // pred_region
      %s77 = ssub.s32 16, 16
      %78 = vsyncadd [#allocation10], %s77
      %s80 = sshll.u32 [#allocation9], 4
      %s81 = int_to_ptr.vmem [resolvable:$true] %s80
      %83 = dma.hbm_to_vmem [thread:$0]  %s6, 16, %s81, [#allocation10]
    $region29: #{tpu_custom_call.1} parent=1 // pred_fallthru
      _
    // Predicated region
    $region30: #{tpu_custom_call.1} parent=1 // pred_check
      _
    $region31: #{tpu_custom_call.1} parent=1 // pred_check_branch
      %85 = sbr.rel (0) target = $region33
    $region32: #{tpu_custom_call.1} parent=1 // pred_region
      _
    $region33: #{tpu_custom_call.1} parent=1 // pred_fallthru
      _
    // Predicated region
    $region34: #{tpu_custom_call.1} parent=1 // pred_check
      _
    $region35: #{tpu_custom_call.1} parent=1 // pred_check_branch
      %87 = sbr.rel (0) target = $region37
    $region36: #{tpu_custom_call.1} parent=1 // pred_region
      %s89 = ssub.s32 16, 16
      %90 = vsyncadd [#allocation10], %s89
      %s92 = sshll.u32 [#allocation11], 4
      %s93 = int_to_ptr.vmem [resolvable:$true] %s92
      %95 = dma.hbm_to_vmem [thread:$0]  %s8, 16, %s93, [#allocation10]
    $region37: #{tpu_custom_call.1} parent=1 // pred_fallthru
      _
    // Predicated region
    $region38: #{tpu_custom_call.1} parent=1 // pred_check
      _
    $region39: #{tpu_custom_call.1} parent=1 // pred_check_branch
      %97 = sbr.rel (0) target = $region41
    $region40: #{tpu_custom_call.1} parent=1 // pred_region
      _
    $region41: #{tpu_custom_call.1} parent=1 // pred_fallthru
      _
    // Predicated region
    $region42: #{tpu_custom_call.1} parent=1 // pred_check
      _
    $region43: #{tpu_custom_call.1} parent=1 // pred_check_branch
      %99 = sbr.rel (0) target = $region45
    $region44: #{tpu_custom_call.1} parent=1 // pred_region
      _
    $region45: #{tpu_custom_call.1} parent=1 // pred_fallthru
      _
    // Predicated region
    $region46: #{tpu_custom_call.1} parent=1 // pred_check
      _
    $region47: #{tpu_custom_call.1} parent=1 // pred_check_branch
      %101 = sbr.rel (0) target = $region49
    $region48: #{tpu_custom_call.1} parent=1 // pred_region
      %s103 = ssub.s32 16, 16
      %104 = vsyncadd [#allocation13], %s103
      %s106 = sshll.u32 [#allocation12], 4
      %s107 = int_to_ptr.vmem [resolvable:$true] %s106
      %109 = dma.hbm_to_vmem [thread:$0]  %s11, 16, %s107, [#allocation13]
    $region49: #{tpu_custom_call.1} parent=1 // pred_fallthru
      _
    // Predicated region
    $region50: #{tpu_custom_call.1} parent=1 // pred_check
      _
    $region51: #{tpu_custom_call.1} parent=1 // pred_check_branch
      %111 = sbr.rel (0) target = $region53
    $region52: #{tpu_custom_call.1} parent=1 // pred_region
      %s113 = ssub.s32 16, 16
      %114 = vsyncadd [#allocation13], %s113
      %s116 = sshll.u32 [#allocation14], 4
      %s117 = int_to_ptr.vmem [resolvable:$true] %s116
      %119 = dma.hbm_to_vmem [thread:$0]  %s12, 16, %s117, [#allocation13]
    $region53: #{tpu_custom_call.1} parent=1 // pred_fallthru
      _
    // Predicated region
    $region54: #{tpu_custom_call.1} parent=1 // pred_check
      _
    $region55: #{tpu_custom_call.1} parent=1 // pred_check_branch
      %121 = sbr.rel (0) target = $region57
    $region56: #{tpu_custom_call.1} parent=1 // pred_region
      %s123 = ssub.s32 16, 16
      %124 = vsyncadd [#allocation16], %s123
      %s126 = sshll.u32 [#allocation15], 4
      %s127 = int_to_ptr.vmem [resolvable:$true] %s126
      %129 = dma.hbm_to_vmem [thread:$0]  %s13, 16, %s127, [#allocation16]
    $region57: #{tpu_custom_call.1} parent=1 // pred_fallthru
      _
    // Predicated region
    $region58: #{tpu_custom_call.1} parent=1 // pred_check
      _
    $region59: #{tpu_custom_call.1} parent=1 // pred_check_branch
      %131 = sbr.rel (0) target = $region61
    $region60: #{tpu_custom_call.1} parent=1 // pred_region
      _
    $region61: #{tpu_custom_call.1} parent=1 // pred_fallthru
      _
    // Predicated region
    $region62: #{tpu_custom_call.1} parent=1 // pred_check
      _
    $region63: #{tpu_custom_call.1} parent=1 // pred_check_branch
      %133 = sbr.rel (0) target = $region65
    $region64: #{tpu_custom_call.1} parent=1 // pred_region
      _
    $region65: #{tpu_custom_call.1} parent=1 // pred_fallthru
      _
    // Predicated region
    $region66: #{tpu_custom_call.1} parent=1 // pred_check
      _
    $region67: #{tpu_custom_call.1} parent=1 // pred_check_branch
      %135 = sbr.rel (0) target = $region69
    $region68: #{tpu_custom_call.1} parent=1 // pred_region
      _
    $region69: #{tpu_custom_call.1} parent=1 // pred_fallthru
      _
    // Predicated region
    $region70: #{tpu_custom_call.1} parent=1 // pred_check
      _
    $region71: #{tpu_custom_call.1} parent=1 // pred_check_branch
      %137 = sbr.rel (0) target = $region73
    $region72: #{tpu_custom_call.1} parent=1 // pred_region
      _
    $region73: #{tpu_custom_call.1} parent=1 // pred_fallthru
      _
    // Predicated region
    $region74: #{tpu_custom_call.1} parent=1 // pred_check
      _
    $region75: #{tpu_custom_call.1} parent=1 // pred_check_branch
      %139 = sbr.rel (0) target = $region77
    $region76: #{tpu_custom_call.1} parent=1 // pred_region
      _
    $region77: #{tpu_custom_call.1} parent=1 // pred_fallthru
      _
    // Predicated region
    $region78: #{tpu_custom_call.1} parent=1 // pred_check
      _
    $region79: #{tpu_custom_call.1} parent=1 // pred_check_branch
      %141 = sbr.rel (0) target = $region81
    $region80: #{tpu_custom_call.1} parent=1 // pred_region
      _
    $region81: #{tpu_custom_call.1} parent=1 // pred_fallthru
      _
    // Predicated region
    $region82: #{tpu_custom_call.1} parent=1 // pred_check
      _
    $region83: #{tpu_custom_call.1} parent=1 // pred_check_branch
      %143 = sbr.rel (0) target = $region85
    $region84: #{tpu_custom_call.1} parent=1 // pred_region
      %144 = dma.done [#allocation4], 64
    $region85: #{tpu_custom_call.1} parent=1 // pred_fallthru
      _
    // Predicated region
    $region86: #{tpu_custom_call.1} parent=1 // pred_check
      _
    $region87: #{tpu_custom_call.1} parent=1 // pred_check_branch
      %146 = sbr.rel (0) target = $region89
    $region88: #{tpu_custom_call.1} parent=1 // pred_region
      %147 = dma.done [#allocation7], 64
    $region89: #{tpu_custom_call.1} parent=1 // pred_fallthru
      _
    // Predicated region
    $region90: #{tpu_custom_call.1} parent=1 // pred_check
      _
    $region91: #{tpu_custom_call.1} parent=1 // pred_check_branch
      %149 = sbr.rel (0) target = $region93
    $region92: #{tpu_custom_call.1} parent=1 // pred_region
      %150 = dma.done [#allocation7], 256
    $region93: #{tpu_custom_call.1} parent=1 // pred_fallthru
      _
    // Predicated region
    $region94: #{tpu_custom_call.1} parent=1 // pred_check
      _
    $region95: #{tpu_custom_call.1} parent=1 // pred_check_branch
      %152 = sbr.rel (0) target = $region97
    $region96: #{tpu_custom_call.1} parent=1 // pred_region
      %153 = dma.done [#allocation10], 16
    $region97: #{tpu_custom_call.1} parent=1 // pred_fallthru
      _
    // Predicated region
    $region98: #{tpu_custom_call.1} parent=1 // pred_check
      _
    $region99: #{tpu_custom_call.1} parent=1 // pred_check_branch
      %155 = sbr.rel (0) target = $region101
    $region100: #{tpu_custom_call.1} parent=1 // pred_region
      %156 = dma.done [#allocation10], 16
    $region101: #{tpu_custom_call.1} parent=1 // pred_fallthru
      _
    // Predicated region
    $region102: #{tpu_custom_call.1} parent=1 // pred_check
      _
    $region103: #{tpu_custom_call.1} parent=1 // pred_check_branch
      %158 = sbr.rel (0) target = $region105
    $region104: #{tpu_custom_call.1} parent=1 // pred_region
      %159 = dma.done [#allocation13], 16
    $region105: #{tpu_custom_call.1} parent=1 // pred_fallthru
      _
    // Predicated region
    $region106: #{tpu_custom_call.1} parent=1 // pred_check
      _
    $region107: #{tpu_custom_call.1} parent=1 // pred_check_branch
      %161 = sbr.rel (0) target = $region109
    $region108: #{tpu_custom_call.1} parent=1 // pred_region
      %162 = dma.done [#allocation13], 16
    $region109: #{tpu_custom_call.1} parent=1 // pred_fallthru
      _
    // Predicated region
    $region110: #{tpu_custom_call.1} parent=1 // pred_check
      _
    $region111: #{tpu_custom_call.1} parent=1 // pred_check_branch
      %164 = sbr.rel (0) target = $region113
    $region112: #{tpu_custom_call.1} parent=1 // pred_region
      %165 = dma.done [#allocation16], 16
    $region113: #{tpu_custom_call.1} parent=1 // pred_fallthru
      _
    %v166 = vld [vmem:[%s0] sm:$0xff]
    %v167 = vld [vmem:[%s0 + $0x8] sm:$0xff]
    %v168 = vld [vmem:[%s0 + $0x10] sm:$0xff]
    %v169 = vld [vmem:[%s0 + $0x18] sm:$0xff]
    %v170 = vld [vmem:[#allocation8] sm:$0xff]
    %v171 = vld [vmem:[#allocation8 + $0x8] sm:$0xff]
    %v172 = vld [vmem:[%s4] sm:$0x1]
    %v174 = vlaneseq
    %v175 = vshrl.u32 %v174, 7
    %v176 = vsub.s32 0, %v175
    %v177 = vrot.slane %v172, %v176
    %vm179 = vcmask 130048
    %v181 = vsel %vm179, %v166, 0
    %v184 = vsel %vm179, %v167, 0
    %v187 = vsel %vm179, %v168, 0
    %v190 = vsel %vm179, %v169, 0
    %192 = vmatprep.subr.mxu0 0.0
    %193 = vmatpush1.msra.mxu0 %v170
    %194 = vmatprep.subr.mxu0 0.0
    %195 = vmatpush1.msra.mxu0 %v171
    %196 = vmatprep.subr.mxu0 0.0
    %197 = vmatpush1.msra.mxu0 0.0
    %198 = vmatprep.subr.mxu0 0.0
    %199 = vmatpush1.msra.mxu0 0.0
    %200 = vmatprep.subr.mxu0 0.0
    %201 = vmatpush1.msra.mxu0 0.0
    %202 = vmatprep.subr.mxu0 0.0
    %203 = vmatpush1.msra.mxu0 0.0
    %204 = vmatprep.subr.mxu0 0.0
    %205 = vmatpush1.msra.mxu0 0.0
    %206 = vmatprep.subr.mxu0 0.0
    %207 = vmatpush1.msra.mxu0 0.0
    %208 = vmatprep.subr.mxu0 0.0
    %209 = vmatpush1.msra.mxu0 0.0
    %210 = vmatprep.subr.mxu0 0.0
    %211 = vmatpush1.msra.mxu0 0.0
    %212 = vmatprep.subr.mxu0 0.0
    %213 = vmatpush1.msra.mxu0 0.0
    %214 = vmatprep.subr.mxu0 0.0
    %215 = vmatpush1.msra.mxu0 0.0
    %216 = vmatprep.subr.mxu0 0.0
    %217 = vmatpush1.msra.mxu0 0.0
    %218 = vmatprep.subr.mxu0 0.0
    %219 = vmatpush1.msra.mxu0 0.0
    %220 = vmatprep.subr.mxu0 0.0
    %221 = vmatpush1.msra.mxu0 0.0
    %222 = vmatprep.subr.mxu0 0.0
    %223 = vmatpush1.msra.mxu0 0.0
    %224 = vmatprep.subr.mxu0 0.0
    %225 = vmatpush1.msra.mxu0 0.0
    %226 = vmatprep.subr.mxu0 0.0
    %227 = vmatpush1.msra.mxu0 0.0
    %228 = vmatprep.subr.mxu0 0.0
    %229 = vmatpush1.msra.mxu0 0.0
    %230 = vmatprep.subr.mxu0 0.0
    %231 = vmatpush1.msra.mxu0 0.0
    %232 = vmatprep.subr.mxu0 0.0
    %233 = vmatpush1.msra.mxu0 0.0
    %234 = vmatprep.subr.mxu0 0.0
    %235 = vmatpush1.msra.mxu0 0.0
    %236 = vmatprep.subr.mxu0 0.0
    %237 = vmatpush1.msra.mxu0 0.0
    %238 = vmatprep.subr.mxu0 0.0
    %239 = vmatpush1.msra.mxu0 0.0
    %240 = vmatprep.subr.mxu0 0.0
    %241 = vmatpush1.msra.mxu0 0.0
    %242 = vmatprep.subr.mxu0 0.0
    %243 = vmatpush1.msra.mxu0 0.0
    %244 = vmatprep.subr.mxu0 0.0
    %245 = vmatpush1.msra.mxu0 0.0
    %246 = vmatprep.subr.mxu0 0.0
    %247 = vmatpush1.msra.mxu0 0.0
    %248 = vmatprep.subr.mxu0 0.0
    %249 = vmatpush1.msra.mxu0 0.0
    %250 = vmatprep.subr.mxu0 0.0
    %251 = vmatpush1.msra.mxu0 0.0
    %252 = vmatprep.subr.mxu0 0.0
    %253 = vmatpush1.msra.mxu0 0.0
    %254 = vmatprep.subr.mxu0 0.0
    %255 = vmatpush1.msra.mxu0 0.0
    %256 = vmatprep.mubr.f32.mxu0 0.0
    %257 = vmatmul.mubr.f32.gmra.mrb[0].mxu0 %v181
    %v258 = vpop.f32.mrb[0].mxu0
    %v259 = vadd.f32 %v177, %v258
    %v260 = vpop.f32.mrb[0].mxu0
    %261 = vmatprep.mubr.f32.mxu0 0.0
    %262 = vmatmul.mubr.f32.gmra.mrb[0].mxu0 %v184
    %v263 = vpop.f32.mrb[0].mxu0
    %v264 = vadd.f32 %v177, %v263
    %v265 = vpop.f32.mrb[0].mxu0
    %266 = vmatprep.mubr.f32.mxu0 0.0
    %267 = vmatmul.mubr.f32.gmra.mrb[0].mxu0 %v187
    %v268 = vpop.f32.mrb[0].mxu0
    %v269 = vadd.f32 %v177, %v268
    %v270 = vpop.f32.mrb[0].mxu0
    %271 = vmatprep.mubr.f32.mxu0 0.0
    %272 = vmatmul.mubr.f32.gmra.mrb[0].mxu0 %v190
    %v273 = vpop.f32.mrb[0].mxu0
    %v274 = vadd.f32 %v177, %v273
    %v275 = vpop.f32.mrb[0].mxu0
    %276 = vdwg.mxu0
    %v277 = vmax.f32 %v259, 0.0
    %v278 = vmax.f32 %v264, 0.0
    %v279 = vmax.f32 %v269, 0.0
    %v280 = vmax.f32 %v274, 0.0
    %v281 = vld [vmem:[%s5] sm:$0xff]
    %v282 = vld [vmem:[%s5 + $0x8] sm:$0xff]
    %v283 = vld [vmem:[%s5 + $0x10] sm:$0xff]
    %v284 = vld [vmem:[%s5 + $0x18] sm:$0xff]
    %v285 = vld [vmem:[#allocation9] sm:$0x1]
    %v287 = vlaneseq
    %v288 = vshrl.u32 %v287, 7
    %v289 = vsub.s32 0, %v288
    %v290 = vrot.slane %v285, %v289
    %vm292 = vcmask 261120
    %v294 = vsel %vm292, %v277, 0
    %v297 = vsel %vm292, %v278, 0
    %v300 = vsel %vm292, %v279, 0
    %v303 = vsel %vm292, %v280, 0
    %305 = vmatprep.subr.mxu0 0.0
    %306 = vmatpush1.msra.mxu0 %v281
    %307 = vmatprep.subr.mxu0 0.0
    %308 = vmatpush1.msra.mxu0 %v282
    %309 = vmatprep.subr.mxu0 0.0
    %310 = vmatpush1.msra.mxu0 %v283
    %311 = vmatprep.subr.mxu0 0.0
    %312 = vmatpush1.msra.mxu0 %v284
    %313 = vmatprep.subr.mxu0 0.0
    %314 = vmatpush1.msra.mxu0 0.0
    %315 = vmatprep.subr.mxu0 0.0
    %316 = vmatpush1.msra.mxu0 0.0
    %317 = vmatprep.subr.mxu0 0.0
    %318 = vmatpush1.msra.mxu0 0.0
    %319 = vmatprep.subr.mxu0 0.0
    %320 = vmatpush1.msra.mxu0 0.0
    %321 = vmatprep.subr.mxu0 0.0
    %322 = vmatpush1.msra.mxu0 0.0
    %323 = vmatprep.subr.mxu0 0.0
    %324 = vmatpush1.msra.mxu0 0.0
    %325 = vmatprep.subr.mxu0 0.0
    %326 = vmatpush1.msra.mxu0 0.0
    %327 = vmatprep.subr.mxu0 0.0
    %328 = vmatpush1.msra.mxu0 0.0
    %329 = vmatprep.subr.mxu0 0.0
    %330 = vmatpush1.msra.mxu0 0.0
    %331 = vmatprep.subr.mxu0 0.0
    %332 = vmatpush1.msra.mxu0 0.0
    %333 = vmatprep.subr.mxu0 0.0
    %334 = vmatpush1.msra.mxu0 0.0
    %335 = vmatprep.subr.mxu0 0.0
    %336 = vmatpush1.msra.mxu0 0.0
    %337 = vmatprep.subr.mxu0 0.0
    %338 = vmatpush1.msra.mxu0 0.0
    %339 = vmatprep.subr.mxu0 0.0
    %340 = vmatpush1.msra.mxu0 0.0
    %341 = vmatprep.subr.mxu0 0.0
    %342 = vmatpush1.msra.mxu0 0.0
    %343 = vmatprep.subr.mxu0 0.0
    %344 = vmatpush1.msra.mxu0 0.0
    %345 = vmatprep.subr.mxu0 0.0
    %346 = vmatpush1.msra.mxu0 0.0
    %347 = vmatprep.subr.mxu0 0.0
    %348 = vmatpush1.msra.mxu0 0.0
    %349 = vmatprep.subr.mxu0 0.0
    %350 = vmatpush1.msra.mxu0 0.0
    %351 = vmatprep.subr.mxu0 0.0
    %352 = vmatpush1.msra.mxu0 0.0
    %353 = vmatprep.subr.mxu0 0.0
    %354 = vmatpush1.msra.mxu0 0.0
    %355 = vmatprep.subr.mxu0 0.0
    %356 = vmatpush1.msra.mxu0 0.0
    %357 = vmatprep.subr.mxu0 0.0
    %358 = vmatpush1.msra.mxu0 0.0
    %359 = vmatprep.subr.mxu0 0.0
    %360 = vmatpush1.msra.mxu0 0.0
    %361 = vmatprep.subr.mxu0 0.0
    %362 = vmatpush1.msra.mxu0 0.0
    %363 = vmatprep.subr.mxu0 0.0
    %364 = vmatpush1.msra.mxu0 0.0
    %365 = vmatprep.subr.mxu0 0.0
    %366 = vmatpush1.msra.mxu0 0.0
    %367 = vmatprep.subr.mxu0 0.0
    %368 = vmatpush1.msra.mxu0 0.0
    %369 = vmatprep.mubr.f32.mxu0 0.0
    %370 = vmatmul.mubr.f32.gmra.mrb[0].mxu0 %v294
    %v371 = vpop.f32.mrb[0].mxu0
    %v372 = vadd.f32 %v290, %v371
    %v373 = vpop.f32.mrb[0].mxu0
    %374 = vmatprep.mubr.f32.mxu0 0.0
    %375 = vmatmul.mubr.f32.gmra.mrb[0].mxu0 %v297
    %v376 = vpop.f32.mrb[0].mxu0
    %v377 = vadd.f32 %v290, %v376
    %v378 = vpop.f32.mrb[0].mxu0
    %379 = vmatprep.mubr.f32.mxu0 0.0
    %380 = vmatmul.mubr.f32.gmra.mrb[0].mxu0 %v300
    %v381 = vpop.f32.mrb[0].mxu0
    %v382 = vadd.f32 %v290, %v381
    %v383 = vpop.f32.mrb[0].mxu0
    %384 = vmatprep.mubr.f32.mxu0 0.0
    %385 = vmatmul.mubr.f32.gmra.mrb[0].mxu0 %v303
    %v386 = vpop.f32.mrb[0].mxu0
    %v387 = vadd.f32 %v290, %v386
    %v388 = vpop.f32.mrb[0].mxu0
    %389 = vdwg.mxu0
    %v390 = vmax.f32 %v372, 0.0
    %v391 = vmax.f32 %v377, 0.0
    %v392 = vmax.f32 %v382, 0.0
    %v393 = vmax.f32 %v387, 0.0
    %v394 = vld [vmem:[%s7] sm:$0xff]
    %v395 = vld [vmem:[%s7 + $0x8] sm:$0xff]
    %v396 = vld [vmem:[%s7 + $0x10] sm:$0xff]
    %v397 = vld [vmem:[%s7 + $0x18] sm:$0xff]
    %v398 = vld [vmem:[#allocation11] sm:$0x1]
    %v400 = vlaneseq
    %v401 = vshrl.u32 %v400, 7
    %v402 = vsub.s32 0, %v401
    %v403 = vrot.slane %v398, %v402
    %v406 = vsel %vm292, %v390, 0
    %v409 = vsel %vm292, %v391, 0
    %v412 = vsel %vm292, %v392, 0
    %v415 = vsel %vm292, %v393, 0
    %417 = vmatprep.subr.mxu0 0.0
    %418 = vmatpush1.msra.mxu0 %v394
    %419 = vmatprep.subr.mxu0 0.0
    %420 = vmatpush1.msra.mxu0 %v395
    %421 = vmatprep.subr.mxu0 0.0
    %422 = vmatpush1.msra.mxu0 %v396
    %423 = vmatprep.subr.mxu0 0.0
    %424 = vmatpush1.msra.mxu0 %v397
    %425 = vmatprep.subr.mxu0 0.0
    %426 = vmatpush1.msra.mxu0 0.0
    %427 = vmatprep.subr.mxu0 0.0
    %428 = vmatpush1.msra.mxu0 0.0
    %429 = vmatprep.subr.mxu0 0.0
    %430 = vmatpush1.msra.mxu0 0.0
    %431 = vmatprep.subr.mxu0 0.0
    %432 = vmatpush1.msra.mxu0 0.0
    %433 = vmatprep.subr.mxu0 0.0
    %434 = vmatpush1.msra.mxu0 0.0
    %435 = vmatprep.subr.mxu0 0.0
    %436 = vmatpush1.msra.mxu0 0.0
    %437 = vmatprep.subr.mxu0 0.0
    %438 = vmatpush1.msra.mxu0 0.0
    %439 = vmatprep.subr.mxu0 0.0
    %440 = vmatpush1.msra.mxu0 0.0
    %441 = vmatprep.subr.mxu0 0.0
    %442 = vmatpush1.msra.mxu0 0.0
    %443 = vmatprep.subr.mxu0 0.0
    %444 = vmatpush1.msra.mxu0 0.0
    %445 = vmatprep.subr.mxu0 0.0
    %446 = vmatpush1.msra.mxu0 0.0
    %447 = vmatprep.subr.mxu0 0.0
    %448 = vmatpush1.msra.mxu0 0.0
    %449 = vmatprep.subr.mxu0 0.0
    %450 = vmatpush1.msra.mxu0 0.0
    %451 = vmatprep.subr.mxu0 0.0
    %452 = vmatpush1.msra.mxu0 0.0
    %453 = vmatprep.subr.mxu0 0.0
    %454 = vmatpush1.msra.mxu0 0.0
    %455 = vmatprep.subr.mxu0 0.0
    %456 = vmatpush1.msra.mxu0 0.0
    %457 = vmatprep.subr.mxu0 0.0
    %458 = vmatpush1.msra.mxu0 0.0
    %459 = vmatprep.subr.mxu0 0.0
    %460 = vmatpush1.msra.mxu0 0.0
    %461 = vmatprep.subr.mxu0 0.0
    %462 = vmatpush1.msra.mxu0 0.0
    %463 = vmatprep.subr.mxu0 0.0
    %464 = vmatpush1.msra.mxu0 0.0
    %465 = vmatprep.subr.mxu0 0.0
    %466 = vmatpush1.msra.mxu0 0.0
    %467 = vmatprep.subr.mxu0 0.0
    %468 = vmatpush1.msra.mxu0 0.0
    %469 = vmatprep.subr.mxu0 0.0
    %470 = vmatpush1.msra.mxu0 0.0
    %471 = vmatprep.subr.mxu0 0.0
    %472 = vmatpush1.msra.mxu0 0.0
    %473 = vmatprep.subr.mxu0 0.0
    %474 = vmatpush1.msra.mxu0 0.0
    %475 = vmatprep.subr.mxu0 0.0
    %476 = vmatpush1.msra.mxu0 0.0
    %477 = vmatprep.subr.mxu0 0.0
    %478 = vmatpush1.msra.mxu0 0.0
    %479 = vmatprep.subr.mxu0 0.0
    %480 = vmatpush1.msra.mxu0 0.0
    %481 = vmatprep.mubr.f32.mxu0 0.0
    %482 = vmatmul.mubr.f32.gmra.mrb[0].mxu0 %v406
    %v483 = vpop.f32.mrb[0].mxu0
    %v484 = vadd.f32 %v403, %v483
    %v485 = vpop.f32.mrb[0].mxu0
    %486 = vmatprep.mubr.f32.mxu0 0.0
    %487 = vmatmul.mubr.f32.gmra.mrb[0].mxu0 %v409
    %v488 = vpop.f32.mrb[0].mxu0
    %v489 = vadd.f32 %v403, %v488
    %v490 = vpop.f32.mrb[0].mxu0
    %491 = vmatprep.mubr.f32.mxu0 0.0
    %492 = vmatmul.mubr.f32.gmra.mrb[0].mxu0 %v412
    %v493 = vpop.f32.mrb[0].mxu0
    %v494 = vadd.f32 %v403, %v493
    %v495 = vpop.f32.mrb[0].mxu0
    %496 = vmatprep.mubr.f32.mxu0 0.0
    %497 = vmatmul.mubr.f32.gmra.mrb[0].mxu0 %v415
    %v498 = vpop.f32.mrb[0].mxu0
    %v499 = vadd.f32 %v403, %v498
    %v500 = vpop.f32.mrb[0].mxu0
    %501 = vdwg.mxu0
    %v502 = vmax.f32 %v484, 0.0
    %v503 = vmax.f32 %v489, 0.0
    %v504 = vmax.f32 %v494, 0.0
    %v505 = vmax.f32 %v499, 0.0
    %v506 = vld [vmem:[%s9] sm:$0xff]
    %v507 = vld [vmem:[%s9 + $0x8] sm:$0xff]
    %v508 = vld [vmem:[%s9 + $0x10] sm:$0xff]
    %v509 = vld [vmem:[%s9 + $0x18] sm:$0xff]
    %v511 = vsel %vm292, %v502, 0
    %v514 = vsel %vm292, %v503, 0
    %v517 = vsel %vm292, %v504, 0
    %v520 = vsel %vm292, %v505, 0
    %522 = vmatprep.subr.mxu0 0.0
    %523 = vmatpush1.msra.mxu0 %v506
    %524 = vmatprep.subr.mxu0 0.0
    %525 = vmatpush1.msra.mxu0 %v507
    %526 = vmatprep.subr.mxu0 0.0
    %527 = vmatpush1.msra.mxu0 %v508
    %528 = vmatprep.subr.mxu0 0.0
    %529 = vmatpush1.msra.mxu0 %v509
    %530 = vmatprep.subr.mxu0 0.0
    %531 = vmatpush1.msra.mxu0 0.0
    %532 = vmatprep.subr.mxu0 0.0
    %533 = vmatpush1.msra.mxu0 0.0
    %534 = vmatprep.subr.mxu0 0.0
    %535 = vmatpush1.msra.mxu0 0.0
    %536 = vmatprep.subr.mxu0 0.0
    %537 = vmatpush1.msra.mxu0 0.0
    %538 = vmatprep.subr.mxu0 0.0
    %539 = vmatpush1.msra.mxu0 0.0
    %540 = vmatprep.subr.mxu0 0.0
    %541 = vmatpush1.msra.mxu0 0.0
    %542 = vmatprep.subr.mxu0 0.0
    %543 = vmatpush1.msra.mxu0 0.0
    %544 = vmatprep.subr.mxu0 0.0
    %545 = vmatpush1.msra.mxu0 0.0
    %546 = vmatprep.subr.mxu0 0.0
    %547 = vmatpush1.msra.mxu0 0.0
    %548 = vmatprep.subr.mxu0 0.0
    %549 = vmatpush1.msra.mxu0 0.0
    %550 = vmatprep.subr.mxu0 0.0
    %551 = vmatpush1.msra.mxu0 0.0
    %552 = vmatprep.subr.mxu0 0.0
    %553 = vmatpush1.msra.mxu0 0.0
    %554 = vmatprep.subr.mxu0 0.0
    %555 = vmatpush1.msra.mxu0 0.0
    %556 = vmatprep.subr.mxu0 0.0
    %557 = vmatpush1.msra.mxu0 0.0
    %558 = vmatprep.subr.mxu0 0.0
    %559 = vmatpush1.msra.mxu0 0.0
    %560 = vmatprep.subr.mxu0 0.0
    %561 = vmatpush1.msra.mxu0 0.0
    %562 = vmatprep.subr.mxu0 0.0
    %563 = vmatpush1.msra.mxu0 0.0
    %564 = vmatprep.subr.mxu0 0.0
    %565 = vmatpush1.msra.mxu0 0.0
    %566 = vmatprep.subr.mxu0 0.0
    %567 = vmatpush1.msra.mxu0 0.0
    %568 = vmatprep.subr.mxu0 0.0
    %569 = vmatpush1.msra.mxu0 0.0
    %570 = vmatprep.subr.mxu0 0.0
    %571 = vmatpush1.msra.mxu0 0.0
    %572 = vmatprep.subr.mxu0 0.0
    %573 = vmatpush1.msra.mxu0 0.0
    %574 = vmatprep.subr.mxu0 0.0
    %575 = vmatpush1.msra.mxu0 0.0
    %576 = vmatprep.subr.mxu0 0.0
    %577 = vmatpush1.msra.mxu0 0.0
    %578 = vmatprep.subr.mxu0 0.0
    %579 = vmatpush1.msra.mxu0 0.0
    %580 = vmatprep.subr.mxu0 0.0
    %581 = vmatpush1.msra.mxu0 0.0
    %582 = vmatprep.subr.mxu0 0.0
    %583 = vmatpush1.msra.mxu0 0.0
    %584 = vmatprep.subr.mxu0 0.0
    %585 = vmatpush1.msra.mxu0 0.0
    %586 = vmatprep.mubr.f32.mxu0 0.0
    %587 = vmatmul.mubr.f32.gmra.mrb[0].mxu0 %v511
    %v588 = vpop.f32.mrb[0].mxu0
    %v589 = vadd.f32 0.0, %v588
    %v590 = vpop.f32.mrb[0].mxu0
    %591 = vmatprep.mubr.f32.mxu0 0.0
    %592 = vmatmul.mubr.f32.gmra.mrb[0].mxu0 %v514
    %v593 = vpop.f32.mrb[0].mxu0
    %v594 = vadd.f32 0.0, %v593
    %v595 = vpop.f32.mrb[0].mxu0
    %596 = vmatprep.mubr.f32.mxu0 0.0
    %597 = vmatmul.mubr.f32.gmra.mrb[0].mxu0 %v517
    %v598 = vpop.f32.mrb[0].mxu0
    %v599 = vadd.f32 0.0, %v598
    %v600 = vpop.f32.mrb[0].mxu0
    %601 = vmatprep.mubr.f32.mxu0 0.0
    %602 = vmatmul.mubr.f32.gmra.mrb[0].mxu0 %v520
    %v603 = vpop.f32.mrb[0].mxu0
    %v604 = vadd.f32 0.0, %v603
    %v605 = vpop.f32.mrb[0].mxu0
    %606 = vdwg.mxu0
    %v607 = vld [vmem:[#allocation14] sm:$0x1]
    %v608 = vld [vmem:[#allocation15] sm:$0x1]
    %609 = vadd.xlane.f32.xlu0 %v589
    %v610 = vpop.xlane.xlu0 %609
    %611 = vadd.xlane.f32.xlu0 %v594
    %v612 = vpop.xlane.xlu0 %611
    %613 = vadd.xlane.f32.xlu0 %v599
    %v614 = vpop.xlane.xlu0 %613
    %615 = vadd.xlane.f32.xlu0 %v604
    %v616 = vpop.xlane.xlu0 %615
    %v617 = vrcp.pop 128.0
    %v618 = vmul.f32 %v610, %v617
    %v619 = vmul.f32 %v612, %v617
    %v620 = vmul.f32 %v614, %v617
    %v621 = vmul.f32 %v616, %v617
    %v622 = vsub.f32 %v589, %v618
    %v623 = vsub.f32 %v594, %v619
    %v624 = vsub.f32 %v599, %v620
    %v625 = vsub.f32 %v604, %v621
    %v626 = vmul.f32 %v622, %v622
    %v627 = vmul.f32 %v623, %v623
    %v628 = vmul.f32 %v624, %v624
    %v629 = vmul.f32 %v625, %v625
    %630 = vadd.xlane.f32.xlu0 %v626
    %v631 = vpop.xlane.xlu0 %630
    %632 = vadd.xlane.f32.xlu0 %v627
    %v633 = vpop.xlane.xlu0 %632
    %634 = vadd.xlane.f32.xlu0 %v628
    %v635 = vpop.xlane.xlu0 %634
    %636 = vadd.xlane.f32.xlu0 %v629
    %v637 = vpop.xlane.xlu0 %636
    %v638 = vmul.f32 %v631, %v617
    %v639 = vmul.f32 %v633, %v617
    %v640 = vmul.f32 %v635, %v617
    %v641 = vmul.f32 %v637, %v617
    %v642 = vadd.f32 %v638, 1e-05
    %v643 = vadd.f32 %v639, 1e-05
    %v644 = vadd.f32 %v640, 1e-05
    %v645 = vadd.f32 %v641, 1e-05
    %v646 = vrsqrt.pop %v642
    %v647 = vrsqrt.pop %v643
    %v648 = vrsqrt.pop %v644
    %v649 = vrsqrt.pop %v645
    %v650 = vmul.f32 %v622, %v646
    %v651 = vmul.f32 %v623, %v647
    %v652 = vmul.f32 %v624, %v648
    %v653 = vmul.f32 %v625, %v649
    %v655 = vlaneseq
    %v656 = vshrl.u32 %v655, 7
    %v657 = vsub.s32 0, %v656
    %v658 = vrot.slane %v607, %v657
    %v660 = vmul.f32 %v650, %v658
    %v661 = vmul.f32 %v651, %v658
    %v662 = vmul.f32 %v652, %v658
    %v663 = vmul.f32 %v653, %v658
    %v665 = vlaneseq
    %v666 = vshrl.u32 %v665, 7
    %v667 = vsub.s32 0, %v666
    %v668 = vrot.slane %v608, %v667
    %v670 = vadd.f32 %v660, %v668
    %v671 = vadd.f32 %v661, %v668
    %v672 = vadd.f32 %v662, %v668
    %v673 = vadd.f32 %v663, %v668
    %v674 = vld [vmem:[#allocation12] sm:$0x1]
    %v676 = vlaneseq
    %v677 = vshrl.u32 %v676, 7
    %v678 = vsub.s32 0, %v677
    %v679 = vrot.slane %v674, %v678
    %v681 = vadd.f32 %v670, %v679
    %v682 = vadd.f32 %v671, %v679
    %v683 = vadd.f32 %v672, %v679
    %v684 = vadd.f32 %v673, %v679
    %685 = vst [vmem:[#allocation2] sm:$0xff] %v681
    %686 = vst [vmem:[#allocation2 + $0x8] sm:$0xff] %v682
    %687 = vst [vmem:[#allocation2 + $0x10] sm:$0xff] %v683
    %688 = vst [vmem:[#allocation2 + $0x18] sm:$0xff] %v684
    %v689 = vld [vmem:[%s10] sm:$0xff]
    %v690 = vld [vmem:[%s10 + $0x8] sm:$0xff]
    %v691 = vld [vmem:[%s10 + $0x10] sm:$0xff]
    %v692 = vld [vmem:[%s10 + $0x18] sm:$0xff]
    %v693 = vld [vmem:[%s14] sm:$0x1]
    %v694 = vld [vmem:[%s15] sm:$0x1]
    %v695 = vld [vmem:[#allocation3] sm:$0xf]
    %v696 = vld [vmem:[#allocation6] sm:$0xf]
    %v697 = vld [vmem:[#allocation2] sm:$0xf]
    %v699 = vsel %vm292, %v695, 0
    %701 = vmatprep.subr.mxu0 0.0
    %702 = vmatpush1.msra.mxu0 %v689
    %703 = vmatprep.subr.mxu0 0.0
    %704 = vmatpush1.msra.mxu0 %v690
    %705 = vmatprep.subr.mxu0 0.0
    %706 = vmatpush1.msra.mxu0 %v691
    %707 = vmatprep.subr.mxu0 0.0
    %708 = vmatpush1.msra.mxu0 %v692
    %709 = vmatprep.subr.mxu0 0.0
    %710 = vmatpush1.msra.mxu0 0.0
    %711 = vmatprep.subr.mxu0 0.0
    %712 = vmatpush1.msra.mxu0 0.0
    %713 = vmatprep.subr.mxu0 0.0
    %714 = vmatpush1.msra.mxu0 0.0
    %715 = vmatprep.subr.mxu0 0.0
    %716 = vmatpush1.msra.mxu0 0.0
    %717 = vmatprep.subr.mxu0 0.0
    %718 = vmatpush1.msra.mxu0 0.0
    %719 = vmatprep.subr.mxu0 0.0
    %720 = vmatpush1.msra.mxu0 0.0
    %721 = vmatprep.subr.mxu0 0.0
    %722 = vmatpush1.msra.mxu0 0.0
    %723 = vmatprep.subr.mxu0 0.0
    %724 = vmatpush1.msra.mxu0 0.0
    %725 = vmatprep.subr.mxu0 0.0
    %726 = vmatpush1.msra.mxu0 0.0
    %727 = vmatprep.subr.mxu0 0.0
    %728 = vmatpush1.msra.mxu0 0.0
    %729 = vmatprep.subr.mxu0 0.0
    %730 = vmatpush1.msra.mxu0 0.0
    %731 = vmatprep.subr.mxu0 0.0
    %732 = vmatpush1.msra.mxu0 0.0
    %733 = vmatprep.subr.mxu0 0.0
    %734 = vmatpush1.msra.mxu0 0.0
    %735 = vmatprep.subr.mxu0 0.0
    %736 = vmatpush1.msra.mxu0 0.0
    %737 = vmatprep.subr.mxu0 0.0
    %738 = vmatpush1.msra.mxu0 0.0
    %739 = vmatprep.subr.mxu0 0.0
    %740 = vmatpush1.msra.mxu0 0.0
    %741 = vmatprep.subr.mxu0 0.0
    %742 = vmatpush1.msra.mxu0 0.0
    %743 = vmatprep.subr.mxu0 0.0
    %744 = vmatpush1.msra.mxu0 0.0
    %745 = vmatprep.subr.mxu0 0.0
    %746 = vmatpush1.msra.mxu0 0.0
    %747 = vmatprep.subr.mxu0 0.0
    %748 = vmatpush1.msra.mxu0 0.0
    %749 = vmatprep.subr.mxu0 0.0
    %750 = vmatpush1.msra.mxu0 0.0
    %751 = vmatprep.subr.mxu0 0.0
    %752 = vmatpush1.msra.mxu0 0.0
    %753 = vmatprep.subr.mxu0 0.0
    %754 = vmatpush1.msra.mxu0 0.0
    %755 = vmatprep.subr.mxu0 0.0
    %756 = vmatpush1.msra.mxu0 0.0
    %757 = vmatprep.subr.mxu0 0.0
    %758 = vmatpush1.msra.mxu0 0.0
    %759 = vmatprep.subr.mxu0 0.0
    %760 = vmatpush1.msra.mxu0 0.0
    %761 = vmatprep.subr.mxu0 0.0
    %762 = vmatpush1.msra.mxu0 0.0
    %763 = vmatprep.subr.mxu0 0.0
    %764 = vmatpush1.msra.mxu0 0.0
    %765 = vmatprep.mubr.f32.mxu0 0.0
    %766 = vmatmul.mubr.f32.gmra.mrb[0].mxu0 %v699
    %v767 = vpop.f32.mrb[0].mxu0
    %v768 = vadd.f32 0.0, %v767
    %v769 = vpop.f32.mrb[0].mxu0
    %770 = vdwg.mxu0
    %vm771 = vcmask 1043456
    %v772 = vsel %vm771, %v768, 0.0
    %773 = vadd.xlane.f32.xlu0 %v772
    %v774 = vpop.xlane.xlu0 %773
    %v775 = vmul.f32 %v774, %v617
    %v776 = vsub.f32 %v768, %v775
    %v777 = vmul.f32 %v776, %v776
    %v778 = vsel %vm771, %v777, 0.0
    %779 = vadd.xlane.f32.xlu0 %v778
    %v780 = vpop.xlane.xlu0 %779
    %v781 = vmul.f32 %v780, %v617
    %v782 = vadd.f32 %v781, 1e-05
    %v783 = vrsqrt.pop %v782
    %v784 = vmul.f32 %v776, %v783
    %v786 = vlaneseq
    %v787 = vshrl.u32 %v786, 7
    %v788 = vsub.s32 0, %v787
    %v789 = vrot.slane %v693, %v788
    %v791 = vmul.f32 %v784, %v789
    %v793 = vlaneseq
    %v794 = vshrl.u32 %v793, 7
    %v795 = vsub.s32 0, %v794
    %v796 = vrot.slane %v694, %v795
    %v798 = vadd.f32 %v791, %v796
    %v799 = vadd.f32 %v697, %v798
    %v800 = vxor.u32 %v799, 2147483648
    %v801 = vmul.f32 %v800, 1.442695
    %v802 = vpow.pop %v801
    %v803 = vadd.f32 %v802, 1.0
    %v804 = vrcp.pop %v803
    %v805 = vmul.f32 1.0, %v804
    %v806 = vtanh.pop %v799
    %808 = vrot.lane.b32.xlu0 %v696, 32
    %v809 = vpop.permute.xlu0 %808
    %v811 = vmul.f32 %v805, %v809
    %813 = vrot.lane.b32.xlu0 %v806, 32
    %v814 = vpop.permute.xlu0 %813
    %v816 = vmul.f32 %v805, %v814
    %818 = vrot.lane.b32.xlu0 %v816, 32
    %v819 = vpop.permute.xlu0 %818
    %v821 = vadd.f32 %v811, %v819
    %v822 = vtanh.pop %v821
    %824 = vrot.lane.b32.xlu0 %v822, 32
    %v825 = vpop.permute.xlu0 %824
    %v827 = vmul.f32 %v805, %v825
    %829 = vrot.lane.b32.xlu0 %v827, 64
    %v830 = vpop.permute.xlu0 %829
    %vm832 = vcmask 257024
    %833 = vst.msk [vmem:[#allocation17] sm:$0xf] %vm832, %v830
    %v834 = vld [vmem:[#allocation2 + $0x4] sm:$0xf]
    %v835 = vsel %vm292, %v830, 0
    %837 = vmatprep.subr.mxu0 0.0
    %838 = vmatpush1.msra.mxu0 %v689
    %839 = vmatprep.subr.mxu0 0.0
    %840 = vmatpush1.msra.mxu0 %v690
    %841 = vmatprep.subr.mxu0 0.0
    %842 = vmatpush1.msra.mxu0 %v691
    %843 = vmatprep.subr.mxu0 0.0
    %844 = vmatpush1.msra.mxu0 %v692
    %845 = vmatprep.subr.mxu0 0.0
    %846 = vmatpush1.msra.mxu0 0.0
    %847 = vmatprep.subr.mxu0 0.0
    %848 = vmatpush1.msra.mxu0 0.0
    %849 = vmatprep.subr.mxu0 0.0
    %850 = vmatpush1.msra.mxu0 0.0
    %851 = vmatprep.subr.mxu0 0.0
    %852 = vmatpush1.msra.mxu0 0.0
    %853 = vmatprep.subr.mxu0 0.0
    %854 = vmatpush1.msra.mxu0 0.0
    %855 = vmatprep.subr.mxu0 0.0
    %856 = vmatpush1.msra.mxu0 0.0
    %857 = vmatprep.subr.mxu0 0.0
    %858 = vmatpush1.msra.mxu0 0.0
    %859 = vmatprep.subr.mxu0 0.0
    %860 = vmatpush1.msra.mxu0 0.0
    %861 = vmatprep.subr.mxu0 0.0
    %862 = vmatpush1.msra.mxu0 0.0
    %863 = vmatprep.subr.mxu0 0.0
    %864 = vmatpush1.msra.mxu0 0.0
    %865 = vmatprep.subr.mxu0 0.0
    %866 = vmatpush1.msra.mxu0 0.0
    %867 = vmatprep.subr.mxu0 0.0
    %868 = vmatpush1.msra.mxu0 0.0
    %869 = vmatprep.subr.mxu0 0.0
    %870 = vmatpush1.msra.mxu0 0.0
    %871 = vmatprep.subr.mxu0 0.0
    %872 = vmatpush1.msra.mxu0 0.0
    %873 = vmatprep.subr.mxu0 0.0
    %874 = vmatpush1.msra.mxu0 0.0
    %875 = vmatprep.subr.mxu0 0.0
    %876 = vmatpush1.msra.mxu0 0.0
    %877 = vmatprep.subr.mxu0 0.0
    %878 = vmatpush1.msra.mxu0 0.0
    %879 = vmatprep.subr.mxu0 0.0
    %880 = vmatpush1.msra.mxu0 0.0
    %881 = vmatprep.subr.mxu0 0.0
    %882 = vmatpush1.msra.mxu0 0.0
    %883 = vmatprep.subr.mxu0 0.0
    %884 = vmatpush1.msra.mxu0 0.0
    %885 = vmatprep.subr.mxu0 0.0
    %886 = vmatpush1.msra.mxu0 0.0
    %887 = vmatprep.subr.mxu0 0.0
    %888 = vmatpush1.msra.mxu0 0.0
    %889 = vmatprep.subr.mxu0 0.0
    %890 = vmatpush1.msra.mxu0 0.0
    %891 = vmatprep.subr.mxu0 0.0
    %892 = vmatpush1.msra.mxu0 0.0
    %893 = vmatprep.subr.mxu0 0.0
    %894 = vmatpush1.msra.mxu0 0.0
    %895 = vmatprep.subr.mxu0 0.0
    %896 = vmatpush1.msra.mxu0 0.0
    %897 = vmatprep.subr.mxu0 0.0
    %898 = vmatpush1.msra.mxu0 0.0
    %899 = vmatprep.subr.mxu0 0.0
    %900 = vmatpush1.msra.mxu0 0.0
    %901 = vmatprep.mubr.f32.mxu0 0.0
    %902 = vmatmul.mubr.f32.gmra.mrb[0].mxu0 %v835
    %v903 = vpop.f32.mrb[0].mxu0
    %v904 = vadd.f32 0.0, %v903
    %v905 = vpop.f32.mrb[0].mxu0
    %906 = vdwg.mxu0
    %v907 = vsel %vm771, %v904, 0.0
    %908 = vadd.xlane.f32.xlu0 %v907
    %v909 = vpop.xlane.xlu0 %908
    %v910 = vmul.f32 %v909, %v617
    %v911 = vsub.f32 %v904, %v910
    %v912 = vmul.f32 %v911, %v911
    %v913 = vsel %vm771, %v912, 0.0
    %914 = vadd.xlane.f32.xlu0 %v913
    %v915 = vpop.xlane.xlu0 %914
    %v916 = vmul.f32 %v915, %v617
    %v917 = vadd.f32 %v916, 1e-05
    %v918 = vrsqrt.pop %v917
    %v919 = vmul.f32 %v911, %v918
    %v920 = vmul.f32 %v919, %v789
    %v921 = vadd.f32 %v920, %v796
    %v922 = vadd.f32 %v834, %v921
    %v923 = vxor.u32 %v922, 2147483648
    %v924 = vmul.f32 %v923, 1.442695
    %v925 = vpow.pop %v924
    %v926 = vadd.f32 %v925, 1.0
    %v927 = vrcp.pop %v926
    %v928 = vmul.f32 1.0, %v927
    %v929 = vtanh.pop %v922
    %v930 = vmul.f32 %v928, %v821
    %932 = vrot.lane.b32.xlu0 %v929, 32
    %v933 = vpop.permute.xlu0 %932
    %v935 = vmul.f32 %v928, %v933
    %937 = vrot.lane.b32.xlu0 %v935, 32
    %v938 = vpop.permute.xlu0 %937
    %v940 = vadd.f32 %v930, %v938
    %v941 = vtanh.pop %v940
    %943 = vrot.lane.b32.xlu0 %v941, 32
    %v944 = vpop.permute.xlu0 %943
    %v946 = vmul.f32 %v928, %v944
    %948 = vrot.lane.b32.xlu0 %v946, 64
    %v949 = vpop.permute.xlu0 %948
    %951 = vst.msk [vmem:[#allocation17 + $0x4] sm:$0xf] %vm832, %v949
    %v952 = vld [vmem:[#allocation2 + $0x8] sm:$0xf]
    %v953 = vsel %vm292, %v949, 0
    %955 = vmatprep.subr.mxu0 0.0
    %956 = vmatpush1.msra.mxu0 %v689
    %957 = vmatprep.subr.mxu0 0.0
    %958 = vmatpush1.msra.mxu0 %v690
    %959 = vmatprep.subr.mxu0 0.0
    %960 = vmatpush1.msra.mxu0 %v691
    %961 = vmatprep.subr.mxu0 0.0
    %962 = vmatpush1.msra.mxu0 %v692
    %963 = vmatprep.subr.mxu0 0.0
    %964 = vmatpush1.msra.mxu0 0.0
    %965 = vmatprep.subr.mxu0 0.0
    %966 = vmatpush1.msra.mxu0 0.0
    %967 = vmatprep.subr.mxu0 0.0
    %968 = vmatpush1.msra.mxu0 0.0
    %969 = vmatprep.subr.mxu0 0.0
    %970 = vmatpush1.msra.mxu0 0.0
    %971 = vmatprep.subr.mxu0 0.0
    %972 = vmatpush1.msra.mxu0 0.0
    %973 = vmatprep.subr.mxu0 0.0
    %974 = vmatpush1.msra.mxu0 0.0
    %975 = vmatprep.subr.mxu0 0.0
    %976 = vmatpush1.msra.mxu0 0.0
    %977 = vmatprep.subr.mxu0 0.0
    %978 = vmatpush1.msra.mxu0 0.0
    %979 = vmatprep.subr.mxu0 0.0
    %980 = vmatpush1.msra.mxu0 0.0
    %981 = vmatprep.subr.mxu0 0.0
    %982 = vmatpush1.msra.mxu0 0.0
    %983 = vmatprep.subr.mxu0 0.0
    %984 = vmatpush1.msra.mxu0 0.0
    %985 = vmatprep.subr.mxu0 0.0
    %986 = vmatpush1.msra.mxu0 0.0
    %987 = vmatprep.subr.mxu0 0.0
    %988 = vmatpush1.msra.mxu0 0.0
    %989 = vmatprep.subr.mxu0 0.0
    %990 = vmatpush1.msra.mxu0 0.0
    %991 = vmatprep.subr.mxu0 0.0
    %992 = vmatpush1.msra.mxu0 0.0
    %993 = vmatprep.subr.mxu0 0.0
    %994 = vmatpush1.msra.mxu0 0.0
    %995 = vmatprep.subr.mxu0 0.0
    %996 = vmatpush1.msra.mxu0 0.0
    %997 = vmatprep.subr.mxu0 0.0
    %998 = vmatpush1.msra.mxu0 0.0
    %999 = vmatprep.subr.mxu0 0.0
    %1000 = vmatpush1.msra.mxu0 0.0
    %1001 = vmatprep.subr.mxu0 0.0
    %1002 = vmatpush1.msra.mxu0 0.0
    %1003 = vmatprep.subr.mxu0 0.0
    %1004 = vmatpush1.msra.mxu0 0.0
    %1005 = vmatprep.subr.mxu0 0.0
    %1006 = vmatpush1.msra.mxu0 0.0
    %1007 = vmatprep.subr.mxu0 0.0
    %1008 = vmatpush1.msra.mxu0 0.0
    %1009 = vmatprep.subr.mxu0 0.0
    %1010 = vmatpush1.msra.mxu0 0.0
    %1011 = vmatprep.subr.mxu0 0.0
    %1012 = vmatpush1.msra.mxu0 0.0
    %1013 = vmatprep.subr.mxu0 0.0
    %1014 = vmatpush1.msra.mxu0 0.0
    %1015 = vmatprep.subr.mxu0 0.0
    %1016 = vmatpush1.msra.mxu0 0.0
    %1017 = vmatprep.subr.mxu0 0.0
    %1018 = vmatpush1.msra.mxu0 0.0
    %1019 = vmatprep.mubr.f32.mxu0 0.0
    %1020 = vmatmul.mubr.f32.gmra.mrb[0].mxu0 %v953
    %v1021 = vpop.f32.mrb[0].mxu0
    %v1022 = vadd.f32 0.0, %v1021
    %v1023 = vpop.f32.mrb[0].mxu0
    %1024 = vdwg.mxu0
    %v1025 = vsel %vm771, %v1022, 0.0
    %1026 = vadd.xlane.f32.xlu0 %v1025
    %v1027 = vpop.xlane.xlu0 %1026
    %v1028 = vmul.f32 %v1027, %v617
    %v1029 = vsub.f32 %v1022, %v1028
    %v1030 = vmul.f32 %v1029, %v1029
    %v1031 = vsel %vm771, %v1030, 0.0
    %1032 = vadd.xlane.f32.xlu0 %v1031
    %v1033 = vpop.xlane.xlu0 %1032
    %v1034 = vmul.f32 %v1033, %v617
    %v1035 = vadd.f32 %v1034, 1e-05
    %v1036 = vrsqrt.pop %v1035
    %v1037 = vmul.f32 %v1029, %v1036
    %v1038 = vmul.f32 %v1037, %v789
    %v1039 = vadd.f32 %v1038, %v796
    %v1040 = vadd.f32 %v952, %v1039
    %v1041 = vxor.u32 %v1040, 2147483648
    %v1042 = vmul.f32 %v1041, 1.442695
    %v1043 = vpow.pop %v1042
    %v1044 = vadd.f32 %v1043, 1.0
    %v1045 = vrcp.pop %v1044
    %v1046 = vmul.f32 1.0, %v1045
    %v1047 = vtanh.pop %v1040
    %v1048 = vmul.f32 %v1046, %v940
    %1050 = vrot.lane.b32.xlu0 %v1047, 32
    %v1051 = vpop.permute.xlu0 %1050
    %v1053 = vmul.f32 %v1046, %v1051
    %1055 = vrot.lane.b32.xlu0 %v1053, 32
    %v1056 = vpop.permute.xlu0 %1055
    %v1058 = vadd.f32 %v1048, %v1056
    %v1059 = vtanh.pop %v1058
    %1061 = vrot.lane.b32.xlu0 %v1059, 32
    %v1062 = vpop.permute.xlu0 %1061
    %v1064 = vmul.f32 %v1046, %v1062
    %1066 = vrot.lane.b32.xlu0 %v1064, 64
    %v1067 = vpop.permute.xlu0 %1066
    %1069 = vst.msk [vmem:[#allocation17 + $0x8] sm:$0xf] %vm832, %v1067
    %v1070 = vld [vmem:[#allocation2 + $0xc] sm:$0xf]
    %v1071 = vsel %vm292, %v1067, 0
    %1073 = vmatprep.subr.mxu0 0.0
    %1074 = vmatpush1.msra.mxu0 %v689
    %1075 = vmatprep.subr.mxu0 0.0
    %1076 = vmatpush1.msra.mxu0 %v690
    %1077 = vmatprep.subr.mxu0 0.0
    %1078 = vmatpush1.msra.mxu0 %v691
    %1079 = vmatprep.subr.mxu0 0.0
    %1080 = vmatpush1.msra.mxu0 %v692
    %1081 = vmatprep.subr.mxu0 0.0
    %1082 = vmatpush1.msra.mxu0 0.0
    %1083 = vmatprep.subr.mxu0 0.0
    %1084 = vmatpush1.msra.mxu0 0.0
    %1085 = vmatprep.subr.mxu0 0.0
    %1086 = vmatpush1.msra.mxu0 0.0
    %1087 = vmatprep.subr.mxu0 0.0
    %1088 = vmatpush1.msra.mxu0 0.0
    %1089 = vmatprep.subr.mxu0 0.0
    %1090 = vmatpush1.msra.mxu0 0.0
    %1091 = vmatprep.subr.mxu0 0.0
    %1092 = vmatpush1.msra.mxu0 0.0
    %1093 = vmatprep.subr.mxu0 0.0
    %1094 = vmatpush1.msra.mxu0 0.0
    %1095 = vmatprep.subr.mxu0 0.0
    %1096 = vmatpush1.msra.mxu0 0.0
    %1097 = vmatprep.subr.mxu0 0.0
    %1098 = vmatpush1.msra.mxu0 0.0
    %1099 = vmatprep.subr.mxu0 0.0
    %1100 = vmatpush1.msra.mxu0 0.0
    %1101 = vmatprep.subr.mxu0 0.0
    %1102 = vmatpush1.msra.mxu0 0.0
    %1103 = vmatprep.subr.mxu0 0.0
    %1104 = vmatpush1.msra.mxu0 0.0
    %1105 = vmatprep.subr.mxu0 0.0
    %1106 = vmatpush1.msra.mxu0 0.0
    %1107 = vmatprep.subr.mxu0 0.0
    %1108 = vmatpush1.msra.mxu0 0.0
    %1109 = vmatprep.subr.mxu0 0.0
    %1110 = vmatpush1.msra.mxu0 0.0
    %1111 = vmatprep.subr.mxu0 0.0
    %1112 = vmatpush1.msra.mxu0 0.0
    %1113 = vmatprep.subr.mxu0 0.0
    %1114 = vmatpush1.msra.mxu0 0.0
    %1115 = vmatprep.subr.mxu0 0.0
    %1116 = vmatpush1.msra.mxu0 0.0
    %1117 = vmatprep.subr.mxu0 0.0
    %1118 = vmatpush1.msra.mxu0 0.0
    %1119 = vmatprep.subr.mxu0 0.0
    %1120 = vmatpush1.msra.mxu0 0.0
    %1121 = vmatprep.subr.mxu0 0.0
    %1122 = vmatpush1.msra.mxu0 0.0
    %1123 = vmatprep.subr.mxu0 0.0
    %1124 = vmatpush1.msra.mxu0 0.0
    %1125 = vmatprep.subr.mxu0 0.0
    %1126 = vmatpush1.msra.mxu0 0.0
    %1127 = vmatprep.subr.mxu0 0.0
    %1128 = vmatpush1.msra.mxu0 0.0
    %1129 = vmatprep.subr.mxu0 0.0
    %1130 = vmatpush1.msra.mxu0 0.0
    %1131 = vmatprep.subr.mxu0 0.0
    %1132 = vmatpush1.msra.mxu0 0.0
    %1133 = vmatprep.subr.mxu0 0.0
    %1134 = vmatpush1.msra.mxu0 0.0
    %1135 = vmatprep.subr.mxu0 0.0
    %1136 = vmatpush1.msra.mxu0 0.0
    %1137 = vmatprep.mubr.f32.mxu0 0.0
    %1138 = vmatmul.mubr.f32.gmra.mrb[0].mxu0 %v1071
    %v1139 = vpop.f32.mrb[0].mxu0
    %v1140 = vadd.f32 0.0, %v1139
    %v1141 = vpop.f32.mrb[0].mxu0
    %1142 = vdwg.mxu0
    %v1143 = vsel %vm771, %v1140, 0.0
    %1144 = vadd.xlane.f32.xlu0 %v1143
    %v1145 = vpop.xlane.xlu0 %1144
    %v1146 = vmul.f32 %v1145, %v617
    %v1147 = vsub.f32 %v1140, %v1146
    %v1148 = vmul.f32 %v1147, %v1147
    %v1149 = vsel %vm771, %v1148, 0.0
    %1150 = vadd.xlane.f32.xlu0 %v1149
    %v1151 = vpop.xlane.xlu0 %1150
    %v1152 = vmul.f32 %v1151, %v617
    %v1153 = vadd.f32 %v1152, 1e-05
    %v1154 = vrsqrt.pop %v1153
    %v1155 = vmul.f32 %v1147, %v1154
    %v1156 = vmul.f32 %v1155, %v789
    %v1157 = vadd.f32 %v1156, %v796
    %v1158 = vadd.f32 %v1070, %v1157
    %v1159 = vxor.u32 %v1158, 2147483648
    %v1160 = vmul.f32 %v1159, 1.442695
    %v1161 = vpow.pop %v1160
    %v1162 = vadd.f32 %v1161, 1.0
    %v1163 = vrcp.pop %v1162
    %v1164 = vmul.f32 1.0, %v1163
    %v1165 = vtanh.pop %v1158
    %v1166 = vmul.f32 %v1164, %v1058
    %1168 = vrot.lane.b32.xlu0 %v1165, 32
    %v1169 = vpop.permute.xlu0 %1168
    %v1171 = vmul.f32 %v1164, %v1169
    %1173 = vrot.lane.b32.xlu0 %v1171, 32
    %v1174 = vpop.permute.xlu0 %1173
    %v1176 = vadd.f32 %v1166, %v1174
    %v1177 = vtanh.pop %v1176
    %1179 = vrot.lane.b32.xlu0 %v1177, 32
    %v1180 = vpop.permute.xlu0 %1179
    %v1182 = vmul.f32 %v1164, %v1180
    %1184 = vrot.lane.b32.xlu0 %v1182, 64
    %v1185 = vpop.permute.xlu0 %1184
    %1187 = vst.msk [vmem:[#allocation17 + $0xc] sm:$0xf] %vm832, %v1185
    %v1188 = vld [vmem:[#allocation2 + $0x10] sm:$0xf]
    %v1189 = vsel %vm292, %v1185, 0
    %1191 = vmatprep.subr.mxu0 0.0
    %1192 = vmatpush1.msra.mxu0 %v689
    %1193 = vmatprep.subr.mxu0 0.0
    %1194 = vmatpush1.msra.mxu0 %v690
    %1195 = vmatprep.subr.mxu0 0.0
    %1196 = vmatpush1.msra.mxu0 %v691
    %1197 = vmatprep.subr.mxu0 0.0
    %1198 = vmatpush1.msra.mxu0 %v692
    %1199 = vmatprep.subr.mxu0 0.0
    %1200 = vmatpush1.msra.mxu0 0.0
    %1201 = vmatprep.subr.mxu0 0.0
    %1202 = vmatpush1.msra.mxu0 0.0
    %1203 = vmatprep.subr.mxu0 0.0
    %1204 = vmatpush1.msra.mxu0 0.0
    %1205 = vmatprep.subr.mxu0 0.0
    %1206 = vmatpush1.msra.mxu0 0.0
    %1207 = vmatprep.subr.mxu0 0.0
    %1208 = vmatpush1.msra.mxu0 0.0
    %1209 = vmatprep.subr.mxu0 0.0
    %1210 = vmatpush1.msra.mxu0 0.0
    %1211 = vmatprep.subr.mxu0 0.0
    %1212 = vmatpush1.msra.mxu0 0.0
    %1213 = vmatprep.subr.mxu0 0.0
    %1214 = vmatpush1.msra.mxu0 0.0
    %1215 = vmatprep.subr.mxu0 0.0
    %1216 = vmatpush1.msra.mxu0 0.0
    %1217 = vmatprep.subr.mxu0 0.0
    %1218 = vmatpush1.msra.mxu0 0.0
    %1219 = vmatprep.subr.mxu0 0.0
    %1220 = vmatpush1.msra.mxu0 0.0
    %1221 = vmatprep.subr.mxu0 0.0
    %1222 = vmatpush1.msra.mxu0 0.0
    %1223 = vmatprep.subr.mxu0 0.0
    %1224 = vmatpush1.msra.mxu0 0.0
    %1225 = vmatprep.subr.mxu0 0.0
    %1226 = vmatpush1.msra.mxu0 0.0
    %1227 = vmatprep.subr.mxu0 0.0
    %1228 = vmatpush1.msra.mxu0 0.0
    %1229 = vmatprep.subr.mxu0 0.0
    %1230 = vmatpush1.msra.mxu0 0.0
    %1231 = vmatprep.subr.mxu0 0.0
    %1232 = vmatpush1.msra.mxu0 0.0
    %1233 = vmatprep.subr.mxu0 0.0
    %1234 = vmatpush1.msra.mxu0 0.0
    %1235 = vmatprep.subr.mxu0 0.0
    %1236 = vmatpush1.msra.mxu0 0.0
    %1237 = vmatprep.subr.mxu0 0.0
    %1238 = vmatpush1.msra.mxu0 0.0
    %1239 = vmatprep.subr.mxu0 0.0
    %1240 = vmatpush1.msra.mxu0 0.0
    %1241 = vmatprep.subr.mxu0 0.0
    %1242 = vmatpush1.msra.mxu0 0.0
    %1243 = vmatprep.subr.mxu0 0.0
    %1244 = vmatpush1.msra.mxu0 0.0
    %1245 = vmatprep.subr.mxu0 0.0
    %1246 = vmatpush1.msra.mxu0 0.0
    %1247 = vmatprep.subr.mxu0 0.0
    %1248 = vmatpush1.msra.mxu0 0.0
    %1249 = vmatprep.subr.mxu0 0.0
    %1250 = vmatpush1.msra.mxu0 0.0
    %1251 = vmatprep.subr.mxu0 0.0
    %1252 = vmatpush1.msra.mxu0 0.0
    %1253 = vmatprep.subr.mxu0 0.0
    %1254 = vmatpush1.msra.mxu0 0.0
    %1255 = vmatprep.mubr.f32.mxu0 0.0
    %1256 = vmatmul.mubr.f32.gmra.mrb[0].mxu0 %v1189
    %v1257 = vpop.f32.mrb[0].mxu0
    %v1258 = vadd.f32 0.0, %v1257
    %v1259 = vpop.f32.mrb[0].mxu0
    %1260 = vdwg.mxu0
    %v1261 = vsel %vm771, %v1258, 0.0
    %1262 = vadd.xlane.f32.xlu0 %v1261
    %v1263 = vpop.xlane.xlu0 %1262
    %v1264 = vmul.f32 %v1263, %v617
    %v1265 = vsub.f32 %v1258, %v1264
    %v1266 = vmul.f32 %v1265, %v1265
    %v1267 = vsel %vm771, %v1266, 0.0
    %1268 = vadd.xlane.f32.xlu0 %v1267
    %v1269 = vpop.xlane.xlu0 %1268
    %v1270 = vmul.f32 %v1269, %v617
    %v1271 = vadd.f32 %v1270, 1e-05
    %v1272 = vrsqrt.pop %v1271
    %v1273 = vmul.f32 %v1265, %v1272
    %v1274 = vmul.f32 %v1273, %v789
    %v1275 = vadd.f32 %v1274, %v796
    %v1276 = vadd.f32 %v1188, %v1275
    %v1277 = vxor.u32 %v1276, 2147483648
    %v1278 = vmul.f32 %v1277, 1.442695
    %v1279 = vpow.pop %v1278
    %v1280 = vadd.f32 %v1279, 1.0
    %v1281 = vrcp.pop %v1280
    %v1282 = vmul.f32 1.0, %v1281
    %v1283 = vtanh.pop %v1276
    %v1284 = vmul.f32 %v1282, %v1176
    %1286 = vrot.lane.b32.xlu0 %v1283, 32
    %v1287 = vpop.permute.xlu0 %1286
    %v1289 = vmul.f32 %v1282, %v1287
    %1291 = vrot.lane.b32.xlu0 %v1289, 32
    %v1292 = vpop.permute.xlu0 %1291
    %v1294 = vadd.f32 %v1284, %v1292
    %v1295 = vtanh.pop %v1294
    %1297 = vrot.lane.b32.xlu0 %v1295, 32
    %v1298 = vpop.permute.xlu0 %1297
    %v1300 = vmul.f32 %v1282, %v1298
    %1302 = vrot.lane.b32.xlu0 %v1300, 64
    %v1303 = vpop.permute.xlu0 %1302
    %1305 = vst.msk [vmem:[#allocation17 + $0x10] sm:$0xf] %vm832, %v1303
    %v1306 = vld [vmem:[#allocation2 + $0x14] sm:$0xf]
    %v1307 = vsel %vm292, %v1303, 0
    %1309 = vmatprep.subr.mxu0 0.0
    %1310 = vmatpush1.msra.mxu0 %v689
    %1311 = vmatprep.subr.mxu0 0.0
    %1312 = vmatpush1.msra.mxu0 %v690
    %1313 = vmatprep.subr.mxu0 0.0
    %1314 = vmatpush1.msra.mxu0 %v691
    %1315 = vmatprep.subr.mxu0 0.0
    %1316 = vmatpush1.msra.mxu0 %v692
    %1317 = vmatprep.subr.mxu0 0.0
    %1318 = vmatpush1.msra.mxu0 0.0
    %1319 = vmatprep.subr.mxu0 0.0
    %1320 = vmatpush1.msra.mxu0 0.0
    %1321 = vmatprep.subr.mxu0 0.0
    %1322 = vmatpush1.msra.mxu0 0.0
    %1323 = vmatprep.subr.mxu0 0.0
    %1324 = vmatpush1.msra.mxu0 0.0
    %1325 = vmatprep.subr.mxu0 0.0
    %1326 = vmatpush1.msra.mxu0 0.0
    %1327 = vmatprep.subr.mxu0 0.0
    %1328 = vmatpush1.msra.mxu0 0.0
    %1329 = vmatprep.subr.mxu0 0.0
    %1330 = vmatpush1.msra.mxu0 0.0
    %1331 = vmatprep.subr.mxu0 0.0
    %1332 = vmatpush1.msra.mxu0 0.0
    %1333 = vmatprep.subr.mxu0 0.0
    %1334 = vmatpush1.msra.mxu0 0.0
    %1335 = vmatprep.subr.mxu0 0.0
    %1336 = vmatpush1.msra.mxu0 0.0
    %1337 = vmatprep.subr.mxu0 0.0
    %1338 = vmatpush1.msra.mxu0 0.0
    %1339 = vmatprep.subr.mxu0 0.0
    %1340 = vmatpush1.msra.mxu0 0.0
    %1341 = vmatprep.subr.mxu0 0.0
    %1342 = vmatpush1.msra.mxu0 0.0
    %1343 = vmatprep.subr.mxu0 0.0
    %1344 = vmatpush1.msra.mxu0 0.0
    %1345 = vmatprep.subr.mxu0 0.0
    %1346 = vmatpush1.msra.mxu0 0.0
    %1347 = vmatprep.subr.mxu0 0.0
    %1348 = vmatpush1.msra.mxu0 0.0
    %1349 = vmatprep.subr.mxu0 0.0
    %1350 = vmatpush1.msra.mxu0 0.0
    %1351 = vmatprep.subr.mxu0 0.0
    %1352 = vmatpush1.msra.mxu0 0.0
    %1353 = vmatprep.subr.mxu0 0.0
    %1354 = vmatpush1.msra.mxu0 0.0
    %1355 = vmatprep.subr.mxu0 0.0
    %1356 = vmatpush1.msra.mxu0 0.0
    %1357 = vmatprep.subr.mxu0 0.0
    %1358 = vmatpush1.msra.mxu0 0.0
    %1359 = vmatprep.subr.mxu0 0.0
    %1360 = vmatpush1.msra.mxu0 0.0
    %1361 = vmatprep.subr.mxu0 0.0
    %1362 = vmatpush1.msra.mxu0 0.0
    %1363 = vmatprep.subr.mxu0 0.0
    %1364 = vmatpush1.msra.mxu0 0.0
    %1365 = vmatprep.subr.mxu0 0.0
    %1366 = vmatpush1.msra.mxu0 0.0
    %1367 = vmatprep.subr.mxu0 0.0
    %1368 = vmatpush1.msra.mxu0 0.0
    %1369 = vmatprep.subr.mxu0 0.0
    %1370 = vmatpush1.msra.mxu0 0.0
    %1371 = vmatprep.subr.mxu0 0.0
    %1372 = vmatpush1.msra.mxu0 0.0
    %1373 = vmatprep.mubr.f32.mxu0 0.0
    %1374 = vmatmul.mubr.f32.gmra.mrb[0].mxu0 %v1307
    %v1375 = vpop.f32.mrb[0].mxu0
    %v1376 = vadd.f32 0.0, %v1375
    %v1377 = vpop.f32.mrb[0].mxu0
    %1378 = vdwg.mxu0
    %v1379 = vsel %vm771, %v1376, 0.0
    %1380 = vadd.xlane.f32.xlu0 %v1379
    %v1381 = vpop.xlane.xlu0 %1380
    %v1382 = vmul.f32 %v1381, %v617
    %v1383 = vsub.f32 %v1376, %v1382
    %v1384 = vmul.f32 %v1383, %v1383
    %v1385 = vsel %vm771, %v1384, 0.0
    %1386 = vadd.xlane.f32.xlu0 %v1385
    %v1387 = vpop.xlane.xlu0 %1386
    %v1388 = vmul.f32 %v1387, %v617
    %v1389 = vadd.f32 %v1388, 1e-05
    %v1390 = vrsqrt.pop %v1389
    %v1391 = vmul.f32 %v1383, %v1390
    %v1392 = vmul.f32 %v1391, %v789
    %v1393 = vadd.f32 %v1392, %v796
    %v1394 = vadd.f32 %v1306, %v1393
    %v1395 = vxor.u32 %v1394, 2147483648
    %v1396 = vmul.f32 %v1395, 1.442695
    %v1397 = vpow.pop %v1396
    %v1398 = vadd.f32 %v1397, 1.0
    %v1399 = vrcp.pop %v1398
    %v1400 = vmul.f32 1.0, %v1399
    %v1401 = vtanh.pop %v1394
    %v1402 = vmul.f32 %v1400, %v1294
    %1404 = vrot.lane.b32.xlu0 %v1401, 32
    %v1405 = vpop.permute.xlu0 %1404
    %v1407 = vmul.f32 %v1400, %v1405
    %1409 = vrot.lane.b32.xlu0 %v1407, 32
    %v1410 = vpop.permute.xlu0 %1409
    %v1412 = vadd.f32 %v1402, %v1410
    %v1413 = vtanh.pop %v1412
    %1415 = vrot.lane.b32.xlu0 %v1413, 32
    %v1416 = vpop.permute.xlu0 %1415
    %v1418 = vmul.f32 %v1400, %v1416
    %1420 = vrot.lane.b32.xlu0 %v1418, 64
    %v1421 = vpop.permute.xlu0 %1420
    %1423 = vst.msk [vmem:[#allocation17 + $0x14] sm:$0xf] %vm832, %v1421
    %v1424 = vld [vmem:[#allocation2 + $0x18] sm:$0xf]
    %v1425 = vsel %vm292, %v1421, 0
    %1427 = vmatprep.subr.mxu0 0.0
    %1428 = vmatpush1.msra.mxu0 %v689
    %1429 = vmatprep.subr.mxu0 0.0
    %1430 = vmatpush1.msra.mxu0 %v690
    %1431 = vmatprep.subr.mxu0 0.0
    %1432 = vmatpush1.msra.mxu0 %v691
    %1433 = vmatprep.subr.mxu0 0.0
    %1434 = vmatpush1.msra.mxu0 %v692
    %1435 = vmatprep.subr.mxu0 0.0
    %1436 = vmatpush1.msra.mxu0 0.0
    %1437 = vmatprep.subr.mxu0 0.0
    %1438 = vmatpush1.msra.mxu0 0.0
    %1439 = vmatprep.subr.mxu0 0.0
    %1440 = vmatpush1.msra.mxu0 0.0
    %1441 = vmatprep.subr.mxu0 0.0
    %1442 = vmatpush1.msra.mxu0 0.0
    %1443 = vmatprep.subr.mxu0 0.0
    %1444 = vmatpush1.msra.mxu0 0.0
    %1445 = vmatprep.subr.mxu0 0.0
    %1446 = vmatpush1.msra.mxu0 0.0
    %1447 = vmatprep.subr.mxu0 0.0
    %1448 = vmatpush1.msra.mxu0 0.0
    %1449 = vmatprep.subr.mxu0 0.0
    %1450 = vmatpush1.msra.mxu0 0.0
    %1451 = vmatprep.subr.mxu0 0.0
    %1452 = vmatpush1.msra.mxu0 0.0
    %1453 = vmatprep.subr.mxu0 0.0
    %1454 = vmatpush1.msra.mxu0 0.0
    %1455 = vmatprep.subr.mxu0 0.0
    %1456 = vmatpush1.msra.mxu0 0.0
    %1457 = vmatprep.subr.mxu0 0.0
    %1458 = vmatpush1.msra.mxu0 0.0
    %1459 = vmatprep.subr.mxu0 0.0
    %1460 = vmatpush1.msra.mxu0 0.0
    %1461 = vmatprep.subr.mxu0 0.0
    %1462 = vmatpush1.msra.mxu0 0.0
    %1463 = vmatprep.subr.mxu0 0.0
    %1464 = vmatpush1.msra.mxu0 0.0
    %1465 = vmatprep.subr.mxu0 0.0
    %1466 = vmatpush1.msra.mxu0 0.0
    %1467 = vmatprep.subr.mxu0 0.0
    %1468 = vmatpush1.msra.mxu0 0.0
    %1469 = vmatprep.subr.mxu0 0.0
    %1470 = vmatpush1.msra.mxu0 0.0
    %1471 = vmatprep.subr.mxu0 0.0
    %1472 = vmatpush1.msra.mxu0 0.0
    %1473 = vmatprep.subr.mxu0 0.0
    %1474 = vmatpush1.msra.mxu0 0.0
    %1475 = vmatprep.subr.mxu0 0.0
    %1476 = vmatpush1.msra.mxu0 0.0
    %1477 = vmatprep.subr.mxu0 0.0
    %1478 = vmatpush1.msra.mxu0 0.0
    %1479 = vmatprep.subr.mxu0 0.0
    %1480 = vmatpush1.msra.mxu0 0.0
    %1481 = vmatprep.subr.mxu0 0.0
    %1482 = vmatpush1.msra.mxu0 0.0
    %1483 = vmatprep.subr.mxu0 0.0
    %1484 = vmatpush1.msra.mxu0 0.0
    %1485 = vmatprep.subr.mxu0 0.0
    %1486 = vmatpush1.msra.mxu0 0.0
    %1487 = vmatprep.subr.mxu0 0.0
    %1488 = vmatpush1.msra.mxu0 0.0
    %1489 = vmatprep.subr.mxu0 0.0
    %1490 = vmatpush1.msra.mxu0 0.0
    %1491 = vmatprep.mubr.f32.mxu0 0.0
    %1492 = vmatmul.mubr.f32.gmra.mrb[0].mxu0 %v1425
    %v1493 = vpop.f32.mrb[0].mxu0
    %v1494 = vadd.f32 0.0, %v1493
    %v1495 = vpop.f32.mrb[0].mxu0
    %1496 = vdwg.mxu0
    %v1497 = vsel %vm771, %v1494, 0.0
    %1498 = vadd.xlane.f32.xlu0 %v1497
    %v1499 = vpop.xlane.xlu0 %1498
    %v1500 = vmul.f32 %v1499, %v617
    %v1501 = vsub.f32 %v1494, %v1500
    %v1502 = vmul.f32 %v1501, %v1501
    %v1503 = vsel %vm771, %v1502, 0.0
    %1504 = vadd.xlane.f32.xlu0 %v1503
    %v1505 = vpop.xlane.xlu0 %1504
    %v1506 = vmul.f32 %v1505, %v617
    %v1507 = vadd.f32 %v1506, 1e-05
    %v1508 = vrsqrt.pop %v1507
    %v1509 = vmul.f32 %v1501, %v1508
    %v1510 = vmul.f32 %v1509, %v789
    %v1511 = vadd.f32 %v1510, %v796
    %v1512 = vadd.f32 %v1424, %v1511
    %v1513 = vxor.u32 %v1512, 2147483648
    %v1514 = vmul.f32 %v1513, 1.442695
    %v1515 = vpow.pop %v1514
    %v1516 = vadd.f32 %v1515, 1.0
    %v1517 = vrcp.pop %v1516
    %v1518 = vmul.f32 1.0, %v1517
    %v1519 = vtanh.pop %v1512
    %v1520 = vmul.f32 %v1518, %v1412
    %1522 = vrot.lane.b32.xlu0 %v1519, 32
    %v1523 = vpop.permute.xlu0 %1522
    %v1525 = vmul.f32 %v1518, %v1523
    %1527 = vrot.lane.b32.xlu0 %v1525, 32
    %v1528 = vpop.permute.xlu0 %1527
    %v1530 = vadd.f32 %v1520, %v1528
    %v1531 = vtanh.pop %v1530
    %1533 = vrot.lane.b32.xlu0 %v1531, 32
    %v1534 = vpop.permute.xlu0 %1533
    %v1536 = vmul.f32 %v1518, %v1534
    %1538 = vrot.lane.b32.xlu0 %v1536, 64
    %v1539 = vpop.permute.xlu0 %1538
    %1541 = vst.msk [vmem:[#allocation17 + $0x18] sm:$0xf] %vm832, %v1539
    %v1542 = vld [vmem:[#allocation2 + $0x1c] sm:$0xf]
    %v1543 = vsel %vm292, %v1539, 0
    %1545 = vmatprep.subr.mxu0 0.0
    %1546 = vmatpush1.msra.mxu0 %v689
    %1547 = vmatprep.subr.mxu0 0.0
    %1548 = vmatpush1.msra.mxu0 %v690
    %1549 = vmatprep.subr.mxu0 0.0
    %1550 = vmatpush1.msra.mxu0 %v691
    %1551 = vmatprep.subr.mxu0 0.0
    %1552 = vmatpush1.msra.mxu0 %v692
    %1553 = vmatprep.subr.mxu0 0.0
    %1554 = vmatpush1.msra.mxu0 0.0
    %1555 = vmatprep.subr.mxu0 0.0
    %1556 = vmatpush1.msra.mxu0 0.0
    %1557 = vmatprep.subr.mxu0 0.0
    %1558 = vmatpush1.msra.mxu0 0.0
    %1559 = vmatprep.subr.mxu0 0.0
    %1560 = vmatpush1.msra.mxu0 0.0
    %1561 = vmatprep.subr.mxu0 0.0
    %1562 = vmatpush1.msra.mxu0 0.0
    %1563 = vmatprep.subr.mxu0 0.0
    %1564 = vmatpush1.msra.mxu0 0.0
    %1565 = vmatprep.subr.mxu0 0.0
    %1566 = vmatpush1.msra.mxu0 0.0
    %1567 = vmatprep.subr.mxu0 0.0
    %1568 = vmatpush1.msra.mxu0 0.0
    %1569 = vmatprep.subr.mxu0 0.0
    %1570 = vmatpush1.msra.mxu0 0.0
    %1571 = vmatprep.subr.mxu0 0.0
    %1572 = vmatpush1.msra.mxu0 0.0
    %1573 = vmatprep.subr.mxu0 0.0
    %1574 = vmatpush1.msra.mxu0 0.0
    %1575 = vmatprep.subr.mxu0 0.0
    %1576 = vmatpush1.msra.mxu0 0.0
    %1577 = vmatprep.subr.mxu0 0.0
    %1578 = vmatpush1.msra.mxu0 0.0
    %1579 = vmatprep.subr.mxu0 0.0
    %1580 = vmatpush1.msra.mxu0 0.0
    %1581 = vmatprep.subr.mxu0 0.0
    %1582 = vmatpush1.msra.mxu0 0.0
    %1583 = vmatprep.subr.mxu0 0.0
    %1584 = vmatpush1.msra.mxu0 0.0
    %1585 = vmatprep.subr.mxu0 0.0
    %1586 = vmatpush1.msra.mxu0 0.0
    %1587 = vmatprep.subr.mxu0 0.0
    %1588 = vmatpush1.msra.mxu0 0.0
    %1589 = vmatprep.subr.mxu0 0.0
    %1590 = vmatpush1.msra.mxu0 0.0
    %1591 = vmatprep.subr.mxu0 0.0
    %1592 = vmatpush1.msra.mxu0 0.0
    %1593 = vmatprep.subr.mxu0 0.0
    %1594 = vmatpush1.msra.mxu0 0.0
    %1595 = vmatprep.subr.mxu0 0.0
    %1596 = vmatpush1.msra.mxu0 0.0
    %1597 = vmatprep.subr.mxu0 0.0
    %1598 = vmatpush1.msra.mxu0 0.0
    %1599 = vmatprep.subr.mxu0 0.0
    %1600 = vmatpush1.msra.mxu0 0.0
    %1601 = vmatprep.subr.mxu0 0.0
    %1602 = vmatpush1.msra.mxu0 0.0
    %1603 = vmatprep.subr.mxu0 0.0
    %1604 = vmatpush1.msra.mxu0 0.0
    %1605 = vmatprep.subr.mxu0 0.0
    %1606 = vmatpush1.msra.mxu0 0.0
    %1607 = vmatprep.subr.mxu0 0.0
    %1608 = vmatpush1.msra.mxu0 0.0
    %1609 = vmatprep.mubr.f32.mxu0 0.0
    %1610 = vmatmul.mubr.f32.gmra.mrb[0].mxu0 %v1543
    %v1611 = vpop.f32.mrb[0].mxu0
    %v1612 = vadd.f32 0.0, %v1611
    %v1613 = vpop.f32.mrb[0].mxu0
    %1614 = vdwg.mxu0
    %v1615 = vsel %vm771, %v1612, 0.0
    %1616 = vadd.xlane.f32.xlu0 %v1615
    %v1617 = vpop.xlane.xlu0 %1616
    %v1618 = vmul.f32 %v1617, %v617
    %v1619 = vsub.f32 %v1612, %v1618
    %v1620 = vmul.f32 %v1619, %v1619
    %v1621 = vsel %vm771, %v1620, 0.0
    %1622 = vadd.xlane.f32.xlu0 %v1621
    %v1623 = vpop.xlane.xlu0 %1622
    %v1624 = vmul.f32 %v1623, %v617
    %v1625 = vadd.f32 %v1624, 1e-05
    %v1626 = vrsqrt.pop %v1625
    %v1627 = vmul.f32 %v1619, %v1626
    %v1628 = vmul.f32 %v1627, %v789
    %v1629 = vadd.f32 %v1628, %v796
    %v1630 = vadd.f32 %v1542, %v1629
    %v1631 = vxor.u32 %v1630, 2147483648
    %v1632 = vmul.f32 %v1631, 1.442695
    %v1633 = vpow.pop %v1632
    %v1634 = vadd.f32 %v1633, 1.0
    %v1635 = vrcp.pop %v1634
    %v1636 = vmul.f32 1.0, %v1635
    %v1637 = vtanh.pop %v1630
    %v1638 = vmul.f32 %v1636, %v1530
    %1640 = vrot.lane.b32.xlu0 %v1637, 32
    %v1641 = vpop.permute.xlu0 %1640
    %v1643 = vmul.f32 %v1636, %v1641
    %1645 = vrot.lane.b32.xlu0 %v1643, 32
    %v1646 = vpop.permute.xlu0 %1645
    %v1648 = vadd.f32 %v1638, %v1646
    %v1649 = vtanh.pop %v1648
    %1651 = vrot.lane.b32.xlu0 %v1649, 32
    %v1652 = vpop.permute.xlu0 %1651
    %v1654 = vmul.f32 %v1636, %v1652
    %1656 = vrot.lane.b32.xlu0 %v1654, 64
    %v1657 = vpop.permute.xlu0 %1656
    %1659 = vst.msk [vmem:[#allocation17 + $0x1c] sm:$0xf] %vm832, %v1657
    %1660 = vst.msk [vmem:[#allocation18] sm:$0xf] %vm832, %v1657
    %1662 = vrot.lane.b32.xlu0 %v1648, 96
    %v1663 = vpop.permute.xlu0 %1662
    %1665 = vst.msk [vmem:[#allocation20] sm:$0xf] %vm832, %v1663
    %v1666 = vld [vmem:[#allocation17] sm:$0xff]
    %v1667 = vld [vmem:[#allocation17 + $0x8] sm:$0xff]
    %v1668 = vld [vmem:[#allocation17 + $0x10] sm:$0xff]
    %v1669 = vld [vmem:[#allocation17 + $0x18] sm:$0xff]
    %v1670 = vld [vmem:[%s16] sm:$0xff]
    %v1671 = vld [vmem:[%s16 + $0x8] sm:$0xff]
    %v1672 = vld [vmem:[%s16 + $0x10] sm:$0xff]
    %v1673 = vld [vmem:[%s16 + $0x18] sm:$0xff]
    %v1674 = vld [vmem:[%s17] sm:$0x1]
    %v1676 = vlaneseq
    %v1677 = vshrl.u32 %v1676, 7
    %v1678 = vsub.s32 0, %v1677
    %v1679 = vrot.slane %v1674, %v1678
    %v1682 = vsel %vm292, %v1666, 0
    %v1685 = vsel %vm292, %v1667, 0
    %v1688 = vsel %vm292, %v1668, 0
    %v1691 = vsel %vm292, %v1669, 0
    %1693 = vmatprep.subr.mxu0 0.0
    %1694 = vmatpush1.msra.mxu0 %v1670
    %1695 = vmatprep.subr.mxu0 0.0
    %1696 = vmatpush1.msra.mxu0 %v1671
    %1697 = vmatprep.subr.mxu0 0.0
    %1698 = vmatpush1.msra.mxu0 %v1672
    %1699 = vmatprep.subr.mxu0 0.0
    %1700 = vmatpush1.msra.mxu0 %v1673
    %1701 = vmatprep.subr.mxu0 0.0
    %1702 = vmatpush1.msra.mxu0 0.0
    %1703 = vmatprep.subr.mxu0 0.0
    %1704 = vmatpush1.msra.mxu0 0.0
    %1705 = vmatprep.subr.mxu0 0.0
    %1706 = vmatpush1.msra.mxu0 0.0
    %1707 = vmatprep.subr.mxu0 0.0
    %1708 = vmatpush1.msra.mxu0 0.0
    %1709 = vmatprep.subr.mxu0 0.0
    %1710 = vmatpush1.msra.mxu0 0.0
    %1711 = vmatprep.subr.mxu0 0.0
    %1712 = vmatpush1.msra.mxu0 0.0
    %1713 = vmatprep.subr.mxu0 0.0
    %1714 = vmatpush1.msra.mxu0 0.0
    %1715 = vmatprep.subr.mxu0 0.0
    %1716 = vmatpush1.msra.mxu0 0.0
    %1717 = vmatprep.subr.mxu0 0.0
    %1718 = vmatpush1.msra.mxu0 0.0
    %1719 = vmatprep.subr.mxu0 0.0
    %1720 = vmatpush1.msra.mxu0 0.0
    %1721 = vmatprep.subr.mxu0 0.0
    %1722 = vmatpush1.msra.mxu0 0.0
    %1723 = vmatprep.subr.mxu0 0.0
    %1724 = vmatpush1.msra.mxu0 0.0
    %1725 = vmatprep.subr.mxu0 0.0
    %1726 = vmatpush1.msra.mxu0 0.0
    %1727 = vmatprep.subr.mxu0 0.0
    %1728 = vmatpush1.msra.mxu0 0.0
    %1729 = vmatprep.subr.mxu0 0.0
    %1730 = vmatpush1.msra.mxu0 0.0
    %1731 = vmatprep.subr.mxu0 0.0
    %1732 = vmatpush1.msra.mxu0 0.0
    %1733 = vmatprep.subr.mxu0 0.0
    %1734 = vmatpush1.msra.mxu0 0.0
    %1735 = vmatprep.subr.mxu0 0.0
    %1736 = vmatpush1.msra.mxu0 0.0
    %1737 = vmatprep.subr.mxu0 0.0
    %1738 = vmatpush1.msra.mxu0 0.0
    %1739 = vmatprep.subr.mxu0 0.0
    %1740 = vmatpush1.msra.mxu0 0.0
    %1741 = vmatprep.subr.mxu0 0.0
    %1742 = vmatpush1.msra.mxu0 0.0
    %1743 = vmatprep.subr.mxu0 0.0
    %1744 = vmatpush1.msra.mxu0 0.0
    %1745 = vmatprep.subr.mxu0 0.0
    %1746 = vmatpush1.msra.mxu0 0.0
    %1747 = vmatprep.subr.mxu0 0.0
    %1748 = vmatpush1.msra.mxu0 0.0
    %1749 = vmatprep.subr.mxu0 0.0
    %1750 = vmatpush1.msra.mxu0 0.0
    %1751 = vmatprep.subr.mxu0 0.0
    %1752 = vmatpush1.msra.mxu0 0.0
    %1753 = vmatprep.subr.mxu0 0.0
    %1754 = vmatpush1.msra.mxu0 0.0
    %1755 = vmatprep.subr.mxu0 0.0
    %1756 = vmatpush1.msra.mxu0 0.0
    %1757 = vmatprep.mubr.f32.mxu0 0.0
    %1758 = vmatmul.mubr.f32.gmra.mrb[0].mxu0 %v1682
    %v1759 = vpop.f32.mrb[0].mxu0
    %v1760 = vadd.f32 %v1679, %v1759
    %v1761 = vpop.f32.mrb[0].mxu0
    %1762 = vmatprep.mubr.f32.mxu0 0.0
    %1763 = vmatmul.mubr.f32.gmra.mrb[0].mxu0 %v1685
    %v1764 = vpop.f32.mrb[0].mxu0
    %v1765 = vadd.f32 %v1679, %v1764
    %v1766 = vpop.f32.mrb[0].mxu0
    %1767 = vmatprep.mubr.f32.mxu0 0.0
    %1768 = vmatmul.mubr.f32.gmra.mrb[0].mxu0 %v1688
    %v1769 = vpop.f32.mrb[0].mxu0
    %v1770 = vadd.f32 %v1679, %v1769
    %v1771 = vpop.f32.mrb[0].mxu0
    %1772 = vmatprep.mubr.f32.mxu0 0.0
    %1773 = vmatmul.mubr.f32.gmra.mrb[0].mxu0 %v1691
    %v1774 = vpop.f32.mrb[0].mxu0
    %v1775 = vadd.f32 %v1679, %v1774
    %v1776 = vpop.f32.mrb[0].mxu0
    %1777 = vdwg.mxu0
    %v1778 = vmax.f32 %v1760, 0.0
    %v1779 = vmax.f32 %v1765, 0.0
    %v1780 = vmax.f32 %v1770, 0.0
    %v1781 = vmax.f32 %v1775, 0.0
    %v1782 = vld [vmem:[%s18] sm:$0xff]
    %v1783 = vld [vmem:[%s18 + $0x8] sm:$0xff]
    %v1784 = vld [vmem:[%s18 + $0x10] sm:$0xff]
    %v1785 = vld [vmem:[%s18 + $0x18] sm:$0xff]
    %v1786 = vld [vmem:[%s18 + $0x20] sm:$0xff]
    %v1787 = vld [vmem:[%s18 + $0x28] sm:$0xff]
    %v1788 = vld [vmem:[%s18 + $0x30] sm:$0xff]
    %v1789 = vld [vmem:[%s18 + $0x38] sm:$0xff]
    %v1790 = vld [vmem:[%s19] sm:$0x1]
    %v1792 = vlaneseq
    %v1793 = vshrl.u32 %v1792, 7
    %v1794 = vsub.s32 0, %v1793
    %v1795 = vrot.slane %v1790, %v1794
    %vm1797 = vcmask 523264
    %v1799 = vsel %vm1797, %v1778, 0
    %v1802 = vsel %vm1797, %v1779, 0
    %v1805 = vsel %vm1797, %v1780, 0
    %v1808 = vsel %vm1797, %v1781, 0
    %1810 = vmatprep.subr.mxu0 0.0
    %1811 = vmatpush1.msra.mxu0 %v1782
    %1812 = vmatprep.subr.mxu0 0.0
    %1813 = vmatpush1.msra.mxu0 %v1783
    %1814 = vmatprep.subr.mxu0 0.0
    %1815 = vmatpush1.msra.mxu0 %v1784
    %1816 = vmatprep.subr.mxu0 0.0
    %1817 = vmatpush1.msra.mxu0 %v1785
    %1818 = vmatprep.subr.mxu0 0.0
    %1819 = vmatpush1.msra.mxu0 %v1786
    %1820 = vmatprep.subr.mxu0 0.0
    %1821 = vmatpush1.msra.mxu0 %v1787
    %1822 = vmatprep.subr.mxu0 0.0
    %1823 = vmatpush1.msra.mxu0 %v1788
    %1824 = vmatprep.subr.mxu0 0.0
    %1825 = vmatpush1.msra.mxu0 %v1789
    %1826 = vmatprep.subr.mxu0 0.0
    %1827 = vmatpush1.msra.mxu0 0.0
    %1828 = vmatprep.subr.mxu0 0.0
    %1829 = vmatpush1.msra.mxu0 0.0
    %1830 = vmatprep.subr.mxu0 0.0
    %1831 = vmatpush1.msra.mxu0 0.0
    %1832 = vmatprep.subr.mxu0 0.0
    %1833 = vmatpush1.msra.mxu0 0.0
    %1834 = vmatprep.subr.mxu0 0.0
    %1835 = vmatpush1.msra.mxu0 0.0
    %1836 = vmatprep.subr.mxu0 0.0
    %1837 = vmatpush1.msra.mxu0 0.0
    %1838 = vmatprep.subr.mxu0 0.0
    %1839 = vmatpush1.msra.mxu0 0.0
    %1840 = vmatprep.subr.mxu0 0.0
    %1841 = vmatpush1.msra.mxu0 0.0
    %1842 = vmatprep.subr.mxu0 0.0
    %1843 = vmatpush1.msra.mxu0 0.0
    %1844 = vmatprep.subr.mxu0 0.0
    %1845 = vmatpush1.msra.mxu0 0.0
    %1846 = vmatprep.subr.mxu0 0.0
    %1847 = vmatpush1.msra.mxu0 0.0
    %1848 = vmatprep.subr.mxu0 0.0
    %1849 = vmatpush1.msra.mxu0 0.0
    %1850 = vmatprep.subr.mxu0 0.0
    %1851 = vmatpush1.msra.mxu0 0.0
    %1852 = vmatprep.subr.mxu0 0.0
    %1853 = vmatpush1.msra.mxu0 0.0
    %1854 = vmatprep.subr.mxu0 0.0
    %1855 = vmatpush1.msra.mxu0 0.0
    %1856 = vmatprep.subr.mxu0 0.0
    %1857 = vmatpush1.msra.mxu0 0.0
    %1858 = vmatprep.subr.mxu0 0.0
    %1859 = vmatpush1.msra.mxu0 0.0
    %1860 = vmatprep.subr.mxu0 0.0
    %1861 = vmatpush1.msra.mxu0 0.0
    %1862 = vmatprep.subr.mxu0 0.0
    %1863 = vmatpush1.msra.mxu0 0.0
    %1864 = vmatprep.subr.mxu0 0.0
    %1865 = vmatpush1.msra.mxu0 0.0
    %1866 = vmatprep.subr.mxu0 0.0
    %1867 = vmatpush1.msra.mxu0 0.0
    %1868 = vmatprep.subr.mxu0 0.0
    %1869 = vmatpush1.msra.mxu0 0.0
    %1870 = vmatprep.subr.mxu0 0.0
    %1871 = vmatpush1.msra.mxu0 0.0
    %1872 = vmatprep.subr.mxu0 0.0
    %1873 = vmatpush1.msra.mxu0 0.0
    %1874 = vmatprep.mubr.f32.mxu0 0.0
    %1875 = vmatmul.mubr.f32.gmra.mrb[0].mxu0 %v1799
    %v1876 = vpop.f32.mrb[0].mxu0
    %v1877 = vadd.f32 %v1795, %v1876
    %v1878 = vpop.f32.mrb[0].mxu0
    %1879 = vmatprep.mubr.f32.mxu0 0.0
    %1880 = vmatmul.mubr.f32.gmra.mrb[0].mxu0 %v1802
    %v1881 = vpop.f32.mrb[0].mxu0
    %v1882 = vadd.f32 %v1795, %v1881
    %v1883 = vpop.f32.mrb[0].mxu0
    %1884 = vmatprep.mubr.f32.mxu0 0.0
    %1885 = vmatmul.mubr.f32.gmra.mrb[0].mxu0 %v1805
    %v1886 = vpop.f32.mrb[0].mxu0
    %v1887 = vadd.f32 %v1795, %v1886
    %v1888 = vpop.f32.mrb[0].mxu0
    %1889 = vmatprep.mubr.f32.mxu0 0.0
    %1890 = vmatmul.mubr.f32.gmra.mrb[0].mxu0 %v1808
    %v1891 = vpop.f32.mrb[0].mxu0
    %v1892 = vadd.f32 %v1795, %v1891
    %v1893 = vpop.f32.mrb[0].mxu0
    %1894 = vdwg.mxu0
    %vm1895 = vcmask 48128
    %v1896 = vsel %vm1895, %v1877, 0.0
    %1897 = vadd.xlane.f32.xlu0 %v1896
    %v1898 = vpop.xlane.xlu0 %1897
    %v1899 = vsel %vm1895, %v1882, 0.0
    %1900 = vadd.xlane.f32.xlu0 %v1899
    %v1901 = vpop.xlane.xlu0 %1900
    %v1902 = vsel %vm1895, %v1887, 0.0
    %1903 = vadd.xlane.f32.xlu0 %v1902
    %v1904 = vpop.xlane.xlu0 %1903
    %v1905 = vsel %vm1895, %v1892, 0.0
    %1906 = vadd.xlane.f32.xlu0 %v1905
    %v1907 = vpop.xlane.xlu0 %1906
    %v1908 = vrcp.pop 6.0
    %v1909 = vmul.f32 %v1898, %v1908
    %v1910 = vmul.f32 %v1901, %v1908
    %v1911 = vmul.f32 %v1904, %v1908
    %v1912 = vmul.f32 %v1907, %v1908
    %v1913 = vsub.f32 %v1877, %v1909
    %v1914 = vsub.f32 %v1882, %v1910
    %v1915 = vsub.f32 %v1887, %v1911
    %v1916 = vsub.f32 %v1892, %v1912
    %1918 = vset.pattern.permute.xlu0 6
    %1919 = vperm.xlu0 %1918, %v1877
    %v1920 = vpop.permute.xlu0 %1919
    %1923 = vset.pattern.permute.xlu0 6
    %1924 = vperm.xlu0 %1923, %v1882
    %v1925 = vpop.permute.xlu0 %1924
    %1928 = vset.pattern.permute.xlu0 6
    %1929 = vperm.xlu0 %1928, %v1887
    %v1930 = vpop.permute.xlu0 %1929
    %1933 = vset.pattern.permute.xlu0 6
    %1934 = vperm.xlu0 %1933, %v1892
    %v1935 = vpop.permute.xlu0 %1934
    %v1937 = vadd.f32 %v1913, %v1920
    %v1938 = vadd.f32 %v1914, %v1925
    %v1939 = vadd.f32 %v1915, %v1930
    %v1940 = vadd.f32 %v1916, %v1935
    %1941 = vst.msk [vmem:[%s20] sm:$0xff] %vm1895, %v1937
    %1942 = vst.msk [vmem:[%s20 + $0x8] sm:$0xff] %vm1895, %v1938
    %1943 = vst.msk [vmem:[%s20 + $0x10] sm:$0xff] %vm1895, %v1939
    %1944 = vst.msk [vmem:[%s20 + $0x18] sm:$0xff] %vm1895, %v1940
    // Predicated region
    $region114: #{tpu_custom_call.1} parent=1 // pred_check
      _
    $region115: #{tpu_custom_call.1} parent=1 // pred_check_branch
      %1946 = sbr.rel (0) target = $region117
    $region116: #{tpu_custom_call.1} parent=1 // pred_region
      _
    $region117: #{tpu_custom_call.1} parent=1 // pred_fallthru
      _
    // Predicated region
    $region118: #{tpu_custom_call.1} parent=1 // pred_check
      _
    $region119: #{tpu_custom_call.1} parent=1 // pred_check_branch
      %1948 = sbr.rel (0) target = $region121
    $region120: #{tpu_custom_call.1} parent=1 // pred_region
      %s1950 = ssub.s32 512, 512
      %1951 = vsyncadd [#allocation5], %s1950
      %s1952 = sshll.u32 [#allocation17], 4
      %s1953 = int_to_ptr.vmem [resolvable:$true] %s1952
      %1958 = dma.vmem_to_hbm [thread:$0]  %s1953, 512, %s21, [#allocation5], 128, 128, 8
    $region121: #{tpu_custom_call.1} parent=1 // pred_fallthru
      _
    // Predicated region
    $region122: #{tpu_custom_call.1} parent=1 // pred_check
      _
    $region123: #{tpu_custom_call.1} parent=1 // pred_check_branch
      %1960 = sbr.rel (0) target = $region125
    $region124: #{tpu_custom_call.1} parent=1 // pred_region
      %s1962 = ssub.s32 64, 64
      %1963 = vsyncadd [#allocation19], %s1962
      %s1965 = sshll.u32 [#allocation18], 4
      %s1966 = int_to_ptr.vmem [resolvable:$true] %s1965
      %1968 = dma.vmem_to_hbm [thread:$0]  %s1966, 64, %s22, [#allocation19]
    $region125: #{tpu_custom_call.1} parent=1 // pred_fallthru
      _
    // Predicated region
    $region126: #{tpu_custom_call.1} parent=1 // pred_check
      _
    $region127: #{tpu_custom_call.1} parent=1 // pred_check_branch
      %1970 = sbr.rel (0) target = $region129
    $region128: #{tpu_custom_call.1} parent=1 // pred_region
      %s1972 = ssub.s32 64, 64
      %1973 = vsyncadd [#allocation19], %s1972
      %s1975 = sshll.u32 [#allocation20], 4
      %s1976 = int_to_ptr.vmem [resolvable:$true] %s1975
      %1978 = dma.vmem_to_hbm [thread:$0]  %s1976, 64, %s23, [#allocation19]
    $region129: #{tpu_custom_call.1} parent=1 // pred_fallthru
      _
    // Predicated region
    $region130: #{tpu_custom_call.1} parent=1 // pred_check
      _
    $region131: #{tpu_custom_call.1} parent=1 // pred_check_branch
      %1980 = sbr.rel (0) target = $region133
    $region132: #{tpu_custom_call.1} parent=1 // pred_region
      _
    $region133: #{tpu_custom_call.1} parent=1 // pred_fallthru
      _
    // Predicated region
    $region134: #{tpu_custom_call.1} parent=1 // pred_check
      _
    $region135: #{tpu_custom_call.1} parent=1 // pred_check_branch
      %1982 = sbr.rel (0) target = $region137
    $region136: #{tpu_custom_call.1} parent=1 // pred_region
      %1983 = dma.done [#allocation5], 512
    $region137: #{tpu_custom_call.1} parent=1 // pred_fallthru
      _
    // Predicated region
    $region138: #{tpu_custom_call.1} parent=1 // pred_check
      _
    $region139: #{tpu_custom_call.1} parent=1 // pred_check_branch
      %1985 = sbr.rel (0) target = $region141
    $region140: #{tpu_custom_call.1} parent=1 // pred_region
      %1986 = dma.done [#allocation19], 64
    $region141: #{tpu_custom_call.1} parent=1 // pred_fallthru
      _
    // Predicated region
    $region142: #{tpu_custom_call.1} parent=1 // pred_check
      _
    $region143: #{tpu_custom_call.1} parent=1 // pred_check_branch
      %1988 = sbr.rel (0) target = $region145
    $region144: #{tpu_custom_call.1} parent=1 // pred_region
      %1989 = dma.done [#allocation19], 64
    $region145: #{tpu_custom_call.1} parent=1 // pred_fallthru
      _
    %1990 = vsyncpa [#allocation4], 1
    %1991 = vsyncpa [#allocation7], 1
    %1992 = vsyncpa [#allocation10], 1
    %1993 = vsyncpa [#allocation13], 1
    %1994 = vsyncpa [#allocation16], 1
    %1995 = vsyncpa [#allocation5], 1
    %1996 = vsyncpa [#allocation19], 1

</llo_original>
